<compile_context>
chip_gen: v7x
topology: tpu7x:2x2x1
jax: 0.10.0
libtpu: 0.0.40
codegen_flags: <defaults>
</compile_context>

<pallas_src>
from functools import partial

import jax
import jax.numpy as jnp
from jax.experimental import pallas as pl
from jax.experimental.pallas import tpu as pltpu


# ---------------------------------------------------------------------------
# Fused kernel: QKV projection + per-head causal attention + streamed output
# projection, for one batch element.
# ---------------------------------------------------------------------------
def _fused_mha_kernel(x_ref, wqkv_ref, wproj_ref, bproj_ref, o_ref, *,
                      num_heads, head_size):
    H, hs = num_heads, head_size
    Hhs = H * hs

    x = x_ref[0]                                   # (S, E) bf16
    S = x.shape[0]
    E = wproj_ref.shape[1]

    # ---- fused QKV projection: one wide MXU matmul, f32 accumulation --------
    # (1/sqrt(hs) is already folded into the Q columns of wqkv.)
    qkv = jnp.dot(x, wqkv_ref[...],
                  preferred_element_type=jnp.float32)            # (S, 3*H*hs) f32
    qkv = qkv.astype(jnp.bfloat16)                 # single cast of the whole slab

    # Causal mask, built once (hoisted out of the head loop).
    row = jax.lax.broadcasted_iota(jnp.int32, (S, S), 0)
    col = jax.lax.broadcasted_iota(jnp.int32, (S, S), 1)
    causal = col <= row

    # Contract dim 1 of both q and k -> no explicit k transpose (XLU-free).
    dn_qk = (((1,), (1,)), ((), ()))

    acc = jnp.zeros((S, E), jnp.float32)           # streamed output-projection acc

    # ---- per-head causal attention (small static unrolled loop) -------------
    for h in range(H):
        q = qkv[:, h * hs:(h + 1) * hs]                          # (S, hs) bf16 (pre-scaled)
        k = qkv[:, Hhs + h * hs:Hhs + (h + 1) * hs]              # (S, hs) bf16
        v = qkv[:, 2 * Hhs + h * hs:2 * Hhs + (h + 1) * hs]      # (S, hs) bf16

        s = jax.lax.dot_general(q, k, dn_qk,
                                preferred_element_type=jnp.float32)  # (S, S) f32
        s = jnp.where(causal, s, -1e30)            # finite fill (NaN-safe vs -inf)

        m = jnp.max(s, axis=-1, keepdims=True)
        p = jnp.exp(s - m)                                       # f32 softmax numerator
        l = jnp.sum(p, axis=-1, keepdims=True)
        inv_l = pl.reciprocal(l, approx=True)                    # EUP slot, off the VALU
        # TODO(synk): nn.Dropout(0.2) on attention weights is identity in eval mode.

        o_h = jnp.dot(p.astype(jnp.bfloat16), v,
                      preferred_element_type=jnp.float32) * inv_l  # (S, hs) f32

        # Stream the output projection per head: no (S, H*hs) concat, no big live set.
        acc = acc + jnp.dot(o_h.astype(jnp.bfloat16),
                            wproj_ref[h * hs:(h + 1) * hs, :],
                            preferred_element_type=jnp.float32)    # (S, E) f32

    out = acc + bproj_ref[...]
    # TODO(synk): final nn.Dropout(0.2) is identity in eval mode.
    o_ref[0] = out.astype(o_ref.dtype)


# ---------------------------------------------------------------------------
# One-time parameter packing (call OUTSIDE the per-step forward path).
# ---------------------------------------------------------------------------
def pack_qkv_weights(wq, wk, wv):
    """wq/wk/wv: (H, E, hs) f32 -> (E, 3*H*hs) bf16, head-major [Q|K|V] columns.
    The 1/sqrt(hs) attention scale is folded into the Q columns."""
    H, E, hs = wq.shape

    def _pack(w):
        return w.transpose(1, 0, 2).reshape(E, H * hs)

    wqkv = jnp.concatenate(
        [_pack(wq) * (hs ** -0.5), _pack(wk), _pack(wv)], axis=-1)
    return wqkv.astype(jnp.bfloat16)


# ---------------------------------------------------------------------------
# Wrapper
# ---------------------------------------------------------------------------
def multi_head_attention(x, wqkv_bf16, wproj_bf16, b_proj, *, num_heads, head_size):
    """x: (B,S,E) f32; wqkv_bf16: (E, 3*H*hs) bf16 (pre-packed, Q pre-scaled);
    wproj_bf16: (H*hs, E) bf16; b_proj: (1, E) f32."""
    B, S, E = x.shape
    Hhs = num_heads * head_size
    out_dtype = x.dtype

    x_bf16 = x.astype(jnp.bfloat16)   # halve HBM->VMEM DMA bytes; f32 accumulation in-kernel

    kernel = partial(_fused_mha_kernel, num_heads=num_heads, head_size=head_size)

    # TODO(synk): single-buffer the invariant weight blocks (pipeline_mode) and add a
    #   "parallel" query-tile grid axis once the flash-style tiling above is in place.
    return pl.pallas_call(
        kernel,
        out_shape=jax.ShapeDtypeStruct((B, S, E), out_dtype),
        grid=(B,),
        in_specs=[
            pl.BlockSpec((1, S, E), lambda b: (b, 0, 0)),
            pl.BlockSpec((E, 3 * Hhs), lambda b: (0, 0)),   # resident across batch iters
            pl.BlockSpec((Hhs, E), lambda b: (0, 0)),
            pl.BlockSpec((1, E), lambda b: (0, 0)),
        ],
        out_specs=pl.BlockSpec((1, S, E), lambda b: (b, 0, 0)),
        compiler_params=pltpu.CompilerParams(
            dimension_semantics=("parallel",)),
    )(x_bf16, wqkv_bf16, wproj_bf16, b_proj)


# ---------------------------------------------------------------------------
# Pure-JAX reference (mirrors the PyTorch forward in eval mode, f32 everywhere)
# ---------------------------------------------------------------------------
def reference(x, wq, wk, wv, w_proj, b_proj):
    B, S, E = x.shape
    H, _, hs = wq.shape
    mask = jnp.tril(jnp.ones((S, S), dtype=bool))
    outs = []
    for h in range(H):
        q = x @ wq[h]
        k = x @ wk[h]
        v = x @ wv[h]
        s = (q @ jnp.swapaxes(k, -1, -2)) * (hs ** -0.5)
        s = jnp.where(mask, s, -jnp.inf)
        w = jax.nn.softmax(s, axis=-1)
        outs.append(w @ v)
    cat = jnp.concatenate(outs, axis=-1)
    return cat @ w_proj + b_proj


if __name__ == "__main__":
    # Small shapes consistent with the module (head_size = emb_dim // num_heads),
    # chosen so the output lane width is 128 (lane-dense, unmasked stores).
    B, S, E, H = 2, 128, 128, 4
    hs = E // H

    key = jax.random.PRNGKey(0)
    kx, kq, kk, kv, kp, kb = jax.random.split(key, 6)

    x = jax.random.normal(kx, (B, S, E), dtype=jnp.float32)
    # Per-head weights, pre-transposed: (H, E, hs)  (PyTorch Linear stores (hs, E))
    wq = 0.05 * jax.random.normal(kq, (H, E, hs), dtype=jnp.float32)
    wk = 0.05 * jax.random.normal(kk, (H, E, hs), dtype=jnp.float32)
    wv = 0.05 * jax.random.normal(kv, (H, E, hs), dtype=jnp.float32)
    # Projection Linear(H*hs -> E): pre-transposed weight + bias
    w_proj = 0.05 * jax.random.normal(kp, (H * hs, E), dtype=jnp.float32)
    b_proj = 0.05 * jax.random.normal(kb, (1, E), dtype=jnp.float32)

    # One-time packing at parameter-load time (outside the per-call path).
    wqkv_bf16 = pack_qkv_weights(wq, wk, wv)          # (E, 3*H*hs) bf16, Q pre-scaled
    wproj_bf16 = w_proj.astype(jnp.bfloat16)          # (H*hs, E) bf16

    mha = jax.jit(partial(multi_head_attention, num_heads=H, head_size=hs))
    out = mha(x, wqkv_bf16, wproj_bf16, b_proj)
    out = jax.block_until_ready(out)

    ref = reference(x, wq, wk, wv, w_proj, b_proj)
    assert out.shape == (B, S, E)
    # bf16 MXU operands + approx reciprocal => relaxed tolerance vs the f32 reference.
    assert jnp.allclose(out, ref, atol=3e-2, rtol=3e-2), "mismatch vs reference"

    print("KERNEL_OK")
</pallas_src>

<mosaic_0001>
module attributes {stable_mosaic.version = 11 : i64} {
  func.func @_fused_mha_kernel(%arg0: i32, %arg1: memref<1x128x128xbf16, #tpu.memory_space<vmem>>, %arg2: memref<128x384xbf16, #tpu.memory_space<vmem>>, %arg3: memref<128x128xbf16, #tpu.memory_space<vmem>>, %arg4: memref<1x128xf32, #tpu.memory_space<vmem>>, %arg5: memref<1x128x128xf32, #tpu.memory_space<vmem>>) attributes {dimension_semantics = [#tpu.dimension_semantics<parallel>], iteration_bounds = array<i64: 2>, scalar_prefetch = 0 : i64, scratch_operands = 0 : i64, tpu.core_type = #tpu.core_type<tc>, window_params = [{transform_indices = @transform_0, window_bounds = array<i64: 1, 128, 128>}, {pipeline_mode = #tpu.pipeline_mode<synchronous>, transform_indices = @transform_1, window_bounds = array<i64: 128, 384>}, {pipeline_mode = #tpu.pipeline_mode<synchronous>, transform_indices = @transform_2, window_bounds = array<i64: 128, 128>}, {pipeline_mode = #tpu.pipeline_mode<synchronous>, transform_indices = @transform_3, window_bounds = array<i64: 1, 128>}, {transform_indices = @transform_4, window_bounds = array<i64: 1, 128, 128>}]} {
    %c0 = arith.constant 0 : index
    %c0_0 = arith.constant 0 : index
    %c0_1 = arith.constant 0 : index
    %0 = vector.load %arg1[%c0, %c0_0, %c0_1] : memref<1x128x128xbf16, #tpu.memory_space<vmem>>, vector<1x128x128xbf16>
    %1 = vector.shape_cast %0 : vector<1x128x128xbf16> to vector<128x128xbf16>
    %c0_2 = arith.constant 0 : index
    %c0_3 = arith.constant 0 : index
    %2 = vector.load %arg2[%c0_2, %c0_3] : memref<128x384xbf16, #tpu.memory_space<vmem>>, vector<128x384xbf16>
    %cst = arith.constant dense<0.000000e+00> : vector<128x384xf32>
    %3 = tpu.matmul %1, %2, %cst {dimension_numbers = #tpu.dot_dimension_numbers<[1], [0], [0], [1], [0, 0, 1, 1], [], []>} : vector<128x128xbf16>, vector<128x384xbf16>, vector<128x384xf32> -> vector<128x384xf32>
    %4 = arith.truncf %3 : vector<128x384xf32> to vector<128x384xbf16>
    %5 = tpu.iota {dimensions = array<i32: 0>} : vector<128x128xi32>
    %6 = tpu.iota {dimensions = array<i32: 1>} : vector<128x128xi32>
    %7 = arith.cmpi sle, %6, %5 : vector<128x128xi32>
    %cst_4 = arith.constant 0.000000e+00 : f32
    %8 = vector.broadcast %cst_4 : f32 to vector<128x128xf32>
    %9 = vector.extract_strided_slice %4 {offsets = [0, 0], sizes = [128, 32], strides = [1, 1]} : vector<128x384xbf16> to vector<128x32xbf16>
    %10 = vector.extract_strided_slice %4 {offsets = [0, 128], sizes = [128, 32], strides = [1, 1]} : vector<128x384xbf16> to vector<128x32xbf16>
    %11 = vector.extract_strided_slice %4 {offsets = [0, 256], sizes = [128, 32], strides = [1, 1]} : vector<128x384xbf16> to vector<128x32xbf16>
    %cst_5 = arith.constant dense<0.000000e+00> : vector<128x128xf32>
    %12 = tpu.matmul %9, %10, %cst_5 {dimension_numbers = #tpu.dot_dimension_numbers<[1], [1], [0], [0], [0, 0, 1, 0], [], []>} : vector<128x32xbf16>, vector<128x32xbf16>, vector<128x128xf32> -> vector<128x128xf32>
    %cst_6 = arith.constant -1.000000e+30 : f32
    %13 = vector.broadcast %cst_6 : f32 to vector<128x128xf32>
    %14 = arith.select %7, %12, %13 : vector<128x128xi1>, vector<128x128xf32>
    %cst_7 = arith.constant dense<0xFF800000> : vector<128xf32>
    %15 = vector.multi_reduction <maximumf>, %14, %cst_7 [1] : vector<128x128xf32> to vector<128xf32>
    %16 = vector.shape_cast %15 : vector<128xf32> to vector<128x1xf32>
    %17 = vector.broadcast %16 : vector<128x1xf32> to vector<128x128xf32>
    %18 = arith.subf %14, %17 : vector<128x128xf32>
    %19 = math.exp %18 : vector<128x128xf32>
    %cst_8 = arith.constant dense<0.000000e+00> : vector<128xf32>
    %20 = vector.multi_reduction <add>, %19, %cst_8 [1] : vector<128x128xf32> to vector<128xf32>
    %21 = vector.shape_cast %20 : vector<128xf32> to vector<128x1xf32>
    %22 = tpu.reciprocal %21 {approx = true} : vector<128x1xf32> -> vector<128x1xf32>
    %23 = arith.truncf %19 : vector<128x128xf32> to vector<128x128xbf16>
    %cst_9 = arith.constant dense<0.000000e+00> : vector<128x32xf32>
    %24 = tpu.matmul %23, %11, %cst_9 {dimension_numbers = #tpu.dot_dimension_numbers<[1], [0], [0], [1], [0, 0, 1, 1], [], []>} : vector<128x128xbf16>, vector<128x32xbf16>, vector<128x32xf32> -> vector<128x32xf32>
    %25 = vector.broadcast %22 : vector<128x1xf32> to vector<128x32xf32>
    %26 = arith.mulf %24, %25 : vector<128x32xf32>
    %27 = arith.truncf %26 : vector<128x32xf32> to vector<128x32xbf16>
    %c0_10 = arith.constant 0 : index
    %c0_11 = arith.constant 0 : index
    %28 = vector.load %arg3[%c0_10, %c0_11] : memref<128x128xbf16, #tpu.memory_space<vmem>>, vector<32x128xbf16>
    %cst_12 = arith.constant dense<0.000000e+00> : vector<128x128xf32>
    %29 = tpu.matmul %27, %28, %cst_12 {dimension_numbers = #tpu.dot_dimension_numbers<[1], [0], [0], [1], [0, 0, 1, 1], [], []>} : vector<128x32xbf16>, vector<32x128xbf16>, vector<128x128xf32> -> vector<128x128xf32>
    %30 = arith.addf %8, %29 : vector<128x128xf32>
    %31 = vector.extract_strided_slice %4 {offsets = [0, 32], sizes = [128, 32], strides = [1, 1]} : vector<128x384xbf16> to vector<128x32xbf16>
    %32 = vector.extract_strided_slice %4 {offsets = [0, 160], sizes = [128, 32], strides = [1, 1]} : vector<128x384xbf16> to vector<128x32xbf16>
    %33 = vector.extract_strided_slice %4 {offsets = [0, 288], sizes = [128, 32], strides = [1, 1]} : vector<128x384xbf16> to vector<128x32xbf16>
    %cst_13 = arith.constant dense<0.000000e+00> : vector<128x128xf32>
    %34 = tpu.matmul %31, %32, %cst_13 {dimension_numbers = #tpu.dot_dimension_numbers<[1], [1], [0], [0], [0, 0, 1, 0], [], []>} : vector<128x32xbf16>, vector<128x32xbf16>, vector<128x128xf32> -> vector<128x128xf32>
    %cst_14 = arith.constant -1.000000e+30 : f32
    %35 = vector.broadcast %cst_14 : f32 to vector<128x128xf32>
    %36 = arith.select %7, %34, %35 : vector<128x128xi1>, vector<128x128xf32>
    %cst_15 = arith.constant dense<0xFF800000> : vector<128xf32>
    %37 = vector.multi_reduction <maximumf>, %36, %cst_15 [1] : vector<128x128xf32> to vector<128xf32>
    %38 = vector.shape_cast %37 : vector<128xf32> to vector<128x1xf32>
    %39 = vector.broadcast %38 : vector<128x1xf32> to vector<128x128xf32>
    %40 = arith.subf %36, %39 : vector<128x128xf32>
    %41 = math.exp %40 : vector<128x128xf32>
    %cst_16 = arith.constant dense<0.000000e+00> : vector<128xf32>
    %42 = vector.multi_reduction <add>, %41, %cst_16 [1] : vector<128x128xf32> to vector<128xf32>
    %43 = vector.shape_cast %42 : vector<128xf32> to vector<128x1xf32>
    %44 = tpu.reciprocal %43 {approx = true} : vector<128x1xf32> -> vector<128x1xf32>
    %45 = arith.truncf %41 : vector<128x128xf32> to vector<128x128xbf16>
    %cst_17 = arith.constant dense<0.000000e+00> : vector<128x32xf32>
    %46 = tpu.matmul %45, %33, %cst_17 {dimension_numbers = #tpu.dot_dimension_numbers<[1], [0], [0], [1], [0, 0, 1, 1], [], []>} : vector<128x128xbf16>, vector<128x32xbf16>, vector<128x32xf32> -> vector<128x32xf32>
    %47 = vector.broadcast %44 : vector<128x1xf32> to vector<128x32xf32>
    %48 = arith.mulf %46, %47 : vector<128x32xf32>
    %49 = arith.truncf %48 : vector<128x32xf32> to vector<128x32xbf16>
    %c32 = arith.constant 32 : index
    %c0_18 = arith.constant 0 : index
    %50 = vector.load %arg3[%c32, %c0_18] : memref<128x128xbf16, #tpu.memory_space<vmem>>, vector<32x128xbf16>
    %cst_19 = arith.constant dense<0.000000e+00> : vector<128x128xf32>
    %51 = tpu.matmul %49, %50, %cst_19 {dimension_numbers = #tpu.dot_dimension_numbers<[1], [0], [0], [1], [0, 0, 1, 1], [], []>} : vector<128x32xbf16>, vector<32x128xbf16>, vector<128x128xf32> -> vector<128x128xf32>
    %52 = arith.addf %30, %51 : vector<128x128xf32>
    %53 = vector.extract_strided_slice %4 {offsets = [0, 64], sizes = [128, 32], strides = [1, 1]} : vector<128x384xbf16> to vector<128x32xbf16>
    %54 = vector.extract_strided_slice %4 {offsets = [0, 192], sizes = [128, 32], strides = [1, 1]} : vector<128x384xbf16> to vector<128x32xbf16>
    %55 = vector.extract_strided_slice %4 {offsets = [0, 320], sizes = [128, 32], strides = [1, 1]} : vector<128x384xbf16> to vector<128x32xbf16>
    %cst_20 = arith.constant dense<0.000000e+00> : vector<128x128xf32>
    %56 = tpu.matmul %53, %54, %cst_20 {dimension_numbers = #tpu.dot_dimension_numbers<[1], [1], [0], [0], [0, 0, 1, 0], [], []>} : vector<128x32xbf16>, vector<128x32xbf16>, vector<128x128xf32> -> vector<128x128xf32>
    %cst_21 = arith.constant -1.000000e+30 : f32
    %57 = vector.broadcast %cst_21 : f32 to vector<128x128xf32>
    %58 = arith.select %7, %56, %57 : vector<128x128xi1>, vector<128x128xf32>
    %cst_22 = arith.constant dense<0xFF800000> : vector<128xf32>
    %59 = vector.multi_reduction <maximumf>, %58, %cst_22 [1] : vector<128x128xf32> to vector<128xf32>
    %60 = vector.shape_cast %59 : vector<128xf32> to vector<128x1xf32>
    %61 = vector.broadcast %60 : vector<128x1xf32> to vector<128x128xf32>
    %62 = arith.subf %58, %61 : vector<128x128xf32>
    %63 = math.exp %62 : vector<128x128xf32>
    %cst_23 = arith.constant dense<0.000000e+00> : vector<128xf32>
    %64 = vector.multi_reduction <add>, %63, %cst_23 [1] : vector<128x128xf32> to vector<128xf32>
    %65 = vector.shape_cast %64 : vector<128xf32> to vector<128x1xf32>
    %66 = tpu.reciprocal %65 {approx = true} : vector<128x1xf32> -> vector<128x1xf32>
    %67 = arith.truncf %63 : vector<128x128xf32> to vector<128x128xbf16>
    %cst_24 = arith.constant dense<0.000000e+00> : vector<128x32xf32>
    %68 = tpu.matmul %67, %55, %cst_24 {dimension_numbers = #tpu.dot_dimension_numbers<[1], [0], [0], [1], [0, 0, 1, 1], [], []>} : vector<128x128xbf16>, vector<128x32xbf16>, vector<128x32xf32> -> vector<128x32xf32>
    %69 = vector.broadcast %66 : vector<128x1xf32> to vector<128x32xf32>
    %70 = arith.mulf %68, %69 : vector<128x32xf32>
    %71 = arith.truncf %70 : vector<128x32xf32> to vector<128x32xbf16>
    %c64 = arith.constant 64 : index
    %c0_25 = arith.constant 0 : index
    %72 = vector.load %arg3[%c64, %c0_25] : memref<128x128xbf16, #tpu.memory_space<vmem>>, vector<32x128xbf16>
    %cst_26 = arith.constant dense<0.000000e+00> : vector<128x128xf32>
    %73 = tpu.matmul %71, %72, %cst_26 {dimension_numbers = #tpu.dot_dimension_numbers<[1], [0], [0], [1], [0, 0, 1, 1], [], []>} : vector<128x32xbf16>, vector<32x128xbf16>, vector<128x128xf32> -> vector<128x128xf32>
    %74 = arith.addf %52, %73 : vector<128x128xf32>
    %75 = vector.extract_strided_slice %4 {offsets = [0, 96], sizes = [128, 32], strides = [1, 1]} : vector<128x384xbf16> to vector<128x32xbf16>
    %76 = vector.extract_strided_slice %4 {offsets = [0, 224], sizes = [128, 32], strides = [1, 1]} : vector<128x384xbf16> to vector<128x32xbf16>
    %77 = vector.extract_strided_slice %4 {offsets = [0, 352], sizes = [128, 32], strides = [1, 1]} : vector<128x384xbf16> to vector<128x32xbf16>
    %cst_27 = arith.constant dense<0.000000e+00> : vector<128x128xf32>
    %78 = tpu.matmul %75, %76, %cst_27 {dimension_numbers = #tpu.dot_dimension_numbers<[1], [1], [0], [0], [0, 0, 1, 0], [], []>} : vector<128x32xbf16>, vector<128x32xbf16>, vector<128x128xf32> -> vector<128x128xf32>
    %cst_28 = arith.constant -1.000000e+30 : f32
    %79 = vector.broadcast %cst_28 : f32 to vector<128x128xf32>
    %80 = arith.select %7, %78, %79 : vector<128x128xi1>, vector<128x128xf32>
    %cst_29 = arith.constant dense<0xFF800000> : vector<128xf32>
    %81 = vector.multi_reduction <maximumf>, %80, %cst_29 [1] : vector<128x128xf32> to vector<128xf32>
    %82 = vector.shape_cast %81 : vector<128xf32> to vector<128x1xf32>
    %83 = vector.broadcast %82 : vector<128x1xf32> to vector<128x128xf32>
    %84 = arith.subf %80, %83 : vector<128x128xf32>
    %85 = math.exp %84 : vector<128x128xf32>
    %cst_30 = arith.constant dense<0.000000e+00> : vector<128xf32>
    %86 = vector.multi_reduction <add>, %85, %cst_30 [1] : vector<128x128xf32> to vector<128xf32>
    %87 = vector.shape_cast %86 : vector<128xf32> to vector<128x1xf32>
    %88 = tpu.reciprocal %87 {approx = true} : vector<128x1xf32> -> vector<128x1xf32>
    %89 = arith.truncf %85 : vector<128x128xf32> to vector<128x128xbf16>
    %cst_31 = arith.constant dense<0.000000e+00> : vector<128x32xf32>
    %90 = tpu.matmul %89, %77, %cst_31 {dimension_numbers = #tpu.dot_dimension_numbers<[1], [0], [0], [1], [0, 0, 1, 1], [], []>} : vector<128x128xbf16>, vector<128x32xbf16>, vector<128x32xf32> -> vector<128x32xf32>
    %91 = vector.broadcast %88 : vector<128x1xf32> to vector<128x32xf32>
    %92 = arith.mulf %90, %91 : vector<128x32xf32>
    %93 = arith.truncf %92 : vector<128x32xf32> to vector<128x32xbf16>
    %c96 = arith.constant 96 : index
    %c0_32 = arith.constant 0 : index
    %94 = vector.load %arg3[%c96, %c0_32] : memref<128x128xbf16, #tpu.memory_space<vmem>>, vector<32x128xbf16>
    %cst_33 = arith.constant dense<0.000000e+00> : vector<128x128xf32>
    %95 = tpu.matmul %93, %94, %cst_33 {dimension_numbers = #tpu.dot_dimension_numbers<[1], [0], [0], [1], [0, 0, 1, 1], [], []>} : vector<128x32xbf16>, vector<32x128xbf16>, vector<128x128xf32> -> vector<128x128xf32>
    %96 = arith.addf %74, %95 : vector<128x128xf32>
    %c0_34 = arith.constant 0 : index
    %c0_35 = arith.constant 0 : index
    %97 = vector.load %arg4[%c0_34, %c0_35] : memref<1x128xf32, #tpu.memory_space<vmem>>, vector<1x128xf32>
    %98 = vector.broadcast %97 : vector<1x128xf32> to vector<128x128xf32>
    %99 = arith.addf %96, %98 : vector<128x128xf32>
    %c0_36 = arith.constant 0 : index
    %c0_37 = arith.constant 0 : index
    %c0_38 = arith.constant 0 : index
    %100 = vector.load %arg5[%c0_36, %c0_37, %c0_38] : memref<1x128x128xf32, #tpu.memory_space<vmem>>, vector<1x128x128xf32>
    %101 = vector.shape_cast %100 : vector<1x128x128xf32> to vector<128x128xf32>
    %102 = vector.shape_cast %99 : vector<128x128xf32> to vector<1x128x128xf32>
    tpu.vector_store %arg5[%c0_36, %c0_37, %c0_38], %102 {strides = array<i32>} : memref<1x128x128xf32, #tpu.memory_space<vmem>>, vector<1x128x128xf32>,
    return
  }
  func.func @transform_0(%arg0: i32) -> (i32, i32, i32) {
    %c0_i32 = arith.constant 0 : i32
    %c0_i32_0 = arith.constant 0 : i32
    %c0_i32_1 = arith.constant 0 : i32
    return %arg0, %c0_i32, %c0_i32_0 : i32, i32, i32
  }
  func.func @transform_1(%arg0: i32) -> (i32, i32) {
    %c0_i32 = arith.constant 0 : i32
    %c0_i32_0 = arith.constant 0 : i32
    %c0_i32_1 = arith.constant 0 : i32
    return %c0_i32, %c0_i32_0 : i32, i32
  }
  func.func @transform_2(%arg0: i32) -> (i32, i32) {
    %c0_i32 = arith.constant 0 : i32
    %c0_i32_0 = arith.constant 0 : i32
    %c0_i32_1 = arith.constant 0 : i32
    return %c0_i32, %c0_i32_0 : i32, i32
  }
  func.func @transform_3(%arg0: i32) -> (i32, i32) {
    %c0_i32 = arith.constant 0 : i32
    %c0_i32_0 = arith.constant 0 : i32
    %c0_i32_1 = arith.constant 0 : i32
    return %c0_i32, %c0_i32_0 : i32, i32
  }
  func.func @transform_4(%arg0: i32) -> (i32, i32, i32) {
    %c0_i32 = arith.constant 0 : i32
    %c0_i32_0 = arith.constant 0 : i32
    %c0_i32_1 = arith.constant 0 : i32
    return %arg0, %c0_i32, %c0_i32_0 : i32, i32, i32
  }
}

</mosaic_0001>

<llo_original>
// kernel: multi_head_attention.1
$region0: #{multi_head_attention.1}
  #allocation0 [shape = 'u32[]', space=smem, size = 0x4, offset = 0x4, fixed_abs, tag = 'smem constant byte address 0x4 - core index']
  #allocation1 [shape = 'u32[144,128]{1,0:T(1,128)}', space=vmem, size = 0x12000, scoped, tag = 'internal scratch']
  %s0 = inlined_call_operand.vmem [shape: bf16[2,128,128], index: 0, kind: input, shape index: {}]
  %s1 = inlined_call_operand.vmem [shape: bf16[128,384], index: 1, kind: input, shape index: {}]
  %s2 = inlined_call_operand.vmem [shape: bf16[128,128], index: 2, kind: input, shape index: {}]
  %s3 = inlined_call_operand.vmem [shape: f32[1,128], index: 3, kind: input, shape index: {}]
  %s4 = inlined_call_operand.hbm [shape: f32[2,128,128], index: 4, kind: output, shape index: {}]
  %s5 = sld [smem:[#allocation0]]
  $region49: #{multi_head_attention.1} parent=0
    _
  %s7 = ssub.s32 1, %s5
  %s8 = scalar_select 0, %s7, %s5
  $region1: #{multi_head_attention.1} parent=0
    #allocation2 [shape = 'u8[131072]{0}', space=vmem, size = 0x20000, scoped, tag = 'output window, operand 0']
    #allocation3 [shape = 's32[2]{0}', space=sflag, size = 0x8, scoped, tag = 'scoped memory for multi_head_attention.1']
    %9 = vsyncpa [#allocation3], 0
    %s10 = scalar_lea.sflag [#allocation3], 1
    %11 = vsyncpa %s10, 0
    loop: start=0, step=1, limit=4
    $region2: #{multi_head_attention.1} parent=1 // loop_pre_header
      _
    $region3: #{multi_head_attention.1} parent=1 // loop_header
      %s13 = sphi 0, %s17
      %p14 = scmp.ge.s32.totalorder %s13, 4
      %s23 = sphi 0, %s25
      %s26 = sphi 0, %s23
      %s27 = sphi 0, %s26
      %s43 = sphi 0, %s27
      %s47 = sphi 0, %s47
      %s49 = sphi 0, %s47
      %s50 = sphi 0, %s49
      %s64 = sphi 0, %s50
      %s68 = sphi 0, %s68
      %s70 = sphi 0, %s68
      %s71 = sphi 0, %s70
      %s85 = sphi 0, %s71
      %s89 = sphi 0, %s89
      %s91 = sphi 0, %s89
      %s92 = sphi 0, %s91
      %s106 = sphi 0, %s92
      %s112 = sphi 0, %s114
      %s115 = sphi 0, %s112
      %s116 = sphi 0, %s115
      %s132 = sphi 0, %s116
    $region4: #{multi_head_attention.1} parent=1 // loop_header_branch
      %16 = sbr.rel (%p14) target = $region8
    $region5: #{multi_head_attention.1} parent=1 // loop_body
      %s18 = ssub.s32 %s13, 1
      %s19 = ssub.s32 %s13, 2
      %s20 = sadd.s32 %s13, 1
      %s21 = ssub.s32 %s13, %s20
      %p22 = scmp.eq.s32.totalorder %s21, 0
      %s24 = sadd.s32 %s23, 1
      %s25 = scalar_select %p22, %s23, %s24
      %p28 = pneg %p22
      %p29 = scmp.eq.s32.totalorder %s13, 1
      %p30 = por %p28, %p29
      %p31 = scmp.ne.s32.totalorder %s23, %s26
      %p32 = scmp.eq.s32.totalorder %s13, 0
      %p33 = por %p31, %p32
      %p34 = scmp.ne.s32.totalorder %s23, %s26
      %p35 = scmp.eq.s32.totalorder %s18, 1
      %p36 = por %p34, %p35
      %p37 = scmp.ne.s32.totalorder %s26, %s27
      %p38 = scmp.eq.s32.totalorder %s18, 0
      %p39 = por %p37, %p38
      %p40 = scmp.ne.s32.totalorder %s26, %s27
      %p41 = scmp.eq.s32.totalorder %s19, 1
      %p42 = por %p40, %p41
      %p44 = scmp.ne.s32.totalorder %s27, %s43
      %p45 = scmp.eq.s32.totalorder %s19, 0
      %p46 = por %p44, %p45
      %s48 = sadd.s32 %s47, 1
      %p51 = scmp.eq.s32.totalorder %s13, 1
      %p52 = scmp.ne.s32.totalorder %s47, %s49
      %p53 = scmp.eq.s32.totalorder %s13, 0
      %p54 = por %p52, %p53
      %p55 = scmp.ne.s32.totalorder %s47, %s49
      %p56 = scmp.eq.s32.totalorder %s18, 1
      %p57 = por %p55, %p56
      %p58 = scmp.ne.s32.totalorder %s49, %s50
      %p59 = scmp.eq.s32.totalorder %s18, 0
      %p60 = por %p58, %p59
      %p61 = scmp.ne.s32.totalorder %s49, %s50
      %p62 = scmp.eq.s32.totalorder %s19, 1
      %p63 = por %p61, %p62
      %p65 = scmp.ne.s32.totalorder %s50, %s64
      %p66 = scmp.eq.s32.totalorder %s19, 0
      %p67 = por %p65, %p66
      %s69 = sadd.s32 %s68, 1
      %p72 = scmp.eq.s32.totalorder %s13, 1
      %p73 = scmp.ne.s32.totalorder %s68, %s70
      %p74 = scmp.eq.s32.totalorder %s13, 0
      %p75 = por %p73, %p74
      %p76 = scmp.ne.s32.totalorder %s68, %s70
      %p77 = scmp.eq.s32.totalorder %s18, 1
      %p78 = por %p76, %p77
      %p79 = scmp.ne.s32.totalorder %s70, %s71
      %p80 = scmp.eq.s32.totalorder %s18, 0
      %p81 = por %p79, %p80
      %p82 = scmp.ne.s32.totalorder %s70, %s71
      %p83 = scmp.eq.s32.totalorder %s19, 1
      %p84 = por %p82, %p83
      %p86 = scmp.ne.s32.totalorder %s71, %s85
      %p87 = scmp.eq.s32.totalorder %s19, 0
      %p88 = por %p86, %p87
      %s90 = sadd.s32 %s89, 1
      %p93 = scmp.eq.s32.totalorder %s13, 1
      %p94 = scmp.ne.s32.totalorder %s89, %s91
      %p95 = scmp.eq.s32.totalorder %s13, 0
      %p96 = por %p94, %p95
      %p97 = scmp.ne.s32.totalorder %s89, %s91
      %p98 = scmp.eq.s32.totalorder %s18, 1
      %p99 = por %p97, %p98
      %p100 = scmp.ne.s32.totalorder %s91, %s92
      %p101 = scmp.eq.s32.totalorder %s18, 0
      %p102 = por %p100, %p101
      %p103 = scmp.ne.s32.totalorder %s91, %s92
      %p104 = scmp.eq.s32.totalorder %s19, 1
      %p105 = por %p103, %p104
      %p107 = scmp.ne.s32.totalorder %s92, %s106
      %p108 = scmp.eq.s32.totalorder %s19, 0
      %p109 = por %p107, %p108
      %s110 = ssub.s32 %s13, %s20
      %p111 = scmp.eq.s32.totalorder %s110, 0
      %s113 = sadd.s32 %s112, 1
      %s114 = scalar_select %p111, %s112, %s113
      %p117 = pneg %p111
      %p118 = scmp.eq.s32.totalorder %s13, 1
      %p119 = por %p117, %p118
      %p120 = scmp.ne.s32.totalorder %s112, %s115
      %p121 = scmp.eq.s32.totalorder %s13, 0
      %p122 = por %p120, %p121
      %p123 = scmp.ne.s32.totalorder %s112, %s115
      %p124 = scmp.eq.s32.totalorder %s18, 1
      %p125 = por %p123, %p124
      %p126 = scmp.ne.s32.totalorder %s115, %s116
      %p127 = scmp.eq.s32.totalorder %s18, 0
      %p128 = por %p126, %p127
      %p129 = scmp.ne.s32.totalorder %s115, %s116
      %p130 = scmp.eq.s32.totalorder %s19, 1
      %p131 = por %p129, %p130
      %p133 = scmp.ne.s32.totalorder %s116, %s132
      %p134 = scmp.eq.s32.totalorder %s19, 0
      %p135 = por %p133, %p134
      %p136 = scmp.le.s32.totalorder 1, %s13
      %p137 = scmp.lt.s32.totalorder %s13, 3
      %p138 = pnand %p136, %p137
      %p139 = pneg %p138
      // Predicated region
      $region9: #{multi_head_attention.1} parent=5 // pred_check
        _
      $region10: #{multi_head_attention.1} parent=5 // pred_check_branch
        %141 = sbr.rel (%p138) target = $region12
      $region11: #{multi_head_attention.1} parent=5 // pred_region
        %s142 = ssub.s32 %s13, 1
        // Predicated region
        $region13: #{multi_head_attention.1} parent=11 // pred_check
          %p143 = pneg %p60
        $region14: #{multi_head_attention.1} parent=11 // pred_check_branch
          %145 = sbr.rel (%p143) target = $region16
        $region15: #{multi_head_attention.1} parent=11 // pred_region
          _
        $region16: #{multi_head_attention.1} parent=11 // pred_fallthru
          _
        // Predicated region
        $region17: #{multi_head_attention.1} parent=11 // pred_check
          %p146 = pneg %p81
        $region18: #{multi_head_attention.1} parent=11 // pred_check_branch
          %148 = sbr.rel (%p146) target = $region20
        $region19: #{multi_head_attention.1} parent=11 // pred_region
          _
        $region20: #{multi_head_attention.1} parent=11 // pred_fallthru
          _
        // Predicated region
        $region21: #{multi_head_attention.1} parent=11 // pred_check
          %p149 = pneg %p102
        $region22: #{multi_head_attention.1} parent=11 // pred_check_branch
          %151 = sbr.rel (%p149) target = $region24
        $region23: #{multi_head_attention.1} parent=11 // pred_region
          _
        $region24: #{multi_head_attention.1} parent=11 // pred_fallthru
          _
      $region12: #{multi_head_attention.1} parent=5 // pred_fallthru
        _
      %p152 = scmp.lt.s32.totalorder %s13, 2
      // Predicated region
      $region25: #{multi_head_attention.1} parent=5 // pred_check
        %p153 = pneg %p152
      $region26: #{multi_head_attention.1} parent=5 // pred_check_branch
        %155 = sbr.rel (%p153) target = $region28
      $region27: #{multi_head_attention.1} parent=5 // pred_region
        // Predicated region
        $region29: #{multi_head_attention.1} parent=27 // pred_check
          %p156 = pneg %p33
        $region30: #{multi_head_attention.1} parent=27 // pred_check_branch
          %158 = sbr.rel (%p156) target = $region32
        $region31: #{multi_head_attention.1} parent=27 // pred_region
          %p159 = scmp.lt.s32.totalorder %s13, 1
          %s160 = scalar_select %p159, %s13, 1
          %s161 = smul.addr %s160, 16
          %s162 = smul.addr %s161, 4
          %s163 = scalar_lea.vmem %s0, %s162
        $region32: #{multi_head_attention.1} parent=27 // pred_fallthru
          _
      $region28: #{multi_head_attention.1} parent=5 // pred_fallthru
        _
      %p164 = scmp.le.s32.totalorder 1, %s13
      %p165 = scmp.lt.s32.totalorder %s13, 3
      %p166 = pnand %p164, %p165
      %p167 = pneg %p166
      // Predicated region
      $region33: #{multi_head_attention.1} parent=5 // pred_check
        _
      $region34: #{multi_head_attention.1} parent=5 // pred_check_branch
        %169 = sbr.rel (%p166) target = $region36
      $region35: #{multi_head_attention.1} parent=5 // pred_region
        %s170 = ssub.s32 %s13, 1
        %p171 = scmp.lt.s32.totalorder %s18, 1
        %s172 = scalar_select %p171, %s18, 1
        %s173 = smul.addr %s172, 16
        %s174 = smul.addr %s173, 4
        %s175 = scalar_lea.vmem %s0, %s174
        %p176 = pneg %p39
        %p177 = pneg %p36
        %p178 = pneg %p60
        %p179 = pneg %p57
        %p180 = pneg %p81
        %p181 = pneg %p78
        %p182 = pneg %p102
        %p183 = pneg %p99
        %p184 = pneg %p128
        %p185 = pneg %p125
        %s186 = sand.u32 %s115, 1
        %s187 = scalar_lea.sflag [#allocation3], %s186
        %s188 = sand.u32 %s115, 1
        %s189 = smul.addr %s188, 128
        %s190 = scalar_lea.vmem [#allocation2], %s189
        %p191 = scmp.lt.s32.totalorder %s18, 1
        %s192 = scalar_select %p191, %s18, 1
        %s193 = smul.addr %s192, 16
        %s194 = smul.addr %s193, 4
        %s195 = scalar_lea.vmem %s0, %s194
        %v197 = vld [vmem:[%s195] sm:$0xf]
        %v198 = vld [vmem:[%s195 + $0x4] sm:$0xf]
        %v199 = vld [vmem:[%s195 + $0x8] sm:$0xf]
        %v200 = vld [vmem:[%s195 + $0xc] sm:$0xf]
        %v201 = vld [vmem:[%s195 + $0x10] sm:$0xf]
        %v202 = vld [vmem:[%s195 + $0x14] sm:$0xf]
        %v203 = vld [vmem:[%s195 + $0x18] sm:$0xf]
        %v204 = vld [vmem:[%s195 + $0x1c] sm:$0xf]
        %v205 = vld [vmem:[%s195 + $0x20] sm:$0xf]
        %v206 = vld [vmem:[%s195 + $0x24] sm:$0xf]
        %v207 = vld [vmem:[%s195 + $0x28] sm:$0xf]
        %v208 = vld [vmem:[%s195 + $0x2c] sm:$0xf]
        %v209 = vld [vmem:[%s195 + $0x30] sm:$0xf]
        %v210 = vld [vmem:[%s195 + $0x34] sm:$0xf]
        %v211 = vld [vmem:[%s195 + $0x38] sm:$0xf]
        %v212 = vld [vmem:[%s195 + $0x3c] sm:$0xf]
        %v213 = vld [vmem:[%s1] sm:$0xff]
        %v214 = vld [vmem:[%s1 + $0x8] sm:$0xf]
        %v215 = vld [vmem:[%s1 + $0xc] sm:$0xff]
        %v216 = vld [vmem:[%s1 + $0x14] sm:$0xf]
        %v217 = vld [vmem:[%s1 + $0x18] sm:$0xff]
        %v218 = vld [vmem:[%s1 + $0x20] sm:$0xf]
        %v219 = vld [vmem:[%s1 + $0x24] sm:$0xff]
        %v220 = vld [vmem:[%s1 + $0x2c] sm:$0xf]
        %v221 = vld [vmem:[%s1 + $0x30] sm:$0xff]
        %v222 = vld [vmem:[%s1 + $0x38] sm:$0xf]
        %v223 = vld [vmem:[%s1 + $0x3c] sm:$0xff]
        %v224 = vld [vmem:[%s1 + $0x44] sm:$0xf]
        %v225 = vld [vmem:[%s1 + $0x48] sm:$0xff]
        %v226 = vld [vmem:[%s1 + $0x50] sm:$0xf]
        %v227 = vld [vmem:[%s1 + $0x54] sm:$0xff]
        %v228 = vld [vmem:[%s1 + $0x5c] sm:$0xf]
        %v229 = vld [vmem:[%s1 + $0x60] sm:$0xff]
        %v230 = vld [vmem:[%s1 + $0x68] sm:$0xf]
        %v231 = vld [vmem:[%s1 + $0x6c] sm:$0xff]
        %v232 = vld [vmem:[%s1 + $0x74] sm:$0xf]
        %v233 = vld [vmem:[%s1 + $0x78] sm:$0xff]
        %v234 = vld [vmem:[%s1 + $0x80] sm:$0xf]
        %v235 = vld [vmem:[%s1 + $0x84] sm:$0xff]
        %v236 = vld [vmem:[%s1 + $0x8c] sm:$0xf]
        %v237 = vld [vmem:[%s1 + $0x90] sm:$0xff]
        %v238 = vld [vmem:[%s1 + $0x98] sm:$0xf]
        %v239 = vld [vmem:[%s1 + $0x9c] sm:$0xff]
        %v240 = vld [vmem:[%s1 + $0xa4] sm:$0xf]
        %v241 = vld [vmem:[%s1 + $0xa8] sm:$0xff]
        %v242 = vld [vmem:[%s1 + $0xb0] sm:$0xf]
        %v243 = vld [vmem:[%s1 + $0xb4] sm:$0xff]
        %v244 = vld [vmem:[%s1 + $0xbc] sm:$0xf]
        %v261 = vunpack.c.l.b16 %v197
        %v262 = vunpack.c.l.b16 %v198
        %v263 = vunpack.c.l.b16 %v199
        %v264 = vunpack.c.l.b16 %v200
        %v265 = vunpack.c.l.b16 %v201
        %v266 = vunpack.c.l.b16 %v202
        %v267 = vunpack.c.l.b16 %v203
        %v268 = vunpack.c.l.b16 %v204
        %v269 = vunpack.c.l.b16 %v205
        %v270 = vunpack.c.l.b16 %v206
        %v271 = vunpack.c.l.b16 %v207
        %v272 = vunpack.c.l.b16 %v208
        %v273 = vunpack.c.l.b16 %v209
        %v274 = vunpack.c.l.b16 %v210
        %v275 = vunpack.c.l.b16 %v211
        %v276 = vunpack.c.l.b16 %v212
        %v277 = vpack.c.b16 %v262, %v261
        %v278 = vpack.c.b16 %v264, %v263
        %v279 = vpack.c.b16 %v266, %v265
        %v280 = vpack.c.b16 %v268, %v267
        %v281 = vpack.c.b16 %v270, %v269
        %v282 = vpack.c.b16 %v272, %v271
        %v283 = vpack.c.b16 %v274, %v273
        %v284 = vpack.c.b16 %v276, %v275
        %v325 = vunpack.c.l.b16 %v213
        %v326 = vunpack.c.h.b16 %v213
        %v327 = vunpack.c.l.b16 %v214
        %v328 = vunpack.c.l.b16 %v215
        %v329 = vunpack.c.h.b16 %v215
        %v330 = vunpack.c.l.b16 %v216
        %v331 = vunpack.c.l.b16 %v217
        %v332 = vunpack.c.h.b16 %v217
        %v333 = vunpack.c.l.b16 %v218
        %v334 = vunpack.c.l.b16 %v219
        %v335 = vunpack.c.h.b16 %v219
        %v336 = vunpack.c.l.b16 %v220
        %v337 = vunpack.c.l.b16 %v221
        %v338 = vunpack.c.h.b16 %v221
        %v339 = vunpack.c.l.b16 %v222
        %v340 = vunpack.c.l.b16 %v223
        %v341 = vunpack.c.h.b16 %v223
        %v342 = vunpack.c.l.b16 %v224
        %v343 = vunpack.c.l.b16 %v225
        %v344 = vunpack.c.h.b16 %v225
        %v345 = vunpack.c.l.b16 %v226
        %v346 = vunpack.c.l.b16 %v227
        %v347 = vunpack.c.h.b16 %v227
        %v348 = vunpack.c.l.b16 %v228
        %v349 = vunpack.c.l.b16 %v229
        %v350 = vunpack.c.h.b16 %v229
        %v351 = vunpack.c.l.b16 %v230
        %v352 = vunpack.c.l.b16 %v231
        %v353 = vunpack.c.h.b16 %v231
        %v354 = vunpack.c.l.b16 %v232
        %v355 = vunpack.c.l.b16 %v233
        %v356 = vunpack.c.h.b16 %v233
        %v357 = vunpack.c.l.b16 %v234
        %v358 = vunpack.c.l.b16 %v235
        %v359 = vunpack.c.h.b16 %v235
        %v360 = vunpack.c.l.b16 %v236
        %v361 = vunpack.c.l.b16 %v237
        %v362 = vunpack.c.h.b16 %v237
        %v363 = vunpack.c.l.b16 %v238
        %v364 = vunpack.c.l.b16 %v239
        %v365 = vunpack.c.h.b16 %v239
        %v366 = vunpack.c.l.b16 %v240
        %v367 = vunpack.c.l.b16 %v241
        %v368 = vunpack.c.h.b16 %v241
        %v369 = vunpack.c.l.b16 %v242
        %v370 = vunpack.c.l.b16 %v243
        %v371 = vunpack.c.h.b16 %v243
        %v372 = vunpack.c.l.b16 %v244
        %v373 = vpack.c.b16 %v328, %v325
        %v374 = vpack.c.b16 %v329, %v326
        %v375 = vpack.c.b16 %v330, %v327
        %v376 = vpack.c.b16 %v334, %v331
        %v377 = vpack.c.b16 %v335, %v332
        %v378 = vpack.c.b16 %v336, %v333
        %v379 = vpack.c.b16 %v340, %v337
        %v380 = vpack.c.b16 %v341, %v338
        %v381 = vpack.c.b16 %v342, %v339
        %v382 = vpack.c.b16 %v346, %v343
        %v383 = vpack.c.b16 %v347, %v344
        %v384 = vpack.c.b16 %v348, %v345
        %v385 = vpack.c.b16 %v352, %v349
        %v386 = vpack.c.b16 %v353, %v350
        %v387 = vpack.c.b16 %v354, %v351
        %v388 = vpack.c.b16 %v358, %v355
        %v389 = vpack.c.b16 %v359, %v356
        %v390 = vpack.c.b16 %v360, %v357
        %v391 = vpack.c.b16 %v364, %v361
        %v392 = vpack.c.b16 %v365, %v362
        %v393 = vpack.c.b16 %v366, %v363
        %v394 = vpack.c.b16 %v370, %v367
        %v395 = vpack.c.b16 %v371, %v368
        %v396 = vpack.c.b16 %v372, %v369
        %421 = vmatprep.subr.bf16.mxu0 %v374
        %422 = vmatpush1.bf16.msra.mxu0 %v373
        %423 = vmatprep.subr.bf16.mxu0 %v377
        %424 = vmatpush1.bf16.msra.mxu0 %v376
        %425 = vmatprep.subr.bf16.mxu0 %v380
        %426 = vmatpush1.bf16.msra.mxu0 %v379
        %427 = vmatprep.subr.bf16.mxu0 %v383
        %428 = vmatpush1.bf16.msra.mxu0 %v382
        %429 = vmatprep.subr.bf16.mxu0 %v386
        %430 = vmatpush1.bf16.msra.mxu0 %v385
        %431 = vmatprep.subr.bf16.mxu0 %v389
        %432 = vmatpush1.bf16.msra.mxu0 %v388
        %433 = vmatprep.subr.bf16.mxu0 %v392
        %434 = vmatpush1.bf16.msra.mxu0 %v391
        %435 = vmatprep.subr.bf16.mxu0 %v395
        %436 = vmatpush1.bf16.msra.mxu0 %v394
        %437 = vmatprep.subr.bf16.mxu0 0
        %438 = vmatpush1.bf16.msra.mxu0 0
        %439 = vmatprep.subr.bf16.mxu0 0
        %440 = vmatpush1.bf16.msra.mxu0 0
        %441 = vmatprep.subr.bf16.mxu0 0
        %442 = vmatpush1.bf16.msra.mxu0 0
        %443 = vmatprep.subr.bf16.mxu0 0
        %444 = vmatpush1.bf16.msra.mxu0 0
        %445 = vmatprep.subr.bf16.mxu0 0
        %446 = vmatpush1.bf16.msra.mxu0 0
        %447 = vmatprep.subr.bf16.mxu0 0
        %448 = vmatpush1.bf16.msra.mxu0 0
        %449 = vmatprep.subr.bf16.mxu0 0
        %450 = vmatpush1.bf16.msra.mxu0 0
        %451 = vmatprep.subr.bf16.mxu0 0
        %452 = vmatpush1.bf16.msra.mxu0 0
        %453 = vmatprep.mubr.bf16.mxu0 0
        %454 = vmatmul.mubr.bf16.gmra.mrb[0].mxu0 %v277
        %v455 = vpop.f32.mrb[0].mxu0
        %v456 = vadd.f32 0.0, %v455
        %v457 = vpop.f32.mrb[0].mxu0
        %v458 = vadd.f32 0.0, %v457
        %v459 = vpop.f32.mrb[0].mxu0
        %v460 = vadd.f32 0.0, %v459
        %v461 = vpop.f32.mrb[0].mxu0
        %v462 = vadd.f32 0.0, %v461
        %463 = vmatprep.mubr.bf16.mxu0 0
        %464 = vmatmul.mubr.bf16.gmra.mrb[0].mxu0 %v278
        %v465 = vpop.f32.mrb[0].mxu0
        %v466 = vadd.f32 0.0, %v465
        %v467 = vpop.f32.mrb[0].mxu0
        %v468 = vadd.f32 0.0, %v467
        %v469 = vpop.f32.mrb[0].mxu0
        %v470 = vadd.f32 0.0, %v469
        %v471 = vpop.f32.mrb[0].mxu0
        %v472 = vadd.f32 0.0, %v471
        %473 = vmatprep.mubr.bf16.mxu0 0
        %474 = vmatmul.mubr.bf16.gmra.mrb[0].mxu0 %v279
        %v475 = vpop.f32.mrb[0].mxu0
        %v476 = vadd.f32 0.0, %v475
        %v477 = vpop.f32.mrb[0].mxu0
        %v478 = vadd.f32 0.0, %v477
        %v479 = vpop.f32.mrb[0].mxu0
        %v480 = vadd.f32 0.0, %v479
        %v481 = vpop.f32.mrb[0].mxu0
        %v482 = vadd.f32 0.0, %v481
        %483 = vmatprep.mubr.bf16.mxu0 0
        %484 = vmatmul.mubr.bf16.gmra.mrb[0].mxu0 %v280
        %v485 = vpop.f32.mrb[0].mxu0
        %v486 = vadd.f32 0.0, %v485
        %v487 = vpop.f32.mrb[0].mxu0
        %v488 = vadd.f32 0.0, %v487
        %v489 = vpop.f32.mrb[0].mxu0
        %v490 = vadd.f32 0.0, %v489
        %v491 = vpop.f32.mrb[0].mxu0
        %v492 = vadd.f32 0.0, %v491
        %493 = vmatprep.mubr.bf16.mxu0 0
        %494 = vmatmul.mubr.bf16.gmra.mrb[0].mxu0 %v281
        %v495 = vpop.f32.mrb[0].mxu0
        %v496 = vadd.f32 0.0, %v495
        %v497 = vpop.f32.mrb[0].mxu0
        %v498 = vadd.f32 0.0, %v497
        %v499 = vpop.f32.mrb[0].mxu0
        %v500 = vadd.f32 0.0, %v499
        %v501 = vpop.f32.mrb[0].mxu0
        %v502 = vadd.f32 0.0, %v501
        %503 = vmatprep.mubr.bf16.mxu0 0
        %504 = vmatmul.mubr.bf16.gmra.mrb[0].mxu0 %v282
        %v505 = vpop.f32.mrb[0].mxu0
        %v506 = vadd.f32 0.0, %v505
        %v507 = vpop.f32.mrb[0].mxu0
        %v508 = vadd.f32 0.0, %v507
        %v509 = vpop.f32.mrb[0].mxu0
        %v510 = vadd.f32 0.0, %v509
        %v511 = vpop.f32.mrb[0].mxu0
        %v512 = vadd.f32 0.0, %v511
        %513 = vmatprep.mubr.bf16.mxu0 0
        %514 = vmatmul.mubr.bf16.gmra.mrb[0].mxu0 %v283
        %v515 = vpop.f32.mrb[0].mxu0
        %v516 = vadd.f32 0.0, %v515
        %v517 = vpop.f32.mrb[0].mxu0
        %v518 = vadd.f32 0.0, %v517
        %v519 = vpop.f32.mrb[0].mxu0
        %v520 = vadd.f32 0.0, %v519
        %v521 = vpop.f32.mrb[0].mxu0
        %v522 = vadd.f32 0.0, %v521
        %523 = vmatprep.mubr.bf16.mxu0 0
        %524 = vmatmul.mubr.bf16.gmra.mrb[0].mxu0 %v284
        %v525 = vpop.f32.mrb[0].mxu0
        %v526 = vadd.f32 0.0, %v525
        %v527 = vpop.f32.mrb[0].mxu0
        %v528 = vadd.f32 0.0, %v527
        %v529 = vpop.f32.mrb[0].mxu0
        %v530 = vadd.f32 0.0, %v529
        %v531 = vpop.f32.mrb[0].mxu0
        %v532 = vadd.f32 0.0, %v531
        %533 = vdwg.mxu0
        %534 = vmatprep.subr.bf16.mxu0 0
        %535 = vmatpush1.bf16.msra.mxu0 %v375
        %536 = vmatprep.subr.bf16.mxu0 0
        %537 = vmatpush1.bf16.msra.mxu0 %v378
        %538 = vmatprep.subr.bf16.mxu0 0
        %539 = vmatpush1.bf16.msra.mxu0 %v381
        %540 = vmatprep.subr.bf16.mxu0 0
        %541 = vmatpush1.bf16.msra.mxu0 %v384
        %542 = vmatprep.subr.bf16.mxu0 0
        %543 = vmatpush1.bf16.msra.mxu0 %v387
        %544 = vmatprep.subr.bf16.mxu0 0
        %545 = vmatpush1.bf16.msra.mxu0 %v390
        %546 = vmatprep.subr.bf16.mxu0 0
        %547 = vmatpush1.bf16.msra.mxu0 %v393
        %548 = vmatprep.subr.bf16.mxu0 0
        %549 = vmatpush1.bf16.msra.mxu0 %v396
        %550 = vmatprep.subr.bf16.mxu0 0
        %551 = vmatpush1.bf16.msra.mxu0 0
        %552 = vmatprep.subr.bf16.mxu0 0
        %553 = vmatpush1.bf16.msra.mxu0 0
        %554 = vmatprep.subr.bf16.mxu0 0
        %555 = vmatpush1.bf16.msra.mxu0 0
        %556 = vmatprep.subr.bf16.mxu0 0
        %557 = vmatpush1.bf16.msra.mxu0 0
        %558 = vmatprep.subr.bf16.mxu0 0
        %559 = vmatpush1.bf16.msra.mxu0 0
        %560 = vmatprep.subr.bf16.mxu0 0
        %561 = vmatpush1.bf16.msra.mxu0 0
        %562 = vmatprep.subr.bf16.mxu0 0
        %563 = vmatpush1.bf16.msra.mxu0 0
        %564 = vmatprep.subr.bf16.mxu0 0
        %565 = vmatpush1.bf16.msra.mxu0 0
        %566 = vmatprep.mubr.bf16.mxu0 0
        %567 = vmatmul.mubr.bf16.gmra.mrb[0].mxu0 %v277
        %v568 = vpop.f32.mrb[0].mxu0
        %v569 = vadd.f32 0.0, %v568
        %v570 = vpop.f32.mrb[0].mxu0
        %v571 = vpop.f32.mrb[0].mxu0
        %v572 = vadd.f32 0.0, %v571
        %v573 = vpop.f32.mrb[0].mxu0
        %574 = vmatprep.mubr.bf16.mxu0 0
        %575 = vmatmul.mubr.bf16.gmra.mrb[0].mxu0 %v278
        %v576 = vpop.f32.mrb[0].mxu0
        %v577 = vadd.f32 0.0, %v576
        %v578 = vpop.f32.mrb[0].mxu0
        %v579 = vpop.f32.mrb[0].mxu0
        %v580 = vadd.f32 0.0, %v579
        %v581 = vpop.f32.mrb[0].mxu0
        %582 = vmatprep.mubr.bf16.mxu0 0
        %583 = vmatmul.mubr.bf16.gmra.mrb[0].mxu0 %v279
        %v584 = vpop.f32.mrb[0].mxu0
        %v585 = vadd.f32 0.0, %v584
        %v586 = vpop.f32.mrb[0].mxu0
        %v587 = vpop.f32.mrb[0].mxu0
        %v588 = vadd.f32 0.0, %v587
        %v589 = vpop.f32.mrb[0].mxu0
        %590 = vmatprep.mubr.bf16.mxu0 0
        %591 = vmatmul.mubr.bf16.gmra.mrb[0].mxu0 %v280
        %v592 = vpop.f32.mrb[0].mxu0
        %v593 = vadd.f32 0.0, %v592
        %v594 = vpop.f32.mrb[0].mxu0
        %v595 = vpop.f32.mrb[0].mxu0
        %v596 = vadd.f32 0.0, %v595
        %v597 = vpop.f32.mrb[0].mxu0
        %598 = vmatprep.mubr.bf16.mxu0 0
        %599 = vmatmul.mubr.bf16.gmra.mrb[0].mxu0 %v281
        %v600 = vpop.f32.mrb[0].mxu0
        %v601 = vadd.f32 0.0, %v600
        %v602 = vpop.f32.mrb[0].mxu0
        %v603 = vpop.f32.mrb[0].mxu0
        %v604 = vadd.f32 0.0, %v603
        %v605 = vpop.f32.mrb[0].mxu0
        %606 = vmatprep.mubr.bf16.mxu0 0
        %607 = vmatmul.mubr.bf16.gmra.mrb[0].mxu0 %v282
        %v608 = vpop.f32.mrb[0].mxu0
        %v609 = vadd.f32 0.0, %v608
        %v610 = vpop.f32.mrb[0].mxu0
        %v611 = vpop.f32.mrb[0].mxu0
        %v612 = vadd.f32 0.0, %v611
        %v613 = vpop.f32.mrb[0].mxu0
        %614 = vmatprep.mubr.bf16.mxu0 0
        %615 = vmatmul.mubr.bf16.gmra.mrb[0].mxu0 %v283
        %v616 = vpop.f32.mrb[0].mxu0
        %v617 = vadd.f32 0.0, %v616
        %v618 = vpop.f32.mrb[0].mxu0
        %v619 = vpop.f32.mrb[0].mxu0
        %v620 = vadd.f32 0.0, %v619
        %v621 = vpop.f32.mrb[0].mxu0
        %622 = vmatprep.mubr.bf16.mxu0 0
        %623 = vmatmul.mubr.bf16.gmra.mrb[0].mxu0 %v284
        %v624 = vpop.f32.mrb[0].mxu0
        %v625 = vadd.f32 0.0, %v624
        %v626 = vpop.f32.mrb[0].mxu0
        %v627 = vpop.f32.mrb[0].mxu0
        %v628 = vadd.f32 0.0, %v627
        %v629 = vpop.f32.mrb[0].mxu0
        %630 = vdwg.mxu0
        %v631 = vpack.c.bf16 %v460, %v456
        %v632 = vpack.c.bf16 %v462, %v458
        %v633 = vpack.c.bf16 %v572, %v569
        %v634 = vpack.c.bf16 %v470, %v466
        %v635 = vpack.c.bf16 %v472, %v468
        %v636 = vpack.c.bf16 %v580, %v577
        %v637 = vpack.c.bf16 %v480, %v476
        %v638 = vpack.c.bf16 %v482, %v478
        %v639 = vpack.c.bf16 %v588, %v585
        %v640 = vpack.c.bf16 %v490, %v486
        %v641 = vpack.c.bf16 %v492, %v488
        %v642 = vpack.c.bf16 %v596, %v593
        %v643 = vpack.c.bf16 %v500, %v496
        %v644 = vpack.c.bf16 %v502, %v498
        %v645 = vpack.c.bf16 %v604, %v601
        %v646 = vpack.c.bf16 %v510, %v506
        %v647 = vpack.c.bf16 %v512, %v508
        %v648 = vpack.c.bf16 %v612, %v609
        %v649 = vpack.c.bf16 %v520, %v516
        %v650 = vpack.c.bf16 %v522, %v518
        %v651 = vpack.c.bf16 %v620, %v617
        %v652 = vpack.c.bf16 %v530, %v526
        %v653 = vpack.c.bf16 %v532, %v528
        %v654 = vpack.c.bf16 %v628, %v625
        %v655 = vlaneseq
        %v656 = vshrl.u32 %v655, 7
        %v657 = vadd.s32 %v656, 8
        %v658 = vadd.s32 %v656, 16
        %v659 = vadd.s32 %v656, 24
        %v660 = vadd.s32 %v656, 32
        %v661 = vadd.s32 %v656, 40
        %v662 = vadd.s32 %v656, 48
        %v663 = vadd.s32 %v656, 56
        %v664 = vadd.s32 %v656, 64
        %v665 = vadd.s32 %v656, 72
        %v666 = vadd.s32 %v656, 80
        %v667 = vadd.s32 %v656, 88
        %v668 = vadd.s32 %v656, 96
        %v669 = vadd.s32 %v656, 104
        %v670 = vadd.s32 %v656, 112
        %v671 = vadd.s32 %v656, 120
        %v672 = vlaneseq
        %v673 = vand.u32 %v672, 127
        %vm674 = vcmp.le.s32.totalorder %v673, %v656
        %vm675 = vcmp.le.s32.totalorder %v673, %v657
        %vm676 = vcmp.le.s32.totalorder %v673, %v658
        %vm677 = vcmp.le.s32.totalorder %v673, %v659
        %vm678 = vcmp.le.s32.totalorder %v673, %v660
        %vm679 = vcmp.le.s32.totalorder %v673, %v661
        %vm680 = vcmp.le.s32.totalorder %v673, %v662
        %vm681 = vcmp.le.s32.totalorder %v673, %v663
        %vm682 = vcmp.le.s32.totalorder %v673, %v664
        %vm683 = vcmp.le.s32.totalorder %v673, %v665
        %vm684 = vcmp.le.s32.totalorder %v673, %v666
        %vm685 = vcmp.le.s32.totalorder %v673, %v667
        %vm686 = vcmp.le.s32.totalorder %v673, %v668
        %vm687 = vcmp.le.s32.totalorder %v673, %v669
        %vm688 = vcmp.le.s32.totalorder %v673, %v670
        %vm689 = vcmp.le.s32.totalorder %v673, %v671
        %vm690 = vcmask 261120
        %v692 = vsel %vm690, %v631, 0
        %v695 = vsel %vm690, %v634, 0
        %v698 = vsel %vm690, %v637, 0
        %v701 = vsel %vm690, %v640, 0
        %v704 = vsel %vm690, %v643, 0
        %v707 = vsel %vm690, %v646, 0
        %v710 = vsel %vm690, %v649, 0
        %v713 = vsel %vm690, %v652, 0
        %v716 = vsel %vm690, %v632, 0
        %v719 = vsel %vm690, %v635, 0
        %v722 = vsel %vm690, %v638, 0
        %v725 = vsel %vm690, %v641, 0
        %v728 = vsel %vm690, %v644, 0
        %v731 = vsel %vm690, %v647, 0
        %v734 = vsel %vm690, %v650, 0
        %v737 = vsel %vm690, %v653, 0
        %739 = vmatprep.subr.bf16.mxu0 0
        %740 = vmatpush1.bf16.xpose.msra.mxu0 %v716
        %741 = vmatprep.subr.bf16.mxu0 0
        %742 = vmatpush1.bf16.xpose.msra.mxu0 %v719
        %743 = vmatprep.subr.bf16.mxu0 0
        %744 = vmatpush1.bf16.xpose.msra.mxu0 %v722
        %745 = vmatprep.subr.bf16.mxu0 0
        %746 = vmatpush1.bf16.xpose.msra.mxu0 %v725
        %747 = vmatprep.subr.bf16.mxu0 0
        %748 = vmatpush1.bf16.xpose.msra.mxu0 %v728
        %749 = vmatprep.subr.bf16.mxu0 0
        %750 = vmatpush1.bf16.xpose.msra.mxu0 %v731
        %751 = vmatprep.subr.bf16.mxu0 0
        %752 = vmatpush1.bf16.xpose.msra.mxu0 %v734
        %753 = vmatprep.subr.bf16.mxu0 0
        %754 = vmatpush1.bf16.xpose.msra.mxu0 %v737
        %755 = vmatprep.subr.bf16.mxu0 0
        %756 = vmatpush1.bf16.xpose.msra.mxu0 0
        %757 = vmatprep.subr.bf16.mxu0 0
        %758 = vmatpush1.bf16.xpose.msra.mxu0 0
        %759 = vmatprep.subr.bf16.mxu0 0
        %760 = vmatpush1.bf16.xpose.msra.mxu0 0
        %761 = vmatprep.subr.bf16.mxu0 0
        %762 = vmatpush1.bf16.xpose.msra.mxu0 0
        %763 = vmatprep.subr.bf16.mxu0 0
        %764 = vmatpush1.bf16.xpose.msra.mxu0 0
        %765 = vmatprep.subr.bf16.mxu0 0
        %766 = vmatpush1.bf16.xpose.msra.mxu0 0
        %767 = vmatprep.subr.bf16.mxu0 0
        %768 = vmatpush1.bf16.xpose.msra.mxu0 0
        %769 = vmatprep.subr.bf16.mxu0 0
        %770 = vmatpush1.bf16.xpose.msra.mxu0 0
        %771 = vmatprep.mubr.bf16.mxu0 0
        %772 = vmatmul.mubr.bf16.gmra.mrb[0].mxu0 %v692
        %v773 = vpop.f32.mrb[0].mxu0
        %v774 = vadd.f32 0.0, %v773
        %v775 = vpop.f32.mrb[0].mxu0
        %v776 = vpop.f32.mrb[0].mxu0
        %v777 = vadd.f32 0.0, %v776
        %v778 = vpop.f32.mrb[0].mxu0
        %779 = vmatprep.mubr.bf16.mxu0 0
        %780 = vmatmul.mubr.bf16.gmra.mrb[0].mxu0 %v695
        %v781 = vpop.f32.mrb[0].mxu0
        %v782 = vadd.f32 0.0, %v781
        %v783 = vpop.f32.mrb[0].mxu0
        %v784 = vpop.f32.mrb[0].mxu0
        %v785 = vadd.f32 0.0, %v784
        %v786 = vpop.f32.mrb[0].mxu0
        %787 = vmatprep.mubr.bf16.mxu0 0
        %788 = vmatmul.mubr.bf16.gmra.mrb[0].mxu0 %v698
        %v789 = vpop.f32.mrb[0].mxu0
        %v790 = vadd.f32 0.0, %v789
        %v791 = vpop.f32.mrb[0].mxu0
        %v792 = vpop.f32.mrb[0].mxu0
        %v793 = vadd.f32 0.0, %v792
        %v794 = vpop.f32.mrb[0].mxu0
        %795 = vmatprep.mubr.bf16.mxu0 0
        %796 = vmatmul.mubr.bf16.gmra.mrb[0].mxu0 %v701
        %v797 = vpop.f32.mrb[0].mxu0
        %v798 = vadd.f32 0.0, %v797
        %v799 = vpop.f32.mrb[0].mxu0
        %v800 = vpop.f32.mrb[0].mxu0
        %v801 = vadd.f32 0.0, %v800
        %v802 = vpop.f32.mrb[0].mxu0
        %803 = vmatprep.mubr.bf16.mxu0 0
        %804 = vmatmul.mubr.bf16.gmra.mrb[0].mxu0 %v704
        %v805 = vpop.f32.mrb[0].mxu0
        %v806 = vadd.f32 0.0, %v805
        %v807 = vpop.f32.mrb[0].mxu0
        %v808 = vpop.f32.mrb[0].mxu0
        %v809 = vadd.f32 0.0, %v808
        %v810 = vpop.f32.mrb[0].mxu0
        %811 = vmatprep.mubr.bf16.mxu0 0
        %812 = vmatmul.mubr.bf16.gmra.mrb[0].mxu0 %v707
        %v813 = vpop.f32.mrb[0].mxu0
        %v814 = vadd.f32 0.0, %v813
        %v815 = vpop.f32.mrb[0].mxu0
        %v816 = vpop.f32.mrb[0].mxu0
        %v817 = vadd.f32 0.0, %v816
        %v818 = vpop.f32.mrb[0].mxu0
        %819 = vmatprep.mubr.bf16.mxu0 0
        %820 = vmatmul.mubr.bf16.gmra.mrb[0].mxu0 %v710
        %v821 = vpop.f32.mrb[0].mxu0
        %v822 = vadd.f32 0.0, %v821
        %v823 = vpop.f32.mrb[0].mxu0
        %v824 = vpop.f32.mrb[0].mxu0
        %v825 = vadd.f32 0.0, %v824
        %v826 = vpop.f32.mrb[0].mxu0
        %827 = vmatprep.mubr.bf16.mxu0 0
        %828 = vmatmul.mubr.bf16.gmra.mrb[0].mxu0 %v713
        %v829 = vpop.f32.mrb[0].mxu0
        %v830 = vadd.f32 0.0, %v829
        %v831 = vpop.f32.mrb[0].mxu0
        %v832 = vpop.f32.mrb[0].mxu0
        %v833 = vadd.f32 0.0, %v832
        %v834 = vpop.f32.mrb[0].mxu0
        %835 = vdwg.mxu0
        %v836 = vsel %vm674, %v774, -1e+30
        %v837 = vsel %vm675, %v777, -1e+30
        %v838 = vsel %vm676, %v782, -1e+30
        %v839 = vsel %vm677, %v785, -1e+30
        %v840 = vsel %vm678, %v790, -1e+30
        %v841 = vsel %vm679, %v793, -1e+30
        %v842 = vsel %vm680, %v798, -1e+30
        %v843 = vsel %vm681, %v801, -1e+30
        %v844 = vsel %vm682, %v806, -1e+30
        %v845 = vsel %vm683, %v809, -1e+30
        %v846 = vsel %vm684, %v814, -1e+30
        %v847 = vsel %vm685, %v817, -1e+30
        %v848 = vsel %vm686, %v822, -1e+30
        %v849 = vsel %vm687, %v825, -1e+30
        %v850 = vsel %vm688, %v830, -1e+30
        %v851 = vsel %vm689, %v833, -1e+30
        %852 = vmax.xlane.f32.xlu0 %v836
        %v853 = vpop.xlane.xlu0 %852
        %854 = vmax.xlane.f32.xlu0 %v837
        %v855 = vpop.xlane.xlu0 %854
        %856 = vmax.xlane.f32.xlu0 %v838
        %v857 = vpop.xlane.xlu0 %856
        %858 = vmax.xlane.f32.xlu0 %v839
        %v859 = vpop.xlane.xlu0 %858
        %860 = vmax.xlane.f32.xlu0 %v840
        %v861 = vpop.xlane.xlu0 %860
        %862 = vmax.xlane.f32.xlu0 %v841
        %v863 = vpop.xlane.xlu0 %862
        %864 = vmax.xlane.f32.xlu0 %v842
        %v865 = vpop.xlane.xlu0 %864
        %866 = vmax.xlane.f32.xlu0 %v843
        %v867 = vpop.xlane.xlu0 %866
        %868 = vmax.xlane.f32.xlu0 %v844
        %v869 = vpop.xlane.xlu0 %868
        %870 = vmax.xlane.f32.xlu0 %v845
        %v871 = vpop.xlane.xlu0 %870
        %872 = vmax.xlane.f32.xlu0 %v846
        %v873 = vpop.xlane.xlu0 %872
        %874 = vmax.xlane.f32.xlu0 %v847
        %v875 = vpop.xlane.xlu0 %874
        %876 = vmax.xlane.f32.xlu0 %v848
        %v877 = vpop.xlane.xlu0 %876
        %878 = vmax.xlane.f32.xlu0 %v849
        %v879 = vpop.xlane.xlu0 %878
        %880 = vmax.xlane.f32.xlu0 %v850
        %v881 = vpop.xlane.xlu0 %880
        %882 = vmax.xlane.f32.xlu0 %v851
        %v883 = vpop.xlane.xlu0 %882
        %v884 = vsub.f32 %v836, %v853
        %v885 = vsub.f32 %v837, %v855
        %v886 = vsub.f32 %v838, %v857
        %v887 = vsub.f32 %v839, %v859
        %v888 = vsub.f32 %v840, %v861
        %v889 = vsub.f32 %v841, %v863
        %v890 = vsub.f32 %v842, %v865
        %v891 = vsub.f32 %v843, %v867
        %v892 = vsub.f32 %v844, %v869
        %v893 = vsub.f32 %v845, %v871
        %v894 = vsub.f32 %v846, %v873
        %v895 = vsub.f32 %v847, %v875
        %v896 = vsub.f32 %v848, %v877
        %v897 = vsub.f32 %v849, %v879
        %v898 = vsub.f32 %v850, %v881
        %v899 = vsub.f32 %v851, %v883
        %v900 = vmul.f32 %v884, 1.442695
        %v901 = vpow.pop %v900
        %v902 = vmul.f32 %v885, 1.442695
        %v903 = vpow.pop %v902
        %v904 = vmul.f32 %v886, 1.442695
        %v905 = vpow.pop %v904
        %v906 = vmul.f32 %v887, 1.442695
        %v907 = vpow.pop %v906
        %v908 = vmul.f32 %v888, 1.442695
        %v909 = vpow.pop %v908
        %v910 = vmul.f32 %v889, 1.442695
        %v911 = vpow.pop %v910
        %v912 = vmul.f32 %v890, 1.442695
        %v913 = vpow.pop %v912
        %v914 = vmul.f32 %v891, 1.442695
        %v915 = vpow.pop %v914
        %v916 = vmul.f32 %v892, 1.442695
        %v917 = vpow.pop %v916
        %v918 = vmul.f32 %v893, 1.442695
        %v919 = vpow.pop %v918
        %v920 = vmul.f32 %v894, 1.442695
        %v921 = vpow.pop %v920
        %v922 = vmul.f32 %v895, 1.442695
        %v923 = vpow.pop %v922
        %v924 = vmul.f32 %v896, 1.442695
        %v925 = vpow.pop %v924
        %v926 = vmul.f32 %v897, 1.442695
        %v927 = vpow.pop %v926
        %v928 = vmul.f32 %v898, 1.442695
        %v929 = vpow.pop %v928
        %v930 = vmul.f32 %v899, 1.442695
        %v931 = vpow.pop %v930
        %932 = vadd.xlane.f32.xlu0 %v901
        %v933 = vpop.xlane.xlu0 %932
        %934 = vadd.xlane.f32.xlu0 %v903
        %v935 = vpop.xlane.xlu0 %934
        %936 = vadd.xlane.f32.xlu0 %v905
        %v937 = vpop.xlane.xlu0 %936
        %938 = vadd.xlane.f32.xlu0 %v907
        %v939 = vpop.xlane.xlu0 %938
        %940 = vadd.xlane.f32.xlu0 %v909
        %v941 = vpop.xlane.xlu0 %940
        %942 = vadd.xlane.f32.xlu0 %v911
        %v943 = vpop.xlane.xlu0 %942
        %944 = vadd.xlane.f32.xlu0 %v913
        %v945 = vpop.xlane.xlu0 %944
        %946 = vadd.xlane.f32.xlu0 %v915
        %v947 = vpop.xlane.xlu0 %946
        %948 = vadd.xlane.f32.xlu0 %v917
        %v949 = vpop.xlane.xlu0 %948
        %950 = vadd.xlane.f32.xlu0 %v919
        %v951 = vpop.xlane.xlu0 %950
        %952 = vadd.xlane.f32.xlu0 %v921
        %v953 = vpop.xlane.xlu0 %952
        %954 = vadd.xlane.f32.xlu0 %v923
        %v955 = vpop.xlane.xlu0 %954
        %956 = vadd.xlane.f32.xlu0 %v925
        %v957 = vpop.xlane.xlu0 %956
        %958 = vadd.xlane.f32.xlu0 %v927
        %v959 = vpop.xlane.xlu0 %958
        %960 = vadd.xlane.f32.xlu0 %v929
        %v961 = vpop.xlane.xlu0 %960
        %962 = vadd.xlane.f32.xlu0 %v931
        %v963 = vpop.xlane.xlu0 %962
        %v964 = vrcp.pop %v933
        %v965 = vrcp.pop %v935
        %v966 = vrcp.pop %v937
        %v967 = vrcp.pop %v939
        %v968 = vrcp.pop %v941
        %v969 = vrcp.pop %v943
        %v970 = vrcp.pop %v945
        %v971 = vrcp.pop %v947
        %v972 = vrcp.pop %v949
        %v973 = vrcp.pop %v951
        %v974 = vrcp.pop %v953
        %v975 = vrcp.pop %v955
        %v976 = vrcp.pop %v957
        %v977 = vrcp.pop %v959
        %v978 = vrcp.pop %v961
        %v979 = vrcp.pop %v963
        %v980 = vpack.c.bf16 %v903, %v901
        %v981 = vpack.c.bf16 %v907, %v905
        %v982 = vpack.c.bf16 %v911, %v909
        %v983 = vpack.c.bf16 %v915, %v913
        %v984 = vpack.c.bf16 %v919, %v917
        %v985 = vpack.c.bf16 %v923, %v921
        %v986 = vpack.c.bf16 %v927, %v925
        %v987 = vpack.c.bf16 %v931, %v929
        %988 = vmatprep.subr.bf16.mxu0 0
        %989 = vmatpush1.bf16.msra.mxu0 %v633
        %990 = vmatprep.subr.bf16.mxu0 0
        %991 = vmatpush1.bf16.msra.mxu0 %v636
        %992 = vmatprep.subr.bf16.mxu0 0
        %993 = vmatpush1.bf16.msra.mxu0 %v639
        %994 = vmatprep.subr.bf16.mxu0 0
        %995 = vmatpush1.bf16.msra.mxu0 %v642
        %996 = vmatprep.subr.bf16.mxu0 0
        %997 = vmatpush1.bf16.msra.mxu0 %v645
        %998 = vmatprep.subr.bf16.mxu0 0
        %999 = vmatpush1.bf16.msra.mxu0 %v648
        %1000 = vmatprep.subr.bf16.mxu0 0
        %1001 = vmatpush1.bf16.msra.mxu0 %v651
        %1002 = vmatprep.subr.bf16.mxu0 0
        %1003 = vmatpush1.bf16.msra.mxu0 %v654
        %1004 = vmatprep.subr.bf16.mxu0 0
        %1005 = vmatpush1.bf16.msra.mxu0 0
        %1006 = vmatprep.subr.bf16.mxu0 0
        %1007 = vmatpush1.bf16.msra.mxu0 0
        %1008 = vmatprep.subr.bf16.mxu0 0
        %1009 = vmatpush1.bf16.msra.mxu0 0
        %1010 = vmatprep.subr.bf16.mxu0 0
        %1011 = vmatpush1.bf16.msra.mxu0 0
        %1012 = vmatprep.subr.bf16.mxu0 0
        %1013 = vmatpush1.bf16.msra.mxu0 0
        %1014 = vmatprep.subr.bf16.mxu0 0
        %1015 = vmatpush1.bf16.msra.mxu0 0
        %1016 = vmatprep.subr.bf16.mxu0 0
        %1017 = vmatpush1.bf16.msra.mxu0 0
        %1018 = vmatprep.subr.bf16.mxu0 0
        %1019 = vmatpush1.bf16.msra.mxu0 0
        %1020 = vmatprep.mubr.bf16.mxu0 0
        %1021 = vmatmul.mubr.bf16.gmra.mrb[0].mxu0 %v980
        %v1022 = vpop.f32.mrb[0].mxu0
        %v1023 = vadd.f32 0.0, %v1022
        %v1024 = vpop.f32.mrb[0].mxu0
        %v1025 = vpop.f32.mrb[0].mxu0
        %v1026 = vadd.f32 0.0, %v1025
        %v1027 = vpop.f32.mrb[0].mxu0
        %1028 = vmatprep.mubr.bf16.mxu0 0
        %1029 = vmatmul.mubr.bf16.gmra.mrb[0].mxu0 %v981
        %v1030 = vpop.f32.mrb[0].mxu0
        %v1031 = vadd.f32 0.0, %v1030
        %v1032 = vpop.f32.mrb[0].mxu0
        %v1033 = vpop.f32.mrb[0].mxu0
        %v1034 = vadd.f32 0.0, %v1033
        %v1035 = vpop.f32.mrb[0].mxu0
        %1036 = vmatprep.mubr.bf16.mxu0 0
        %1037 = vmatmul.mubr.bf16.gmra.mrb[0].mxu0 %v982
        %v1038 = vpop.f32.mrb[0].mxu0
        %v1039 = vadd.f32 0.0, %v1038
        %v1040 = vpop.f32.mrb[0].mxu0
        %v1041 = vpop.f32.mrb[0].mxu0
        %v1042 = vadd.f32 0.0, %v1041
        %v1043 = vpop.f32.mrb[0].mxu0
        %1044 = vmatprep.mubr.bf16.mxu0 0
        %1045 = vmatmul.mubr.bf16.gmra.mrb[0].mxu0 %v983
        %v1046 = vpop.f32.mrb[0].mxu0
        %v1047 = vadd.f32 0.0, %v1046
        %v1048 = vpop.f32.mrb[0].mxu0
        %v1049 = vpop.f32.mrb[0].mxu0
        %v1050 = vadd.f32 0.0, %v1049
        %v1051 = vpop.f32.mrb[0].mxu0
        %1052 = vmatprep.mubr.bf16.mxu0 0
        %1053 = vmatmul.mubr.bf16.gmra.mrb[0].mxu0 %v984
        %v1054 = vpop.f32.mrb[0].mxu0
        %v1055 = vadd.f32 0.0, %v1054
        %v1056 = vpop.f32.mrb[0].mxu0
        %v1057 = vpop.f32.mrb[0].mxu0
        %v1058 = vadd.f32 0.0, %v1057
        %v1059 = vpop.f32.mrb[0].mxu0
        %1060 = vmatprep.mubr.bf16.mxu0 0
        %1061 = vmatmul.mubr.bf16.gmra.mrb[0].mxu0 %v985
        %v1062 = vpop.f32.mrb[0].mxu0
        %v1063 = vadd.f32 0.0, %v1062
        %v1064 = vpop.f32.mrb[0].mxu0
        %v1065 = vpop.f32.mrb[0].mxu0
        %v1066 = vadd.f32 0.0, %v1065
        %v1067 = vpop.f32.mrb[0].mxu0
        %1068 = vmatprep.mubr.bf16.mxu0 0
        %1069 = vmatmul.mubr.bf16.gmra.mrb[0].mxu0 %v986
        %v1070 = vpop.f32.mrb[0].mxu0
        %v1071 = vadd.f32 0.0, %v1070
        %v1072 = vpop.f32.mrb[0].mxu0
        %v1073 = vpop.f32.mrb[0].mxu0
        %v1074 = vadd.f32 0.0, %v1073
        %v1075 = vpop.f32.mrb[0].mxu0
        %1076 = vmatprep.mubr.bf16.mxu0 0
        %1077 = vmatmul.mubr.bf16.gmra.mrb[0].mxu0 %v987
        %v1078 = vpop.f32.mrb[0].mxu0
        %v1079 = vadd.f32 0.0, %v1078
        %v1080 = vpop.f32.mrb[0].mxu0
        %v1081 = vpop.f32.mrb[0].mxu0
        %v1082 = vadd.f32 0.0, %v1081
        %v1083 = vpop.f32.mrb[0].mxu0
        %1084 = vdwg.mxu0
        %v1085 = vmul.f32 %v1023, %v964
        %v1086 = vmul.f32 %v1026, %v965
        %v1087 = vmul.f32 %v1031, %v966
        %v1088 = vmul.f32 %v1034, %v967
        %v1089 = vmul.f32 %v1039, %v968
        %v1090 = vmul.f32 %v1042, %v969
        %v1091 = vmul.f32 %v1047, %v970
        %v1092 = vmul.f32 %v1050, %v971
        %v1093 = vmul.f32 %v1055, %v972
        %v1094 = vmul.f32 %v1058, %v973
        %v1095 = vmul.f32 %v1063, %v974
        %v1096 = vmul.f32 %v1066, %v975
        %v1097 = vmul.f32 %v1071, %v976
        %v1098 = vmul.f32 %v1074, %v977
        %v1099 = vmul.f32 %v1079, %v978
        %v1100 = vmul.f32 %v1082, %v979
        %v1101 = vpack.c.bf16 %v1086, %v1085
        %v1102 = vpack.c.bf16 %v1088, %v1087
        %v1103 = vpack.c.bf16 %v1090, %v1089
        %v1104 = vpack.c.bf16 %v1092, %v1091
        %v1105 = vpack.c.bf16 %v1094, %v1093
        %v1106 = vpack.c.bf16 %v1096, %v1095
        %v1107 = vpack.c.bf16 %v1098, %v1097
        %v1108 = vpack.c.bf16 %v1100, %v1099
        %v1109 = vld [vmem:[%s2] sm:$0xf]
        %v1110 = vld [vmem:[%s2 + $0x4] sm:$0xf]
        %v1111 = vld [vmem:[%s2 + $0x8] sm:$0xf]
        %v1112 = vld [vmem:[%s2 + $0xc] sm:$0xf]
        %1121 = vrot.lane.b32.xlu0 %v631, 96
        %v1122 = vpop.permute.xlu0 %1121
        %1123 = vrot.lane.b32.xlu0 %v634, 96
        %v1124 = vpop.permute.xlu0 %1123
        %1125 = vrot.lane.b32.xlu0 %v637, 96
        %v1126 = vpop.permute.xlu0 %1125
        %1127 = vrot.lane.b32.xlu0 %v640, 96
        %v1128 = vpop.permute.xlu0 %1127
        %1129 = vrot.lane.b32.xlu0 %v643, 96
        %v1130 = vpop.permute.xlu0 %1129
        %1131 = vrot.lane.b32.xlu0 %v646, 96
        %v1132 = vpop.permute.xlu0 %1131
        %1133 = vrot.lane.b32.xlu0 %v649, 96
        %v1134 = vpop.permute.xlu0 %1133
        %1135 = vrot.lane.b32.xlu0 %v652, 96
        %v1136 = vpop.permute.xlu0 %1135
        %1145 = vrot.lane.b32.xlu0 %v632, 96
        %v1146 = vpop.permute.xlu0 %1145
        %1147 = vrot.lane.b32.xlu0 %v635, 96
        %v1148 = vpop.permute.xlu0 %1147
        %1149 = vrot.lane.b32.xlu0 %v638, 96
        %v1150 = vpop.permute.xlu0 %1149
        %1151 = vrot.lane.b32.xlu0 %v641, 96
        %v1152 = vpop.permute.xlu0 %1151
        %1153 = vrot.lane.b32.xlu0 %v644, 96
        %v1154 = vpop.permute.xlu0 %1153
        %1155 = vrot.lane.b32.xlu0 %v647, 96
        %v1156 = vpop.permute.xlu0 %1155
        %1157 = vrot.lane.b32.xlu0 %v650, 96
        %v1158 = vpop.permute.xlu0 %1157
        %1159 = vrot.lane.b32.xlu0 %v653, 96
        %v1160 = vpop.permute.xlu0 %1159
        %v1162 = vsel %vm690, %v1122, 0
        %v1165 = vsel %vm690, %v1124, 0
        %v1168 = vsel %vm690, %v1126, 0
        %v1171 = vsel %vm690, %v1128, 0
        %v1174 = vsel %vm690, %v1130, 0
        %v1177 = vsel %vm690, %v1132, 0
        %v1180 = vsel %vm690, %v1134, 0
        %v1183 = vsel %vm690, %v1136, 0
        %v1186 = vsel %vm690, %v1146, 0
        %v1189 = vsel %vm690, %v1148, 0
        %v1192 = vsel %vm690, %v1150, 0
        %v1195 = vsel %vm690, %v1152, 0
        %v1198 = vsel %vm690, %v1154, 0
        %v1201 = vsel %vm690, %v1156, 0
        %v1204 = vsel %vm690, %v1158, 0
        %v1207 = vsel %vm690, %v1160, 0
        %1209 = vmatprep.subr.bf16.mxu0 0
        %1210 = vmatpush1.bf16.xpose.msra.mxu0 %v1186
        %1211 = vmatprep.subr.bf16.mxu0 0
        %1212 = vmatpush1.bf16.xpose.msra.mxu0 %v1189
        %1213 = vmatprep.subr.bf16.mxu0 0
        %1214 = vmatpush1.bf16.xpose.msra.mxu0 %v1192
        %1215 = vmatprep.subr.bf16.mxu0 0
        %1216 = vmatpush1.bf16.xpose.msra.mxu0 %v1195
        %1217 = vmatprep.subr.bf16.mxu0 0
        %1218 = vmatpush1.bf16.xpose.msra.mxu0 %v1198
        %1219 = vmatprep.subr.bf16.mxu0 0
        %1220 = vmatpush1.bf16.xpose.msra.mxu0 %v1201
        %1221 = vmatprep.subr.bf16.mxu0 0
        %1222 = vmatpush1.bf16.xpose.msra.mxu0 %v1204
        %1223 = vmatprep.subr.bf16.mxu0 0
        %1224 = vmatpush1.bf16.xpose.msra.mxu0 %v1207
        %1225 = vmatprep.subr.bf16.mxu0 0
        %1226 = vmatpush1.bf16.xpose.msra.mxu0 0
        %1227 = vmatprep.subr.bf16.mxu0 0
        %1228 = vmatpush1.bf16.xpose.msra.mxu0 0
        %1229 = vmatprep.subr.bf16.mxu0 0
        %1230 = vmatpush1.bf16.xpose.msra.mxu0 0
        %1231 = vmatprep.subr.bf16.mxu0 0
        %1232 = vmatpush1.bf16.xpose.msra.mxu0 0
        %1233 = vmatprep.subr.bf16.mxu0 0
        %1234 = vmatpush1.bf16.xpose.msra.mxu0 0
        %1235 = vmatprep.subr.bf16.mxu0 0
        %1236 = vmatpush1.bf16.xpose.msra.mxu0 0
        %1237 = vmatprep.subr.bf16.mxu0 0
        %1238 = vmatpush1.bf16.xpose.msra.mxu0 0
        %1239 = vmatprep.subr.bf16.mxu0 0
        %1240 = vmatpush1.bf16.xpose.msra.mxu0 0
        %1241 = vmatprep.mubr.bf16.mxu0 0
        %1242 = vmatmul.mubr.bf16.gmra.mrb[0].mxu0 %v1162
        %v1243 = vpop.f32.mrb[0].mxu0
        %v1244 = vadd.f32 0.0, %v1243
        %v1245 = vpop.f32.mrb[0].mxu0
        %v1246 = vpop.f32.mrb[0].mxu0
        %v1247 = vadd.f32 0.0, %v1246
        %v1248 = vpop.f32.mrb[0].mxu0
        %1249 = vmatprep.mubr.bf16.mxu0 0
        %1250 = vmatmul.mubr.bf16.gmra.mrb[0].mxu0 %v1165
        %v1251 = vpop.f32.mrb[0].mxu0
        %v1252 = vadd.f32 0.0, %v1251
        %v1253 = vpop.f32.mrb[0].mxu0
        %v1254 = vpop.f32.mrb[0].mxu0
        %v1255 = vadd.f32 0.0, %v1254
        %v1256 = vpop.f32.mrb[0].mxu0
        %1257 = vmatprep.mubr.bf16.mxu0 0
        %1258 = vmatmul.mubr.bf16.gmra.mrb[0].mxu0 %v1168
        %v1259 = vpop.f32.mrb[0].mxu0
        %v1260 = vadd.f32 0.0, %v1259
        %v1261 = vpop.f32.mrb[0].mxu0
        %v1262 = vpop.f32.mrb[0].mxu0
        %v1263 = vadd.f32 0.0, %v1262
        %v1264 = vpop.f32.mrb[0].mxu0
        %1265 = vmatprep.mubr.bf16.mxu0 0
        %1266 = vmatmul.mubr.bf16.gmra.mrb[0].mxu0 %v1171
        %v1267 = vpop.f32.mrb[0].mxu0
        %v1268 = vadd.f32 0.0, %v1267
        %v1269 = vpop.f32.mrb[0].mxu0
        %v1270 = vpop.f32.mrb[0].mxu0
        %v1271 = vadd.f32 0.0, %v1270
        %v1272 = vpop.f32.mrb[0].mxu0
        %1273 = vmatprep.mubr.bf16.mxu0 0
        %1274 = vmatmul.mubr.bf16.gmra.mrb[0].mxu0 %v1174
        %v1275 = vpop.f32.mrb[0].mxu0
        %v1276 = vadd.f32 0.0, %v1275
        %v1277 = vpop.f32.mrb[0].mxu0
        %v1278 = vpop.f32.mrb[0].mxu0
        %v1279 = vadd.f32 0.0, %v1278
        %v1280 = vpop.f32.mrb[0].mxu0
        %1281 = vmatprep.mubr.bf16.mxu0 0
        %1282 = vmatmul.mubr.bf16.gmra.mrb[0].mxu0 %v1177
        %v1283 = vpop.f32.mrb[0].mxu0
        %v1284 = vadd.f32 0.0, %v1283
        %v1285 = vpop.f32.mrb[0].mxu0
        %v1286 = vpop.f32.mrb[0].mxu0
        %v1287 = vadd.f32 0.0, %v1286
        %v1288 = vpop.f32.mrb[0].mxu0
        %1289 = vmatprep.mubr.bf16.mxu0 0
        %1290 = vmatmul.mubr.bf16.gmra.mrb[0].mxu0 %v1180
        %v1291 = vpop.f32.mrb[0].mxu0
        %v1292 = vadd.f32 0.0, %v1291
        %v1293 = vpop.f32.mrb[0].mxu0
        %v1294 = vpop.f32.mrb[0].mxu0
        %v1295 = vadd.f32 0.0, %v1294
        %v1296 = vpop.f32.mrb[0].mxu0
        %1297 = vmatprep.mubr.bf16.mxu0 0
        %1298 = vmatmul.mubr.bf16.gmra.mrb[0].mxu0 %v1183
        %v1299 = vpop.f32.mrb[0].mxu0
        %v1300 = vadd.f32 0.0, %v1299
        %v1301 = vpop.f32.mrb[0].mxu0
        %v1302 = vpop.f32.mrb[0].mxu0
        %v1303 = vadd.f32 0.0, %v1302
        %v1304 = vpop.f32.mrb[0].mxu0
        %1305 = vdwg.mxu0
        %v1306 = vsel %vm674, %v1244, -1e+30
        %v1307 = vsel %vm675, %v1247, -1e+30
        %v1308 = vsel %vm676, %v1252, -1e+30
        %v1309 = vsel %vm677, %v1255, -1e+30
        %v1310 = vsel %vm678, %v1260, -1e+30
        %v1311 = vsel %vm679, %v1263, -1e+30
        %v1312 = vsel %vm680, %v1268, -1e+30
        %v1313 = vsel %vm681, %v1271, -1e+30
        %v1314 = vsel %vm682, %v1276, -1e+30
        %v1315 = vsel %vm683, %v1279, -1e+30
        %v1316 = vsel %vm684, %v1284, -1e+30
        %v1317 = vsel %vm685, %v1287, -1e+30
        %v1318 = vsel %vm686, %v1292, -1e+30
        %v1319 = vsel %vm687, %v1295, -1e+30
        %v1320 = vsel %vm688, %v1300, -1e+30
        %v1321 = vsel %vm689, %v1303, -1e+30
        %1322 = vmax.xlane.f32.xlu0 %v1306
        %v1323 = vpop.xlane.xlu0 %1322
        %1324 = vmax.xlane.f32.xlu0 %v1307
        %v1325 = vpop.xlane.xlu0 %1324
        %1326 = vmax.xlane.f32.xlu0 %v1308
        %v1327 = vpop.xlane.xlu0 %1326
        %1328 = vmax.xlane.f32.xlu0 %v1309
        %v1329 = vpop.xlane.xlu0 %1328
        %1330 = vmax.xlane.f32.xlu0 %v1310
        %v1331 = vpop.xlane.xlu0 %1330
        %1332 = vmax.xlane.f32.xlu0 %v1311
        %v1333 = vpop.xlane.xlu0 %1332
        %1334 = vmax.xlane.f32.xlu0 %v1312
        %v1335 = vpop.xlane.xlu0 %1334
        %1336 = vmax.xlane.f32.xlu0 %v1313
        %v1337 = vpop.xlane.xlu0 %1336
        %1338 = vmax.xlane.f32.xlu0 %v1314
        %v1339 = vpop.xlane.xlu0 %1338
        %1340 = vmax.xlane.f32.xlu0 %v1315
        %v1341 = vpop.xlane.xlu0 %1340
        %1342 = vmax.xlane.f32.xlu0 %v1316
        %v1343 = vpop.xlane.xlu0 %1342
        %1344 = vmax.xlane.f32.xlu0 %v1317
        %v1345 = vpop.xlane.xlu0 %1344
        %1346 = vmax.xlane.f32.xlu0 %v1318
        %v1347 = vpop.xlane.xlu0 %1346
        %1348 = vmax.xlane.f32.xlu0 %v1319
        %v1349 = vpop.xlane.xlu0 %1348
        %1350 = vmax.xlane.f32.xlu0 %v1320
        %v1351 = vpop.xlane.xlu0 %1350
        %1352 = vmax.xlane.f32.xlu0 %v1321
        %v1353 = vpop.xlane.xlu0 %1352
        %v1354 = vsub.f32 %v1306, %v1323
        %v1355 = vsub.f32 %v1307, %v1325
        %v1356 = vsub.f32 %v1308, %v1327
        %v1357 = vsub.f32 %v1309, %v1329
        %v1358 = vsub.f32 %v1310, %v1331
        %v1359 = vsub.f32 %v1311, %v1333
        %v1360 = vsub.f32 %v1312, %v1335
        %v1361 = vsub.f32 %v1313, %v1337
        %v1362 = vsub.f32 %v1314, %v1339
        %v1363 = vsub.f32 %v1315, %v1341
        %v1364 = vsub.f32 %v1316, %v1343
        %v1365 = vsub.f32 %v1317, %v1345
        %v1366 = vsub.f32 %v1318, %v1347
        %v1367 = vsub.f32 %v1319, %v1349
        %v1368 = vsub.f32 %v1320, %v1351
        %v1369 = vsub.f32 %v1321, %v1353
        %v1370 = vmul.f32 %v1354, 1.442695
        %v1371 = vpow.pop %v1370
        %v1372 = vmul.f32 %v1355, 1.442695
        %v1373 = vpow.pop %v1372
        %v1374 = vmul.f32 %v1356, 1.442695
        %v1375 = vpow.pop %v1374
        %v1376 = vmul.f32 %v1357, 1.442695
        %v1377 = vpow.pop %v1376
        %v1378 = vmul.f32 %v1358, 1.442695
        %v1379 = vpow.pop %v1378
        %v1380 = vmul.f32 %v1359, 1.442695
        %v1381 = vpow.pop %v1380
        %v1382 = vmul.f32 %v1360, 1.442695
        %v1383 = vpow.pop %v1382
        %v1384 = vmul.f32 %v1361, 1.442695
        %v1385 = vpow.pop %v1384
        %v1386 = vmul.f32 %v1362, 1.442695
        %v1387 = vpow.pop %v1386
        %v1388 = vmul.f32 %v1363, 1.442695
        %v1389 = vpow.pop %v1388
        %v1390 = vmul.f32 %v1364, 1.442695
        %v1391 = vpow.pop %v1390
        %v1392 = vmul.f32 %v1365, 1.442695
        %v1393 = vpow.pop %v1392
        %v1394 = vmul.f32 %v1366, 1.442695
        %v1395 = vpow.pop %v1394
        %v1396 = vmul.f32 %v1367, 1.442695
        %v1397 = vpow.pop %v1396
        %v1398 = vmul.f32 %v1368, 1.442695
        %v1399 = vpow.pop %v1398
        %v1400 = vmul.f32 %v1369, 1.442695
        %v1401 = vpow.pop %v1400
        %1402 = vadd.xlane.f32.xlu0 %v1371
        %v1403 = vpop.xlane.xlu0 %1402
        %1404 = vadd.xlane.f32.xlu0 %v1373
        %v1405 = vpop.xlane.xlu0 %1404
        %1406 = vadd.xlane.f32.xlu0 %v1375
        %v1407 = vpop.xlane.xlu0 %1406
        %1408 = vadd.xlane.f32.xlu0 %v1377
        %v1409 = vpop.xlane.xlu0 %1408
        %1410 = vadd.xlane.f32.xlu0 %v1379
        %v1411 = vpop.xlane.xlu0 %1410
        %1412 = vadd.xlane.f32.xlu0 %v1381
        %v1413 = vpop.xlane.xlu0 %1412
        %1414 = vadd.xlane.f32.xlu0 %v1383
        %v1415 = vpop.xlane.xlu0 %1414
        %1416 = vadd.xlane.f32.xlu0 %v1385
        %v1417 = vpop.xlane.xlu0 %1416
        %1418 = vadd.xlane.f32.xlu0 %v1387
        %v1419 = vpop.xlane.xlu0 %1418
        %1420 = vadd.xlane.f32.xlu0 %v1389
        %v1421 = vpop.xlane.xlu0 %1420
        %1422 = vadd.xlane.f32.xlu0 %v1391
        %v1423 = vpop.xlane.xlu0 %1422
        %1424 = vadd.xlane.f32.xlu0 %v1393
        %v1425 = vpop.xlane.xlu0 %1424
        %1426 = vadd.xlane.f32.xlu0 %v1395
        %v1427 = vpop.xlane.xlu0 %1426
        %1428 = vadd.xlane.f32.xlu0 %v1397
        %v1429 = vpop.xlane.xlu0 %1428
        %1430 = vadd.xlane.f32.xlu0 %v1399
        %v1431 = vpop.xlane.xlu0 %1430
        %1432 = vadd.xlane.f32.xlu0 %v1401
        %v1433 = vpop.xlane.xlu0 %1432
        %v1434 = vrcp.pop %v1403
        %v1435 = vrcp.pop %v1405
        %v1436 = vrcp.pop %v1407
        %v1437 = vrcp.pop %v1409
        %v1438 = vrcp.pop %v1411
        %v1439 = vrcp.pop %v1413
        %v1440 = vrcp.pop %v1415
        %v1441 = vrcp.pop %v1417
        %v1442 = vrcp.pop %v1419
        %v1443 = vrcp.pop %v1421
        %v1444 = vrcp.pop %v1423
        %v1445 = vrcp.pop %v1425
        %v1446 = vrcp.pop %v1427
        %v1447 = vrcp.pop %v1429
        %v1448 = vrcp.pop %v1431
        %v1449 = vrcp.pop %v1433
        %v1450 = vpack.c.bf16 %v1373, %v1371
        %v1451 = vpack.c.bf16 %v1377, %v1375
        %v1452 = vpack.c.bf16 %v1381, %v1379
        %v1453 = vpack.c.bf16 %v1385, %v1383
        %v1454 = vpack.c.bf16 %v1389, %v1387
        %v1455 = vpack.c.bf16 %v1393, %v1391
        %v1456 = vpack.c.bf16 %v1397, %v1395
        %v1457 = vpack.c.bf16 %v1401, %v1399
        %1466 = vrot.lane.b32.xlu0 %v633, 96
        %v1467 = vpop.permute.xlu0 %1466
        %1468 = vrot.lane.b32.xlu0 %v636, 96
        %v1469 = vpop.permute.xlu0 %1468
        %1470 = vrot.lane.b32.xlu0 %v639, 96
        %v1471 = vpop.permute.xlu0 %1470
        %1472 = vrot.lane.b32.xlu0 %v642, 96
        %v1473 = vpop.permute.xlu0 %1472
        %1474 = vrot.lane.b32.xlu0 %v645, 96
        %v1475 = vpop.permute.xlu0 %1474
        %1476 = vrot.lane.b32.xlu0 %v648, 96
        %v1477 = vpop.permute.xlu0 %1476
        %1478 = vrot.lane.b32.xlu0 %v651, 96
        %v1479 = vpop.permute.xlu0 %1478
        %1480 = vrot.lane.b32.xlu0 %v654, 96
        %v1481 = vpop.permute.xlu0 %1480
        %1490 = vmatprep.subr.bf16.mxu0 0
        %1491 = vmatpush1.bf16.msra.mxu0 %v1467
        %1492 = vmatprep.subr.bf16.mxu0 0
        %1493 = vmatpush1.bf16.msra.mxu0 %v1469
        %1494 = vmatprep.subr.bf16.mxu0 0
        %1495 = vmatpush1.bf16.msra.mxu0 %v1471
        %1496 = vmatprep.subr.bf16.mxu0 0
        %1497 = vmatpush1.bf16.msra.mxu0 %v1473
        %1498 = vmatprep.subr.bf16.mxu0 0
        %1499 = vmatpush1.bf16.msra.mxu0 %v1475
        %1500 = vmatprep.subr.bf16.mxu0 0
        %1501 = vmatpush1.bf16.msra.mxu0 %v1477
        %1502 = vmatprep.subr.bf16.mxu0 0
        %1503 = vmatpush1.bf16.msra.mxu0 %v1479
        %1504 = vmatprep.subr.bf16.mxu0 0
        %1505 = vmatpush1.bf16.msra.mxu0 %v1481
        %1506 = vmatprep.subr.bf16.mxu0 0
        %1507 = vmatpush1.bf16.msra.mxu0 0
        %1508 = vmatprep.subr.bf16.mxu0 0
        %1509 = vmatpush1.bf16.msra.mxu0 0
        %1510 = vmatprep.subr.bf16.mxu0 0
        %1511 = vmatpush1.bf16.msra.mxu0 0
        %1512 = vmatprep.subr.bf16.mxu0 0
        %1513 = vmatpush1.bf16.msra.mxu0 0
        %1514 = vmatprep.subr.bf16.mxu0 0
        %1515 = vmatpush1.bf16.msra.mxu0 0
        %1516 = vmatprep.subr.bf16.mxu0 0
        %1517 = vmatpush1.bf16.msra.mxu0 0
        %1518 = vmatprep.subr.bf16.mxu0 0
        %1519 = vmatpush1.bf16.msra.mxu0 0
        %1520 = vmatprep.subr.bf16.mxu0 0
        %1521 = vmatpush1.bf16.msra.mxu0 0
        %1522 = vmatprep.mubr.bf16.mxu0 0
        %1523 = vmatmul.mubr.bf16.gmra.mrb[0].mxu0 %v1450
        %v1524 = vpop.f32.mrb[0].mxu0
        %v1525 = vadd.f32 0.0, %v1524
        %v1526 = vpop.f32.mrb[0].mxu0
        %v1527 = vpop.f32.mrb[0].mxu0
        %v1528 = vadd.f32 0.0, %v1527
        %v1529 = vpop.f32.mrb[0].mxu0
        %1530 = vmatprep.mubr.bf16.mxu0 0
        %1531 = vmatmul.mubr.bf16.gmra.mrb[0].mxu0 %v1451
        %v1532 = vpop.f32.mrb[0].mxu0
        %v1533 = vadd.f32 0.0, %v1532
        %v1534 = vpop.f32.mrb[0].mxu0
        %v1535 = vpop.f32.mrb[0].mxu0
        %v1536 = vadd.f32 0.0, %v1535
        %v1537 = vpop.f32.mrb[0].mxu0
        %1538 = vmatprep.mubr.bf16.mxu0 0
        %1539 = vmatmul.mubr.bf16.gmra.mrb[0].mxu0 %v1452
        %v1540 = vpop.f32.mrb[0].mxu0
        %v1541 = vadd.f32 0.0, %v1540
        %v1542 = vpop.f32.mrb[0].mxu0
        %v1543 = vpop.f32.mrb[0].mxu0
        %v1544 = vadd.f32 0.0, %v1543
        %v1545 = vpop.f32.mrb[0].mxu0
        %1546 = vmatprep.mubr.bf16.mxu0 0
        %1547 = vmatmul.mubr.bf16.gmra.mrb[0].mxu0 %v1453
        %v1548 = vpop.f32.mrb[0].mxu0
        %v1549 = vadd.f32 0.0, %v1548
        %v1550 = vpop.f32.mrb[0].mxu0
        %v1551 = vpop.f32.mrb[0].mxu0
        %v1552 = vadd.f32 0.0, %v1551
        %v1553 = vpop.f32.mrb[0].mxu0
        %1554 = vmatprep.mubr.bf16.mxu0 0
        %1555 = vmatmul.mubr.bf16.gmra.mrb[0].mxu0 %v1454
        %v1556 = vpop.f32.mrb[0].mxu0
        %v1557 = vadd.f32 0.0, %v1556
        %v1558 = vpop.f32.mrb[0].mxu0
        %v1559 = vpop.f32.mrb[0].mxu0
        %v1560 = vadd.f32 0.0, %v1559
        %v1561 = vpop.f32.mrb[0].mxu0
        %1562 = vmatprep.mubr.bf16.mxu0 0
        %1563 = vmatmul.mubr.bf16.gmra.mrb[0].mxu0 %v1455
        %v1564 = vpop.f32.mrb[0].mxu0
        %v1565 = vadd.f32 0.0, %v1564
        %v1566 = vpop.f32.mrb[0].mxu0
        %v1567 = vpop.f32.mrb[0].mxu0
        %v1568 = vadd.f32 0.0, %v1567
        %v1569 = vpop.f32.mrb[0].mxu0
        %1570 = vmatprep.mubr.bf16.mxu0 0
        %1571 = vmatmul.mubr.bf16.gmra.mrb[0].mxu0 %v1456
        %v1572 = vpop.f32.mrb[0].mxu0
        %v1573 = vadd.f32 0.0, %v1572
        %v1574 = vpop.f32.mrb[0].mxu0
        %v1575 = vpop.f32.mrb[0].mxu0
        %v1576 = vadd.f32 0.0, %v1575
        %v1577 = vpop.f32.mrb[0].mxu0
        %1578 = vmatprep.mubr.bf16.mxu0 0
        %1579 = vmatmul.mubr.bf16.gmra.mrb[0].mxu0 %v1457
        %v1580 = vpop.f32.mrb[0].mxu0
        %v1581 = vadd.f32 0.0, %v1580
        %v1582 = vpop.f32.mrb[0].mxu0
        %v1583 = vpop.f32.mrb[0].mxu0
        %v1584 = vadd.f32 0.0, %v1583
        %v1585 = vpop.f32.mrb[0].mxu0
        %1586 = vdwg.mxu0
        %v1587 = vmul.f32 %v1525, %v1434
        %v1588 = vmul.f32 %v1528, %v1435
        %v1589 = vmul.f32 %v1533, %v1436
        %v1590 = vmul.f32 %v1536, %v1437
        %v1591 = vmul.f32 %v1541, %v1438
        %v1592 = vmul.f32 %v1544, %v1439
        %v1593 = vmul.f32 %v1549, %v1440
        %v1594 = vmul.f32 %v1552, %v1441
        %v1595 = vmul.f32 %v1557, %v1442
        %v1596 = vmul.f32 %v1560, %v1443
        %v1597 = vmul.f32 %v1565, %v1444
        %v1598 = vmul.f32 %v1568, %v1445
        %v1599 = vmul.f32 %v1573, %v1446
        %v1600 = vmul.f32 %v1576, %v1447
        %v1601 = vmul.f32 %v1581, %v1448
        %v1602 = vmul.f32 %v1584, %v1449
        %v1603 = vpack.c.bf16 %v1588, %v1587
        %v1604 = vpack.c.bf16 %v1590, %v1589
        %v1605 = vpack.c.bf16 %v1592, %v1591
        %v1606 = vpack.c.bf16 %v1594, %v1593
        %v1607 = vpack.c.bf16 %v1596, %v1595
        %v1608 = vpack.c.bf16 %v1598, %v1597
        %v1609 = vpack.c.bf16 %v1600, %v1599
        %v1610 = vpack.c.bf16 %v1602, %v1601
        %v1611 = vld [vmem:[%s2 + $0x10] sm:$0xf]
        %v1612 = vld [vmem:[%s2 + $0x14] sm:$0xf]
        %v1613 = vld [vmem:[%s2 + $0x18] sm:$0xf]
        %v1614 = vld [vmem:[%s2 + $0x1c] sm:$0xf]
        %v1619 = vunpack.c.l.b16 %v1611
        %v1620 = vunpack.c.l.b16 %v1612
        %v1621 = vunpack.c.l.b16 %v1613
        %v1622 = vunpack.c.l.b16 %v1614
        %v1623 = vpack.c.b16 %v1620, %v1619
        %v1624 = vpack.c.b16 %v1622, %v1621
        %v1628 = vsel %vm690, %v1603, 0
        %v1631 = vsel %vm690, %v1604, 0
        %v1634 = vsel %vm690, %v1605, 0
        %v1637 = vsel %vm690, %v1606, 0
        %v1640 = vsel %vm690, %v1607, 0
        %v1643 = vsel %vm690, %v1608, 0
        %v1646 = vsel %vm690, %v1609, 0
        %v1649 = vsel %vm690, %v1610, 0
        %1651 = vmatprep.subr.bf16.mxu0 0
        %1652 = vmatpush1.bf16.msra.mxu0 %v1623
        %1653 = vmatprep.subr.bf16.mxu0 0
        %1654 = vmatpush1.bf16.msra.mxu0 %v1624
        %1655 = vmatprep.subr.bf16.mxu0 0
        %1656 = vmatpush1.bf16.msra.mxu0 0
        %1657 = vmatprep.subr.bf16.mxu0 0
        %1658 = vmatpush1.bf16.msra.mxu0 0
        %1659 = vmatprep.subr.bf16.mxu0 0
        %1660 = vmatpush1.bf16.msra.mxu0 0
        %1661 = vmatprep.subr.bf16.mxu0 0
        %1662 = vmatpush1.bf16.msra.mxu0 0
        %1663 = vmatprep.subr.bf16.mxu0 0
        %1664 = vmatpush1.bf16.msra.mxu0 0
        %1665 = vmatprep.subr.bf16.mxu0 0
        %1666 = vmatpush1.bf16.msra.mxu0 0
        %1667 = vmatprep.subr.bf16.mxu0 0
        %1668 = vmatpush1.bf16.msra.mxu0 0
        %1669 = vmatprep.subr.bf16.mxu0 0
        %1670 = vmatpush1.bf16.msra.mxu0 0
        %1671 = vmatprep.subr.bf16.mxu0 0
        %1672 = vmatpush1.bf16.msra.mxu0 0
        %1673 = vmatprep.subr.bf16.mxu0 0
        %1674 = vmatpush1.bf16.msra.mxu0 0
        %1675 = vmatprep.subr.bf16.mxu0 0
        %1676 = vmatpush1.bf16.msra.mxu0 0
        %1677 = vmatprep.subr.bf16.mxu0 0
        %1678 = vmatpush1.bf16.msra.mxu0 0
        %1679 = vmatprep.subr.bf16.mxu0 0
        %1680 = vmatpush1.bf16.msra.mxu0 0
        %1681 = vmatprep.subr.bf16.mxu0 0
        %1682 = vmatpush1.bf16.msra.mxu0 0
        %1683 = vmatprep.mubr.bf16.mxu0 0
        %1684 = vmatmul.mubr.bf16.gmra.mrb[0].mxu0 %v1628
        %v1685 = vpop.f32.mrb[0].mxu0
        %v1686 = vadd.f32 0.0, %v1685
        %v1687 = vpop.f32.mrb[0].mxu0
        %v1688 = vpop.f32.mrb[0].mxu0
        %v1689 = vadd.f32 0.0, %v1688
        %v1690 = vpop.f32.mrb[0].mxu0
        %1691 = vmatprep.mubr.bf16.mxu0 0
        %1692 = vmatmul.mubr.bf16.gmra.mrb[0].mxu0 %v1631
        %v1693 = vpop.f32.mrb[0].mxu0
        %v1694 = vadd.f32 0.0, %v1693
        %v1695 = vpop.f32.mrb[0].mxu0
        %v1696 = vpop.f32.mrb[0].mxu0
        %v1697 = vadd.f32 0.0, %v1696
        %v1698 = vpop.f32.mrb[0].mxu0
        %1699 = vmatprep.mubr.bf16.mxu0 0
        %1700 = vmatmul.mubr.bf16.gmra.mrb[0].mxu0 %v1634
        %v1701 = vpop.f32.mrb[0].mxu0
        %v1702 = vadd.f32 0.0, %v1701
        %v1703 = vpop.f32.mrb[0].mxu0
        %v1704 = vpop.f32.mrb[0].mxu0
        %v1705 = vadd.f32 0.0, %v1704
        %v1706 = vpop.f32.mrb[0].mxu0
        %1707 = vmatprep.mubr.bf16.mxu0 0
        %1708 = vmatmul.mubr.bf16.gmra.mrb[0].mxu0 %v1637
        %v1709 = vpop.f32.mrb[0].mxu0
        %v1710 = vadd.f32 0.0, %v1709
        %v1711 = vpop.f32.mrb[0].mxu0
        %v1712 = vpop.f32.mrb[0].mxu0
        %v1713 = vadd.f32 0.0, %v1712
        %v1714 = vpop.f32.mrb[0].mxu0
        %1715 = vmatprep.mubr.bf16.mxu0 0
        %1716 = vmatmul.mubr.bf16.gmra.mrb[0].mxu0 %v1640
        %v1717 = vpop.f32.mrb[0].mxu0
        %v1718 = vadd.f32 0.0, %v1717
        %v1719 = vpop.f32.mrb[0].mxu0
        %v1720 = vpop.f32.mrb[0].mxu0
        %v1721 = vadd.f32 0.0, %v1720
        %v1722 = vpop.f32.mrb[0].mxu0
        %1723 = vmatprep.mubr.bf16.mxu0 0
        %1724 = vmatmul.mubr.bf16.gmra.mrb[0].mxu0 %v1643
        %v1725 = vpop.f32.mrb[0].mxu0
        %v1726 = vadd.f32 0.0, %v1725
        %v1727 = vpop.f32.mrb[0].mxu0
        %v1728 = vpop.f32.mrb[0].mxu0
        %v1729 = vadd.f32 0.0, %v1728
        %v1730 = vpop.f32.mrb[0].mxu0
        %1731 = vmatprep.mubr.bf16.mxu0 0
        %1732 = vmatmul.mubr.bf16.gmra.mrb[0].mxu0 %v1646
        %v1733 = vpop.f32.mrb[0].mxu0
        %v1734 = vadd.f32 0.0, %v1733
        %v1735 = vpop.f32.mrb[0].mxu0
        %v1736 = vpop.f32.mrb[0].mxu0
        %v1737 = vadd.f32 0.0, %v1736
        %v1738 = vpop.f32.mrb[0].mxu0
        %1739 = vmatprep.mubr.bf16.mxu0 0
        %1740 = vmatmul.mubr.bf16.gmra.mrb[0].mxu0 %v1649
        %v1741 = vpop.f32.mrb[0].mxu0
        %v1742 = vadd.f32 0.0, %v1741
        %v1743 = vpop.f32.mrb[0].mxu0
        %v1744 = vpop.f32.mrb[0].mxu0
        %v1745 = vadd.f32 0.0, %v1744
        %v1746 = vpop.f32.mrb[0].mxu0
        %1747 = vdwg.mxu0
        %v1752 = vunpack.c.l.b16 %v1109
        %v1753 = vunpack.c.l.b16 %v1110
        %v1754 = vunpack.c.l.b16 %v1111
        %v1755 = vunpack.c.l.b16 %v1112
        %v1756 = vpack.c.b16 %v1753, %v1752
        %v1757 = vpack.c.b16 %v1755, %v1754
        %v1761 = vsel %vm690, %v1101, 0
        %v1764 = vsel %vm690, %v1102, 0
        %v1767 = vsel %vm690, %v1103, 0
        %v1770 = vsel %vm690, %v1104, 0
        %v1773 = vsel %vm690, %v1105, 0
        %v1776 = vsel %vm690, %v1106, 0
        %v1779 = vsel %vm690, %v1107, 0
        %v1782 = vsel %vm690, %v1108, 0
        %1784 = vmatprep.subr.bf16.mxu0 0
        %1785 = vmatpush1.bf16.msra.mxu0 %v1756
        %1786 = vmatprep.subr.bf16.mxu0 0
        %1787 = vmatpush1.bf16.msra.mxu0 %v1757
        %1788 = vmatprep.subr.bf16.mxu0 0
        %1789 = vmatpush1.bf16.msra.mxu0 0
        %1790 = vmatprep.subr.bf16.mxu0 0
        %1791 = vmatpush1.bf16.msra.mxu0 0
        %1792 = vmatprep.subr.bf16.mxu0 0
        %1793 = vmatpush1.bf16.msra.mxu0 0
        %1794 = vmatprep.subr.bf16.mxu0 0
        %1795 = vmatpush1.bf16.msra.mxu0 0
        %1796 = vmatprep.subr.bf16.mxu0 0
        %1797 = vmatpush1.bf16.msra.mxu0 0
        %1798 = vmatprep.subr.bf16.mxu0 0
        %1799 = vmatpush1.bf16.msra.mxu0 0
        %1800 = vmatprep.subr.bf16.mxu0 0
        %1801 = vmatpush1.bf16.msra.mxu0 0
        %1802 = vmatprep.subr.bf16.mxu0 0
        %1803 = vmatpush1.bf16.msra.mxu0 0
        %1804 = vmatprep.subr.bf16.mxu0 0
        %1805 = vmatpush1.bf16.msra.mxu0 0
        %1806 = vmatprep.subr.bf16.mxu0 0
        %1807 = vmatpush1.bf16.msra.mxu0 0
        %1808 = vmatprep.subr.bf16.mxu0 0
        %1809 = vmatpush1.bf16.msra.mxu0 0
        %1810 = vmatprep.subr.bf16.mxu0 0
        %1811 = vmatpush1.bf16.msra.mxu0 0
        %1812 = vmatprep.subr.bf16.mxu0 0
        %1813 = vmatpush1.bf16.msra.mxu0 0
        %1814 = vmatprep.subr.bf16.mxu0 0
        %1815 = vmatpush1.bf16.msra.mxu0 0
        %1816 = vmatprep.mubr.bf16.mxu0 0
        %1817 = vmatmul.mubr.bf16.gmra.mrb[0].mxu0 %v1761
        %v1818 = vpop.f32.mrb[0].mxu0
        %v1819 = vadd.f32 %v1686, %v1818
        %v1820 = vpop.f32.mrb[0].mxu0
        %v1821 = vpop.f32.mrb[0].mxu0
        %v1822 = vadd.f32 %v1689, %v1821
        %v1823 = vpop.f32.mrb[0].mxu0
        %1824 = vmatprep.mubr.bf16.mxu0 0
        %1825 = vmatmul.mubr.bf16.gmra.mrb[0].mxu0 %v1764
        %v1826 = vpop.f32.mrb[0].mxu0
        %v1827 = vadd.f32 %v1694, %v1826
        %v1828 = vpop.f32.mrb[0].mxu0
        %v1829 = vpop.f32.mrb[0].mxu0
        %v1830 = vadd.f32 %v1697, %v1829
        %v1831 = vpop.f32.mrb[0].mxu0
        %1832 = vmatprep.mubr.bf16.mxu0 0
        %1833 = vmatmul.mubr.bf16.gmra.mrb[0].mxu0 %v1767
        %v1834 = vpop.f32.mrb[0].mxu0
        %v1835 = vadd.f32 %v1702, %v1834
        %v1836 = vpop.f32.mrb[0].mxu0
        %v1837 = vpop.f32.mrb[0].mxu0
        %v1838 = vadd.f32 %v1705, %v1837
        %v1839 = vpop.f32.mrb[0].mxu0
        %1840 = vmatprep.mubr.bf16.mxu0 0
        %1841 = vmatmul.mubr.bf16.gmra.mrb[0].mxu0 %v1770
        %v1842 = vpop.f32.mrb[0].mxu0
        %v1843 = vadd.f32 %v1710, %v1842
        %v1844 = vpop.f32.mrb[0].mxu0
        %v1845 = vpop.f32.mrb[0].mxu0
        %v1846 = vadd.f32 %v1713, %v1845
        %v1847 = vpop.f32.mrb[0].mxu0
        %1848 = vmatprep.mubr.bf16.mxu0 0
        %1849 = vmatmul.mubr.bf16.gmra.mrb[0].mxu0 %v1773
        %v1850 = vpop.f32.mrb[0].mxu0
        %v1851 = vadd.f32 %v1718, %v1850
        %v1852 = vpop.f32.mrb[0].mxu0
        %v1853 = vpop.f32.mrb[0].mxu0
        %v1854 = vadd.f32 %v1721, %v1853
        %v1855 = vpop.f32.mrb[0].mxu0
        %1856 = vmatprep.mubr.bf16.mxu0 0
        %1857 = vmatmul.mubr.bf16.gmra.mrb[0].mxu0 %v1776
        %v1858 = vpop.f32.mrb[0].mxu0
        %v1859 = vadd.f32 %v1726, %v1858
        %v1860 = vpop.f32.mrb[0].mxu0
        %v1861 = vpop.f32.mrb[0].mxu0
        %v1862 = vadd.f32 %v1729, %v1861
        %v1863 = vpop.f32.mrb[0].mxu0
        %1864 = vmatprep.mubr.bf16.mxu0 0
        %1865 = vmatmul.mubr.bf16.gmra.mrb[0].mxu0 %v1779
        %v1866 = vpop.f32.mrb[0].mxu0
        %v1867 = vadd.f32 %v1734, %v1866
        %v1868 = vpop.f32.mrb[0].mxu0
        %v1869 = vpop.f32.mrb[0].mxu0
        %v1870 = vadd.f32 %v1737, %v1869
        %v1871 = vpop.f32.mrb[0].mxu0
        %1872 = vmatprep.mubr.bf16.mxu0 0
        %1873 = vmatmul.mubr.bf16.gmra.mrb[0].mxu0 %v1782
        %v1874 = vpop.f32.mrb[0].mxu0
        %v1875 = vadd.f32 %v1742, %v1874
        %v1876 = vpop.f32.mrb[0].mxu0
        %v1877 = vpop.f32.mrb[0].mxu0
        %v1878 = vadd.f32 %v1745, %v1877
        %v1879 = vpop.f32.mrb[0].mxu0
        %1880 = vdwg.mxu0
        %1881 = vrot.lane.b32.xlu0 %v631, 64
        %v1882 = vpop.permute.xlu0 %1881
        %1883 = vrot.lane.b32.xlu0 %v634, 64
        %v1884 = vpop.permute.xlu0 %1883
        %1885 = vrot.lane.b32.xlu0 %v637, 64
        %v1886 = vpop.permute.xlu0 %1885
        %1887 = vrot.lane.b32.xlu0 %v640, 64
        %v1888 = vpop.permute.xlu0 %1887
        %1889 = vrot.lane.b32.xlu0 %v643, 64
        %v1890 = vpop.permute.xlu0 %1889
        %1891 = vrot.lane.b32.xlu0 %v646, 64
        %v1892 = vpop.permute.xlu0 %1891
        %1893 = vrot.lane.b32.xlu0 %v649, 64
        %v1894 = vpop.permute.xlu0 %1893
        %1895 = vrot.lane.b32.xlu0 %v652, 64
        %v1896 = vpop.permute.xlu0 %1895
        %1897 = vrot.lane.b32.xlu0 %v632, 64
        %v1898 = vpop.permute.xlu0 %1897
        %1899 = vrot.lane.b32.xlu0 %v635, 64
        %v1900 = vpop.permute.xlu0 %1899
        %1901 = vrot.lane.b32.xlu0 %v638, 64
        %v1902 = vpop.permute.xlu0 %1901
        %1903 = vrot.lane.b32.xlu0 %v641, 64
        %v1904 = vpop.permute.xlu0 %1903
        %1905 = vrot.lane.b32.xlu0 %v644, 64
        %v1906 = vpop.permute.xlu0 %1905
        %1907 = vrot.lane.b32.xlu0 %v647, 64
        %v1908 = vpop.permute.xlu0 %1907
        %1909 = vrot.lane.b32.xlu0 %v650, 64
        %v1910 = vpop.permute.xlu0 %1909
        %1911 = vrot.lane.b32.xlu0 %v653, 64
        %v1912 = vpop.permute.xlu0 %1911
        %v1914 = vsel %vm690, %v1882, 0
        %v1917 = vsel %vm690, %v1884, 0
        %v1920 = vsel %vm690, %v1886, 0
        %v1923 = vsel %vm690, %v1888, 0
        %v1926 = vsel %vm690, %v1890, 0
        %v1929 = vsel %vm690, %v1892, 0
        %v1932 = vsel %vm690, %v1894, 0
        %v1935 = vsel %vm690, %v1896, 0
        %v1938 = vsel %vm690, %v1898, 0
        %v1941 = vsel %vm690, %v1900, 0
        %v1944 = vsel %vm690, %v1902, 0
        %v1947 = vsel %vm690, %v1904, 0
        %v1950 = vsel %vm690, %v1906, 0
        %v1953 = vsel %vm690, %v1908, 0
        %v1956 = vsel %vm690, %v1910, 0
        %v1959 = vsel %vm690, %v1912, 0
        %1961 = vmatprep.subr.bf16.mxu0 0
        %1962 = vmatpush1.bf16.xpose.msra.mxu0 %v1938
        %1963 = vmatprep.subr.bf16.mxu0 0
        %1964 = vmatpush1.bf16.xpose.msra.mxu0 %v1941
        %1965 = vmatprep.subr.bf16.mxu0 0
        %1966 = vmatpush1.bf16.xpose.msra.mxu0 %v1944
        %1967 = vmatprep.subr.bf16.mxu0 0
        %1968 = vmatpush1.bf16.xpose.msra.mxu0 %v1947
        %1969 = vmatprep.subr.bf16.mxu0 0
        %1970 = vmatpush1.bf16.xpose.msra.mxu0 %v1950
        %1971 = vmatprep.subr.bf16.mxu0 0
        %1972 = vmatpush1.bf16.xpose.msra.mxu0 %v1953
        %1973 = vmatprep.subr.bf16.mxu0 0
        %1974 = vmatpush1.bf16.xpose.msra.mxu0 %v1956
        %1975 = vmatprep.subr.bf16.mxu0 0
        %1976 = vmatpush1.bf16.xpose.msra.mxu0 %v1959
        %1977 = vmatprep.subr.bf16.mxu0 0
        %1978 = vmatpush1.bf16.xpose.msra.mxu0 0
        %1979 = vmatprep.subr.bf16.mxu0 0
        %1980 = vmatpush1.bf16.xpose.msra.mxu0 0
        %1981 = vmatprep.subr.bf16.mxu0 0
        %1982 = vmatpush1.bf16.xpose.msra.mxu0 0
        %1983 = vmatprep.subr.bf16.mxu0 0
        %1984 = vmatpush1.bf16.xpose.msra.mxu0 0
        %1985 = vmatprep.subr.bf16.mxu0 0
        %1986 = vmatpush1.bf16.xpose.msra.mxu0 0
        %1987 = vmatprep.subr.bf16.mxu0 0
        %1988 = vmatpush1.bf16.xpose.msra.mxu0 0
        %1989 = vmatprep.subr.bf16.mxu0 0
        %1990 = vmatpush1.bf16.xpose.msra.mxu0 0
        %1991 = vmatprep.subr.bf16.mxu0 0
        %1992 = vmatpush1.bf16.xpose.msra.mxu0 0
        %1993 = vmatprep.mubr.bf16.mxu0 0
        %1994 = vmatmul.mubr.bf16.gmra.mrb[0].mxu0 %v1914
        %v1995 = vpop.f32.mrb[0].mxu0
        %v1996 = vadd.f32 0.0, %v1995
        %v1997 = vpop.f32.mrb[0].mxu0
        %v1998 = vpop.f32.mrb[0].mxu0
        %v1999 = vadd.f32 0.0, %v1998
        %v2000 = vpop.f32.mrb[0].mxu0
        %2001 = vmatprep.mubr.bf16.mxu0 0
        %2002 = vmatmul.mubr.bf16.gmra.mrb[0].mxu0 %v1917
        %v2003 = vpop.f32.mrb[0].mxu0
        %v2004 = vadd.f32 0.0, %v2003
        %v2005 = vpop.f32.mrb[0].mxu0
        %v2006 = vpop.f32.mrb[0].mxu0
        %v2007 = vadd.f32 0.0, %v2006
        %v2008 = vpop.f32.mrb[0].mxu0
        %2009 = vmatprep.mubr.bf16.mxu0 0
        %2010 = vmatmul.mubr.bf16.gmra.mrb[0].mxu0 %v1920
        %v2011 = vpop.f32.mrb[0].mxu0
        %v2012 = vadd.f32 0.0, %v2011
        %v2013 = vpop.f32.mrb[0].mxu0
        %v2014 = vpop.f32.mrb[0].mxu0
        %v2015 = vadd.f32 0.0, %v2014
        %v2016 = vpop.f32.mrb[0].mxu0
        %2017 = vmatprep.mubr.bf16.mxu0 0
        %2018 = vmatmul.mubr.bf16.gmra.mrb[0].mxu0 %v1923
        %v2019 = vpop.f32.mrb[0].mxu0
        %v2020 = vadd.f32 0.0, %v2019
        %v2021 = vpop.f32.mrb[0].mxu0
        %v2022 = vpop.f32.mrb[0].mxu0
        %v2023 = vadd.f32 0.0, %v2022
        %v2024 = vpop.f32.mrb[0].mxu0
        %2025 = vmatprep.mubr.bf16.mxu0 0
        %2026 = vmatmul.mubr.bf16.gmra.mrb[0].mxu0 %v1926
        %v2027 = vpop.f32.mrb[0].mxu0
        %v2028 = vadd.f32 0.0, %v2027
        %v2029 = vpop.f32.mrb[0].mxu0
        %v2030 = vpop.f32.mrb[0].mxu0
        %v2031 = vadd.f32 0.0, %v2030
        %v2032 = vpop.f32.mrb[0].mxu0
        %2033 = vmatprep.mubr.bf16.mxu0 0
        %2034 = vmatmul.mubr.bf16.gmra.mrb[0].mxu0 %v1929
        %v2035 = vpop.f32.mrb[0].mxu0
        %v2036 = vadd.f32 0.0, %v2035
        %v2037 = vpop.f32.mrb[0].mxu0
        %v2038 = vpop.f32.mrb[0].mxu0
        %v2039 = vadd.f32 0.0, %v2038
        %v2040 = vpop.f32.mrb[0].mxu0
        %2041 = vmatprep.mubr.bf16.mxu0 0
        %2042 = vmatmul.mubr.bf16.gmra.mrb[0].mxu0 %v1932
        %v2043 = vpop.f32.mrb[0].mxu0
        %v2044 = vadd.f32 0.0, %v2043
        %v2045 = vpop.f32.mrb[0].mxu0
        %v2046 = vpop.f32.mrb[0].mxu0
        %v2047 = vadd.f32 0.0, %v2046
        %v2048 = vpop.f32.mrb[0].mxu0
        %2049 = vmatprep.mubr.bf16.mxu0 0
        %2050 = vmatmul.mubr.bf16.gmra.mrb[0].mxu0 %v1935
        %v2051 = vpop.f32.mrb[0].mxu0
        %v2052 = vadd.f32 0.0, %v2051
        %v2053 = vpop.f32.mrb[0].mxu0
        %v2054 = vpop.f32.mrb[0].mxu0
        %v2055 = vadd.f32 0.0, %v2054
        %v2056 = vpop.f32.mrb[0].mxu0
        %2057 = vdwg.mxu0
        %v2058 = vsel %vm674, %v1996, -1e+30
        %v2059 = vsel %vm675, %v1999, -1e+30
        %v2060 = vsel %vm676, %v2004, -1e+30
        %v2061 = vsel %vm677, %v2007, -1e+30
        %v2062 = vsel %vm678, %v2012, -1e+30
        %v2063 = vsel %vm679, %v2015, -1e+30
        %v2064 = vsel %vm680, %v2020, -1e+30
        %v2065 = vsel %vm681, %v2023, -1e+30
        %v2066 = vsel %vm682, %v2028, -1e+30
        %v2067 = vsel %vm683, %v2031, -1e+30
        %v2068 = vsel %vm684, %v2036, -1e+30
        %v2069 = vsel %vm685, %v2039, -1e+30
        %v2070 = vsel %vm686, %v2044, -1e+30
        %v2071 = vsel %vm687, %v2047, -1e+30
        %v2072 = vsel %vm688, %v2052, -1e+30
        %v2073 = vsel %vm689, %v2055, -1e+30
        %2074 = vmax.xlane.f32.xlu0 %v2058
        %v2075 = vpop.xlane.xlu0 %2074
        %2076 = vmax.xlane.f32.xlu0 %v2059
        %v2077 = vpop.xlane.xlu0 %2076
        %2078 = vmax.xlane.f32.xlu0 %v2060
        %v2079 = vpop.xlane.xlu0 %2078
        %2080 = vmax.xlane.f32.xlu0 %v2061
        %v2081 = vpop.xlane.xlu0 %2080
        %2082 = vmax.xlane.f32.xlu0 %v2062
        %v2083 = vpop.xlane.xlu0 %2082
        %2084 = vmax.xlane.f32.xlu0 %v2063
        %v2085 = vpop.xlane.xlu0 %2084
        %2086 = vmax.xlane.f32.xlu0 %v2064
        %v2087 = vpop.xlane.xlu0 %2086
        %2088 = vmax.xlane.f32.xlu0 %v2065
        %v2089 = vpop.xlane.xlu0 %2088
        %2090 = vmax.xlane.f32.xlu0 %v2066
        %v2091 = vpop.xlane.xlu0 %2090
        %2092 = vmax.xlane.f32.xlu0 %v2067
        %v2093 = vpop.xlane.xlu0 %2092
        %2094 = vmax.xlane.f32.xlu0 %v2068
        %v2095 = vpop.xlane.xlu0 %2094
        %2096 = vmax.xlane.f32.xlu0 %v2069
        %v2097 = vpop.xlane.xlu0 %2096
        %2098 = vmax.xlane.f32.xlu0 %v2070
        %v2099 = vpop.xlane.xlu0 %2098
        %2100 = vmax.xlane.f32.xlu0 %v2071
        %v2101 = vpop.xlane.xlu0 %2100
        %2102 = vmax.xlane.f32.xlu0 %v2072
        %v2103 = vpop.xlane.xlu0 %2102
        %2104 = vmax.xlane.f32.xlu0 %v2073
        %v2105 = vpop.xlane.xlu0 %2104
        %v2106 = vsub.f32 %v2058, %v2075
        %v2107 = vsub.f32 %v2059, %v2077
        %v2108 = vsub.f32 %v2060, %v2079
        %v2109 = vsub.f32 %v2061, %v2081
        %v2110 = vsub.f32 %v2062, %v2083
        %v2111 = vsub.f32 %v2063, %v2085
        %v2112 = vsub.f32 %v2064, %v2087
        %v2113 = vsub.f32 %v2065, %v2089
        %v2114 = vsub.f32 %v2066, %v2091
        %v2115 = vsub.f32 %v2067, %v2093
        %v2116 = vsub.f32 %v2068, %v2095
        %v2117 = vsub.f32 %v2069, %v2097
        %v2118 = vsub.f32 %v2070, %v2099
        %v2119 = vsub.f32 %v2071, %v2101
        %v2120 = vsub.f32 %v2072, %v2103
        %v2121 = vsub.f32 %v2073, %v2105
        %v2122 = vmul.f32 %v2106, 1.442695
        %v2123 = vpow.pop %v2122
        %v2124 = vmul.f32 %v2107, 1.442695
        %v2125 = vpow.pop %v2124
        %v2126 = vmul.f32 %v2108, 1.442695
        %v2127 = vpow.pop %v2126
        %v2128 = vmul.f32 %v2109, 1.442695
        %v2129 = vpow.pop %v2128
        %v2130 = vmul.f32 %v2110, 1.442695
        %v2131 = vpow.pop %v2130
        %v2132 = vmul.f32 %v2111, 1.442695
        %v2133 = vpow.pop %v2132
        %v2134 = vmul.f32 %v2112, 1.442695
        %v2135 = vpow.pop %v2134
        %v2136 = vmul.f32 %v2113, 1.442695
        %v2137 = vpow.pop %v2136
        %v2138 = vmul.f32 %v2114, 1.442695
        %v2139 = vpow.pop %v2138
        %v2140 = vmul.f32 %v2115, 1.442695
        %v2141 = vpow.pop %v2140
        %v2142 = vmul.f32 %v2116, 1.442695
        %v2143 = vpow.pop %v2142
        %v2144 = vmul.f32 %v2117, 1.442695
        %v2145 = vpow.pop %v2144
        %v2146 = vmul.f32 %v2118, 1.442695
        %v2147 = vpow.pop %v2146
        %v2148 = vmul.f32 %v2119, 1.442695
        %v2149 = vpow.pop %v2148
        %v2150 = vmul.f32 %v2120, 1.442695
        %v2151 = vpow.pop %v2150
        %v2152 = vmul.f32 %v2121, 1.442695
        %v2153 = vpow.pop %v2152
        %2154 = vadd.xlane.f32.xlu0 %v2123
        %v2155 = vpop.xlane.xlu0 %2154
        %2156 = vadd.xlane.f32.xlu0 %v2125
        %v2157 = vpop.xlane.xlu0 %2156
        %2158 = vadd.xlane.f32.xlu0 %v2127
        %v2159 = vpop.xlane.xlu0 %2158
        %2160 = vadd.xlane.f32.xlu0 %v2129
        %v2161 = vpop.xlane.xlu0 %2160
        %2162 = vadd.xlane.f32.xlu0 %v2131
        %v2163 = vpop.xlane.xlu0 %2162
        %2164 = vadd.xlane.f32.xlu0 %v2133
        %v2165 = vpop.xlane.xlu0 %2164
        %2166 = vadd.xlane.f32.xlu0 %v2135
        %v2167 = vpop.xlane.xlu0 %2166
        %2168 = vadd.xlane.f32.xlu0 %v2137
        %v2169 = vpop.xlane.xlu0 %2168
        %2170 = vadd.xlane.f32.xlu0 %v2139
        %v2171 = vpop.xlane.xlu0 %2170
        %2172 = vadd.xlane.f32.xlu0 %v2141
        %v2173 = vpop.xlane.xlu0 %2172
        %2174 = vadd.xlane.f32.xlu0 %v2143
        %v2175 = vpop.xlane.xlu0 %2174
        %2176 = vadd.xlane.f32.xlu0 %v2145
        %v2177 = vpop.xlane.xlu0 %2176
        %2178 = vadd.xlane.f32.xlu0 %v2147
        %v2179 = vpop.xlane.xlu0 %2178
        %2180 = vadd.xlane.f32.xlu0 %v2149
        %v2181 = vpop.xlane.xlu0 %2180
        %2182 = vadd.xlane.f32.xlu0 %v2151
        %v2183 = vpop.xlane.xlu0 %2182
        %2184 = vadd.xlane.f32.xlu0 %v2153
        %v2185 = vpop.xlane.xlu0 %2184
        %v2186 = vrcp.pop %v2155
        %v2187 = vrcp.pop %v2157
        %v2188 = vrcp.pop %v2159
        %v2189 = vrcp.pop %v2161
        %v2190 = vrcp.pop %v2163
        %v2191 = vrcp.pop %v2165
        %v2192 = vrcp.pop %v2167
        %v2193 = vrcp.pop %v2169
        %v2194 = vrcp.pop %v2171
        %v2195 = vrcp.pop %v2173
        %v2196 = vrcp.pop %v2175
        %v2197 = vrcp.pop %v2177
        %v2198 = vrcp.pop %v2179
        %v2199 = vrcp.pop %v2181
        %v2200 = vrcp.pop %v2183
        %v2201 = vrcp.pop %v2185
        %v2202 = vpack.c.bf16 %v2125, %v2123
        %v2203 = vpack.c.bf16 %v2129, %v2127
        %v2204 = vpack.c.bf16 %v2133, %v2131
        %v2205 = vpack.c.bf16 %v2137, %v2135
        %v2206 = vpack.c.bf16 %v2141, %v2139
        %v2207 = vpack.c.bf16 %v2145, %v2143
        %v2208 = vpack.c.bf16 %v2149, %v2147
        %v2209 = vpack.c.bf16 %v2153, %v2151
        %2210 = vrot.lane.b32.xlu0 %v633, 64
        %v2211 = vpop.permute.xlu0 %2210
        %2212 = vrot.lane.b32.xlu0 %v636, 64
        %v2213 = vpop.permute.xlu0 %2212
        %2214 = vrot.lane.b32.xlu0 %v639, 64
        %v2215 = vpop.permute.xlu0 %2214
        %2216 = vrot.lane.b32.xlu0 %v642, 64
        %v2217 = vpop.permute.xlu0 %2216
        %2218 = vrot.lane.b32.xlu0 %v645, 64
        %v2219 = vpop.permute.xlu0 %2218
        %2220 = vrot.lane.b32.xlu0 %v648, 64
        %v2221 = vpop.permute.xlu0 %2220
        %2222 = vrot.lane.b32.xlu0 %v651, 64
        %v2223 = vpop.permute.xlu0 %2222
        %2224 = vrot.lane.b32.xlu0 %v654, 64
        %v2225 = vpop.permute.xlu0 %2224
        %2234 = vmatprep.subr.bf16.mxu0 0
        %2235 = vmatpush1.bf16.msra.mxu0 %v2211
        %2236 = vmatprep.subr.bf16.mxu0 0
        %2237 = vmatpush1.bf16.msra.mxu0 %v2213
        %2238 = vmatprep.subr.bf16.mxu0 0
        %2239 = vmatpush1.bf16.msra.mxu0 %v2215
        %2240 = vmatprep.subr.bf16.mxu0 0
        %2241 = vmatpush1.bf16.msra.mxu0 %v2217
        %2242 = vmatprep.subr.bf16.mxu0 0
        %2243 = vmatpush1.bf16.msra.mxu0 %v2219
        %2244 = vmatprep.subr.bf16.mxu0 0
        %2245 = vmatpush1.bf16.msra.mxu0 %v2221
        %2246 = vmatprep.subr.bf16.mxu0 0
        %2247 = vmatpush1.bf16.msra.mxu0 %v2223
        %2248 = vmatprep.subr.bf16.mxu0 0
        %2249 = vmatpush1.bf16.msra.mxu0 %v2225
        %2250 = vmatprep.subr.bf16.mxu0 0
        %2251 = vmatpush1.bf16.msra.mxu0 0
        %2252 = vmatprep.subr.bf16.mxu0 0
        %2253 = vmatpush1.bf16.msra.mxu0 0
        %2254 = vmatprep.subr.bf16.mxu0 0
        %2255 = vmatpush1.bf16.msra.mxu0 0
        %2256 = vmatprep.subr.bf16.mxu0 0
        %2257 = vmatpush1.bf16.msra.mxu0 0
        %2258 = vmatprep.subr.bf16.mxu0 0
        %2259 = vmatpush1.bf16.msra.mxu0 0
        %2260 = vmatprep.subr.bf16.mxu0 0
        %2261 = vmatpush1.bf16.msra.mxu0 0
        %2262 = vmatprep.subr.bf16.mxu0 0
        %2263 = vmatpush1.bf16.msra.mxu0 0
        %2264 = vmatprep.subr.bf16.mxu0 0
        %2265 = vmatpush1.bf16.msra.mxu0 0
        %2266 = vmatprep.mubr.bf16.mxu0 0
        %2267 = vmatmul.mubr.bf16.gmra.mrb[0].mxu0 %v2202
        %v2268 = vpop.f32.mrb[0].mxu0
        %v2269 = vadd.f32 0.0, %v2268
        %v2270 = vpop.f32.mrb[0].mxu0
        %v2271 = vpop.f32.mrb[0].mxu0
        %v2272 = vadd.f32 0.0, %v2271
        %v2273 = vpop.f32.mrb[0].mxu0
        %2274 = vmatprep.mubr.bf16.mxu0 0
        %2275 = vmatmul.mubr.bf16.gmra.mrb[0].mxu0 %v2203
        %v2276 = vpop.f32.mrb[0].mxu0
        %v2277 = vadd.f32 0.0, %v2276
        %v2278 = vpop.f32.mrb[0].mxu0
        %v2279 = vpop.f32.mrb[0].mxu0
        %v2280 = vadd.f32 0.0, %v2279
        %v2281 = vpop.f32.mrb[0].mxu0
        %2282 = vmatprep.mubr.bf16.mxu0 0
        %2283 = vmatmul.mubr.bf16.gmra.mrb[0].mxu0 %v2204
        %v2284 = vpop.f32.mrb[0].mxu0
        %v2285 = vadd.f32 0.0, %v2284
        %v2286 = vpop.f32.mrb[0].mxu0
        %v2287 = vpop.f32.mrb[0].mxu0
        %v2288 = vadd.f32 0.0, %v2287
        %v2289 = vpop.f32.mrb[0].mxu0
        %2290 = vmatprep.mubr.bf16.mxu0 0
        %2291 = vmatmul.mubr.bf16.gmra.mrb[0].mxu0 %v2205
        %v2292 = vpop.f32.mrb[0].mxu0
        %v2293 = vadd.f32 0.0, %v2292
        %v2294 = vpop.f32.mrb[0].mxu0
        %v2295 = vpop.f32.mrb[0].mxu0
        %v2296 = vadd.f32 0.0, %v2295
        %v2297 = vpop.f32.mrb[0].mxu0
        %2298 = vmatprep.mubr.bf16.mxu0 0
        %2299 = vmatmul.mubr.bf16.gmra.mrb[0].mxu0 %v2206
        %v2300 = vpop.f32.mrb[0].mxu0
        %v2301 = vadd.f32 0.0, %v2300
        %v2302 = vpop.f32.mrb[0].mxu0
        %v2303 = vpop.f32.mrb[0].mxu0
        %v2304 = vadd.f32 0.0, %v2303
        %v2305 = vpop.f32.mrb[0].mxu0
        %2306 = vmatprep.mubr.bf16.mxu0 0
        %2307 = vmatmul.mubr.bf16.gmra.mrb[0].mxu0 %v2207
        %v2308 = vpop.f32.mrb[0].mxu0
        %v2309 = vadd.f32 0.0, %v2308
        %v2310 = vpop.f32.mrb[0].mxu0
        %v2311 = vpop.f32.mrb[0].mxu0
        %v2312 = vadd.f32 0.0, %v2311
        %v2313 = vpop.f32.mrb[0].mxu0
        %2314 = vmatprep.mubr.bf16.mxu0 0
        %2315 = vmatmul.mubr.bf16.gmra.mrb[0].mxu0 %v2208
        %v2316 = vpop.f32.mrb[0].mxu0
        %v2317 = vadd.f32 0.0, %v2316
        %v2318 = vpop.f32.mrb[0].mxu0
        %v2319 = vpop.f32.mrb[0].mxu0
        %v2320 = vadd.f32 0.0, %v2319
        %v2321 = vpop.f32.mrb[0].mxu0
        %2322 = vmatprep.mubr.bf16.mxu0 0
        %2323 = vmatmul.mubr.bf16.gmra.mrb[0].mxu0 %v2209
        %v2324 = vpop.f32.mrb[0].mxu0
        %v2325 = vadd.f32 0.0, %v2324
        %v2326 = vpop.f32.mrb[0].mxu0
        %v2327 = vpop.f32.mrb[0].mxu0
        %v2328 = vadd.f32 0.0, %v2327
        %v2329 = vpop.f32.mrb[0].mxu0
        %2330 = vdwg.mxu0
        %v2331 = vmul.f32 %v2269, %v2186
        %v2332 = vmul.f32 %v2272, %v2187
        %v2333 = vmul.f32 %v2277, %v2188
        %v2334 = vmul.f32 %v2280, %v2189
        %v2335 = vmul.f32 %v2285, %v2190
        %v2336 = vmul.f32 %v2288, %v2191
        %v2337 = vmul.f32 %v2293, %v2192
        %v2338 = vmul.f32 %v2296, %v2193
        %v2339 = vmul.f32 %v2301, %v2194
        %v2340 = vmul.f32 %v2304, %v2195
        %v2341 = vmul.f32 %v2309, %v2196
        %v2342 = vmul.f32 %v2312, %v2197
        %v2343 = vmul.f32 %v2317, %v2198
        %v2344 = vmul.f32 %v2320, %v2199
        %v2345 = vmul.f32 %v2325, %v2200
        %v2346 = vmul.f32 %v2328, %v2201
        %v2347 = vpack.c.bf16 %v2332, %v2331
        %v2348 = vpack.c.bf16 %v2334, %v2333
        %v2349 = vpack.c.bf16 %v2336, %v2335
        %v2350 = vpack.c.bf16 %v2338, %v2337
        %v2351 = vpack.c.bf16 %v2340, %v2339
        %v2352 = vpack.c.bf16 %v2342, %v2341
        %v2353 = vpack.c.bf16 %v2344, %v2343
        %v2354 = vpack.c.bf16 %v2346, %v2345
        %v2355 = vld [vmem:[%s2 + $0x20] sm:$0xf]
        %v2356 = vld [vmem:[%s2 + $0x24] sm:$0xf]
        %v2357 = vld [vmem:[%s2 + $0x28] sm:$0xf]
        %v2358 = vld [vmem:[%s2 + $0x2c] sm:$0xf]
        %v2363 = vunpack.c.l.b16 %v2355
        %v2364 = vunpack.c.l.b16 %v2356
        %v2365 = vunpack.c.l.b16 %v2357
        %v2366 = vunpack.c.l.b16 %v2358
        %v2367 = vpack.c.b16 %v2364, %v2363
        %v2368 = vpack.c.b16 %v2366, %v2365
        %v2372 = vsel %vm690, %v2347, 0
        %v2375 = vsel %vm690, %v2348, 0
        %v2378 = vsel %vm690, %v2349, 0
        %v2381 = vsel %vm690, %v2350, 0
        %v2384 = vsel %vm690, %v2351, 0
        %v2387 = vsel %vm690, %v2352, 0
        %v2390 = vsel %vm690, %v2353, 0
        %v2393 = vsel %vm690, %v2354, 0
        %2395 = vmatprep.subr.bf16.mxu0 0
        %2396 = vmatpush1.bf16.msra.mxu0 %v2367
        %2397 = vmatprep.subr.bf16.mxu0 0
        %2398 = vmatpush1.bf16.msra.mxu0 %v2368
        %2399 = vmatprep.subr.bf16.mxu0 0
        %2400 = vmatpush1.bf16.msra.mxu0 0
        %2401 = vmatprep.subr.bf16.mxu0 0
        %2402 = vmatpush1.bf16.msra.mxu0 0
        %2403 = vmatprep.subr.bf16.mxu0 0
        %2404 = vmatpush1.bf16.msra.mxu0 0
        %2405 = vmatprep.subr.bf16.mxu0 0
        %2406 = vmatpush1.bf16.msra.mxu0 0
        %2407 = vmatprep.subr.bf16.mxu0 0
        %2408 = vmatpush1.bf16.msra.mxu0 0
        %2409 = vmatprep.subr.bf16.mxu0 0
        %2410 = vmatpush1.bf16.msra.mxu0 0
        %2411 = vmatprep.subr.bf16.mxu0 0
        %2412 = vmatpush1.bf16.msra.mxu0 0
        %2413 = vmatprep.subr.bf16.mxu0 0
        %2414 = vmatpush1.bf16.msra.mxu0 0
        %2415 = vmatprep.subr.bf16.mxu0 0
        %2416 = vmatpush1.bf16.msra.mxu0 0
        %2417 = vmatprep.subr.bf16.mxu0 0
        %2418 = vmatpush1.bf16.msra.mxu0 0
        %2419 = vmatprep.subr.bf16.mxu0 0
        %2420 = vmatpush1.bf16.msra.mxu0 0
        %2421 = vmatprep.subr.bf16.mxu0 0
        %2422 = vmatpush1.bf16.msra.mxu0 0
        %2423 = vmatprep.subr.bf16.mxu0 0
        %2424 = vmatpush1.bf16.msra.mxu0 0
        %2425 = vmatprep.subr.bf16.mxu0 0
        %2426 = vmatpush1.bf16.msra.mxu0 0
        %2427 = vmatprep.mubr.bf16.mxu0 0
        %2428 = vmatmul.mubr.bf16.gmra.mrb[0].mxu0 %v2372
        %v2429 = vpop.f32.mrb[0].mxu0
        %v2430 = vadd.f32 0.0, %v2429
        %v2431 = vpop.f32.mrb[0].mxu0
        %v2432 = vpop.f32.mrb[0].mxu0
        %v2433 = vadd.f32 0.0, %v2432
        %v2434 = vpop.f32.mrb[0].mxu0
        %2435 = vmatprep.mubr.bf16.mxu0 0
        %2436 = vmatmul.mubr.bf16.gmra.mrb[0].mxu0 %v2375
        %v2437 = vpop.f32.mrb[0].mxu0
        %v2438 = vadd.f32 0.0, %v2437
        %v2439 = vpop.f32.mrb[0].mxu0
        %v2440 = vpop.f32.mrb[0].mxu0
        %v2441 = vadd.f32 0.0, %v2440
        %v2442 = vpop.f32.mrb[0].mxu0
        %2443 = vmatprep.mubr.bf16.mxu0 0
        %2444 = vmatmul.mubr.bf16.gmra.mrb[0].mxu0 %v2378
        %v2445 = vpop.f32.mrb[0].mxu0
        %v2446 = vadd.f32 0.0, %v2445
        %v2447 = vpop.f32.mrb[0].mxu0
        %v2448 = vpop.f32.mrb[0].mxu0
        %v2449 = vadd.f32 0.0, %v2448
        %v2450 = vpop.f32.mrb[0].mxu0
        %2451 = vmatprep.mubr.bf16.mxu0 0
        %2452 = vmatmul.mubr.bf16.gmra.mrb[0].mxu0 %v2381
        %v2453 = vpop.f32.mrb[0].mxu0
        %v2454 = vadd.f32 0.0, %v2453
        %v2455 = vpop.f32.mrb[0].mxu0
        %v2456 = vpop.f32.mrb[0].mxu0
        %v2457 = vadd.f32 0.0, %v2456
        %v2458 = vpop.f32.mrb[0].mxu0
        %2459 = vmatprep.mubr.bf16.mxu0 0
        %2460 = vmatmul.mubr.bf16.gmra.mrb[0].mxu0 %v2384
        %v2461 = vpop.f32.mrb[0].mxu0
        %v2462 = vadd.f32 0.0, %v2461
        %v2463 = vpop.f32.mrb[0].mxu0
        %v2464 = vpop.f32.mrb[0].mxu0
        %v2465 = vadd.f32 0.0, %v2464
        %v2466 = vpop.f32.mrb[0].mxu0
        %2467 = vmatprep.mubr.bf16.mxu0 0
        %2468 = vmatmul.mubr.bf16.gmra.mrb[0].mxu0 %v2387
        %v2469 = vpop.f32.mrb[0].mxu0
        %v2470 = vadd.f32 0.0, %v2469
        %v2471 = vpop.f32.mrb[0].mxu0
        %v2472 = vpop.f32.mrb[0].mxu0
        %v2473 = vadd.f32 0.0, %v2472
        %v2474 = vpop.f32.mrb[0].mxu0
        %2475 = vmatprep.mubr.bf16.mxu0 0
        %2476 = vmatmul.mubr.bf16.gmra.mrb[0].mxu0 %v2390
        %v2477 = vpop.f32.mrb[0].mxu0
        %v2478 = vadd.f32 0.0, %v2477
        %v2479 = vpop.f32.mrb[0].mxu0
        %v2480 = vpop.f32.mrb[0].mxu0
        %v2481 = vadd.f32 0.0, %v2480
        %v2482 = vpop.f32.mrb[0].mxu0
        %2483 = vmatprep.mubr.bf16.mxu0 0
        %2484 = vmatmul.mubr.bf16.gmra.mrb[0].mxu0 %v2393
        %v2485 = vpop.f32.mrb[0].mxu0
        %v2486 = vadd.f32 0.0, %v2485
        %v2487 = vpop.f32.mrb[0].mxu0
        %v2488 = vpop.f32.mrb[0].mxu0
        %v2489 = vadd.f32 0.0, %v2488
        %v2490 = vpop.f32.mrb[0].mxu0
        %2491 = vdwg.mxu0
        %v2492 = vadd.f32 %v1819, %v2430
        %v2493 = vadd.f32 %v1822, %v2433
        %v2494 = vadd.f32 %v1827, %v2438
        %v2495 = vadd.f32 %v1830, %v2441
        %v2496 = vadd.f32 %v1835, %v2446
        %v2497 = vadd.f32 %v1838, %v2449
        %v2498 = vadd.f32 %v1843, %v2454
        %v2499 = vadd.f32 %v1846, %v2457
        %v2500 = vadd.f32 %v1851, %v2462
        %v2501 = vadd.f32 %v1854, %v2465
        %v2502 = vadd.f32 %v1859, %v2470
        %v2503 = vadd.f32 %v1862, %v2473
        %v2504 = vadd.f32 %v1867, %v2478
        %v2505 = vadd.f32 %v1870, %v2481
        %v2506 = vadd.f32 %v1875, %v2486
        %v2507 = vadd.f32 %v1878, %v2489
        %2508 = vrot.lane.b32.xlu0 %v631, 32
        %v2509 = vpop.permute.xlu0 %2508
        %2510 = vrot.lane.b32.xlu0 %v634, 32
        %v2511 = vpop.permute.xlu0 %2510
        %2512 = vrot.lane.b32.xlu0 %v637, 32
        %v2513 = vpop.permute.xlu0 %2512
        %2514 = vrot.lane.b32.xlu0 %v640, 32
        %v2515 = vpop.permute.xlu0 %2514
        %2516 = vrot.lane.b32.xlu0 %v643, 32
        %v2517 = vpop.permute.xlu0 %2516
        %2518 = vrot.lane.b32.xlu0 %v646, 32
        %v2519 = vpop.permute.xlu0 %2518
        %2520 = vrot.lane.b32.xlu0 %v649, 32
        %v2521 = vpop.permute.xlu0 %2520
        %2522 = vrot.lane.b32.xlu0 %v652, 32
        %v2523 = vpop.permute.xlu0 %2522
        %2524 = vrot.lane.b32.xlu0 %v632, 32
        %v2525 = vpop.permute.xlu0 %2524
        %2526 = vrot.lane.b32.xlu0 %v635, 32
        %v2527 = vpop.permute.xlu0 %2526
        %2528 = vrot.lane.b32.xlu0 %v638, 32
        %v2529 = vpop.permute.xlu0 %2528
        %2530 = vrot.lane.b32.xlu0 %v641, 32
        %v2531 = vpop.permute.xlu0 %2530
        %2532 = vrot.lane.b32.xlu0 %v644, 32
        %v2533 = vpop.permute.xlu0 %2532
        %2534 = vrot.lane.b32.xlu0 %v647, 32
        %v2535 = vpop.permute.xlu0 %2534
        %2536 = vrot.lane.b32.xlu0 %v650, 32
        %v2537 = vpop.permute.xlu0 %2536
        %2538 = vrot.lane.b32.xlu0 %v653, 32
        %v2539 = vpop.permute.xlu0 %2538
        %v2541 = vsel %vm690, %v2509, 0
        %v2544 = vsel %vm690, %v2511, 0
        %v2547 = vsel %vm690, %v2513, 0
        %v2550 = vsel %vm690, %v2515, 0
        %v2553 = vsel %vm690, %v2517, 0
        %v2556 = vsel %vm690, %v2519, 0
        %v2559 = vsel %vm690, %v2521, 0
        %v2562 = vsel %vm690, %v2523, 0
        %v2565 = vsel %vm690, %v2525, 0
        %v2568 = vsel %vm690, %v2527, 0
        %v2571 = vsel %vm690, %v2529, 0
        %v2574 = vsel %vm690, %v2531, 0
        %v2577 = vsel %vm690, %v2533, 0
        %v2580 = vsel %vm690, %v2535, 0
        %v2583 = vsel %vm690, %v2537, 0
        %v2586 = vsel %vm690, %v2539, 0
        %2588 = vmatprep.subr.bf16.mxu0 0
        %2589 = vmatpush1.bf16.xpose.msra.mxu0 %v2565
        %2590 = vmatprep.subr.bf16.mxu0 0
        %2591 = vmatpush1.bf16.xpose.msra.mxu0 %v2568
        %2592 = vmatprep.subr.bf16.mxu0 0
        %2593 = vmatpush1.bf16.xpose.msra.mxu0 %v2571
        %2594 = vmatprep.subr.bf16.mxu0 0
        %2595 = vmatpush1.bf16.xpose.msra.mxu0 %v2574
        %2596 = vmatprep.subr.bf16.mxu0 0
        %2597 = vmatpush1.bf16.xpose.msra.mxu0 %v2577
        %2598 = vmatprep.subr.bf16.mxu0 0
        %2599 = vmatpush1.bf16.xpose.msra.mxu0 %v2580
        %2600 = vmatprep.subr.bf16.mxu0 0
        %2601 = vmatpush1.bf16.xpose.msra.mxu0 %v2583
        %2602 = vmatprep.subr.bf16.mxu0 0
        %2603 = vmatpush1.bf16.xpose.msra.mxu0 %v2586
        %2604 = vmatprep.subr.bf16.mxu0 0
        %2605 = vmatpush1.bf16.xpose.msra.mxu0 0
        %2606 = vmatprep.subr.bf16.mxu0 0
        %2607 = vmatpush1.bf16.xpose.msra.mxu0 0
        %2608 = vmatprep.subr.bf16.mxu0 0
        %2609 = vmatpush1.bf16.xpose.msra.mxu0 0
        %2610 = vmatprep.subr.bf16.mxu0 0
        %2611 = vmatpush1.bf16.xpose.msra.mxu0 0
        %2612 = vmatprep.subr.bf16.mxu0 0
        %2613 = vmatpush1.bf16.xpose.msra.mxu0 0
        %2614 = vmatprep.subr.bf16.mxu0 0
        %2615 = vmatpush1.bf16.xpose.msra.mxu0 0
        %2616 = vmatprep.subr.bf16.mxu0 0
        %2617 = vmatpush1.bf16.xpose.msra.mxu0 0
        %2618 = vmatprep.subr.bf16.mxu0 0
        %2619 = vmatpush1.bf16.xpose.msra.mxu0 0
        %2620 = vmatprep.mubr.bf16.mxu0 0
        %2621 = vmatmul.mubr.bf16.gmra.mrb[0].mxu0 %v2541
        %v2622 = vpop.f32.mrb[0].mxu0
        %v2623 = vadd.f32 0.0, %v2622
        %v2624 = vpop.f32.mrb[0].mxu0
        %v2625 = vpop.f32.mrb[0].mxu0
        %v2626 = vadd.f32 0.0, %v2625
        %v2627 = vpop.f32.mrb[0].mxu0
        %2628 = vmatprep.mubr.bf16.mxu0 0
        %2629 = vmatmul.mubr.bf16.gmra.mrb[0].mxu0 %v2544
        %v2630 = vpop.f32.mrb[0].mxu0
        %v2631 = vadd.f32 0.0, %v2630
        %v2632 = vpop.f32.mrb[0].mxu0
        %v2633 = vpop.f32.mrb[0].mxu0
        %v2634 = vadd.f32 0.0, %v2633
        %v2635 = vpop.f32.mrb[0].mxu0
        %2636 = vmatprep.mubr.bf16.mxu0 0
        %2637 = vmatmul.mubr.bf16.gmra.mrb[0].mxu0 %v2547
        %v2638 = vpop.f32.mrb[0].mxu0
        %v2639 = vadd.f32 0.0, %v2638
        %v2640 = vpop.f32.mrb[0].mxu0
        %v2641 = vpop.f32.mrb[0].mxu0
        %v2642 = vadd.f32 0.0, %v2641
        %v2643 = vpop.f32.mrb[0].mxu0
        %2644 = vmatprep.mubr.bf16.mxu0 0
        %2645 = vmatmul.mubr.bf16.gmra.mrb[0].mxu0 %v2550
        %v2646 = vpop.f32.mrb[0].mxu0
        %v2647 = vadd.f32 0.0, %v2646
        %v2648 = vpop.f32.mrb[0].mxu0
        %v2649 = vpop.f32.mrb[0].mxu0
        %v2650 = vadd.f32 0.0, %v2649
        %v2651 = vpop.f32.mrb[0].mxu0
        %2652 = vmatprep.mubr.bf16.mxu0 0
        %2653 = vmatmul.mubr.bf16.gmra.mrb[0].mxu0 %v2553
        %v2654 = vpop.f32.mrb[0].mxu0
        %v2655 = vadd.f32 0.0, %v2654
        %v2656 = vpop.f32.mrb[0].mxu0
        %v2657 = vpop.f32.mrb[0].mxu0
        %v2658 = vadd.f32 0.0, %v2657
        %v2659 = vpop.f32.mrb[0].mxu0
        %2660 = vmatprep.mubr.bf16.mxu0 0
        %2661 = vmatmul.mubr.bf16.gmra.mrb[0].mxu0 %v2556
        %v2662 = vpop.f32.mrb[0].mxu0
        %v2663 = vadd.f32 0.0, %v2662
        %v2664 = vpop.f32.mrb[0].mxu0
        %v2665 = vpop.f32.mrb[0].mxu0
        %v2666 = vadd.f32 0.0, %v2665
        %v2667 = vpop.f32.mrb[0].mxu0
        %2668 = vmatprep.mubr.bf16.mxu0 0
        %2669 = vmatmul.mubr.bf16.gmra.mrb[0].mxu0 %v2559
        %v2670 = vpop.f32.mrb[0].mxu0
        %v2671 = vadd.f32 0.0, %v2670
        %v2672 = vpop.f32.mrb[0].mxu0
        %v2673 = vpop.f32.mrb[0].mxu0
        %v2674 = vadd.f32 0.0, %v2673
        %v2675 = vpop.f32.mrb[0].mxu0
        %2676 = vmatprep.mubr.bf16.mxu0 0
        %2677 = vmatmul.mubr.bf16.gmra.mrb[0].mxu0 %v2562
        %v2678 = vpop.f32.mrb[0].mxu0
        %v2679 = vadd.f32 0.0, %v2678
        %v2680 = vpop.f32.mrb[0].mxu0
        %v2681 = vpop.f32.mrb[0].mxu0
        %v2682 = vadd.f32 0.0, %v2681
        %v2683 = vpop.f32.mrb[0].mxu0
        %2684 = vdwg.mxu0
        %v2685 = vsel %vm674, %v2623, -1e+30
        %v2686 = vsel %vm675, %v2626, -1e+30
        %v2687 = vsel %vm676, %v2631, -1e+30
        %v2688 = vsel %vm677, %v2634, -1e+30
        %v2689 = vsel %vm678, %v2639, -1e+30
        %v2690 = vsel %vm679, %v2642, -1e+30
        %v2691 = vsel %vm680, %v2647, -1e+30
        %v2692 = vsel %vm681, %v2650, -1e+30
        %v2693 = vsel %vm682, %v2655, -1e+30
        %v2694 = vsel %vm683, %v2658, -1e+30
        %v2695 = vsel %vm684, %v2663, -1e+30
        %v2696 = vsel %vm685, %v2666, -1e+30
        %v2697 = vsel %vm686, %v2671, -1e+30
        %v2698 = vsel %vm687, %v2674, -1e+30
        %v2699 = vsel %vm688, %v2679, -1e+30
        %v2700 = vsel %vm689, %v2682, -1e+30
        %2701 = vmax.xlane.f32.xlu0 %v2685
        %v2702 = vpop.xlane.xlu0 %2701
        %2703 = vmax.xlane.f32.xlu0 %v2686
        %v2704 = vpop.xlane.xlu0 %2703
        %2705 = vmax.xlane.f32.xlu0 %v2687
        %v2706 = vpop.xlane.xlu0 %2705
        %2707 = vmax.xlane.f32.xlu0 %v2688
        %v2708 = vpop.xlane.xlu0 %2707
        %2709 = vmax.xlane.f32.xlu0 %v2689
        %v2710 = vpop.xlane.xlu0 %2709
        %2711 = vmax.xlane.f32.xlu0 %v2690
        %v2712 = vpop.xlane.xlu0 %2711
        %2713 = vmax.xlane.f32.xlu0 %v2691
        %v2714 = vpop.xlane.xlu0 %2713
        %2715 = vmax.xlane.f32.xlu0 %v2692
        %v2716 = vpop.xlane.xlu0 %2715
        %2717 = vmax.xlane.f32.xlu0 %v2693
        %v2718 = vpop.xlane.xlu0 %2717
        %2719 = vmax.xlane.f32.xlu0 %v2694
        %v2720 = vpop.xlane.xlu0 %2719
        %2721 = vmax.xlane.f32.xlu0 %v2695
        %v2722 = vpop.xlane.xlu0 %2721
        %2723 = vmax.xlane.f32.xlu0 %v2696
        %v2724 = vpop.xlane.xlu0 %2723
        %2725 = vmax.xlane.f32.xlu0 %v2697
        %v2726 = vpop.xlane.xlu0 %2725
        %2727 = vmax.xlane.f32.xlu0 %v2698
        %v2728 = vpop.xlane.xlu0 %2727
        %2729 = vmax.xlane.f32.xlu0 %v2699
        %v2730 = vpop.xlane.xlu0 %2729
        %2731 = vmax.xlane.f32.xlu0 %v2700
        %v2732 = vpop.xlane.xlu0 %2731
        %v2733 = vsub.f32 %v2685, %v2702
        %v2734 = vsub.f32 %v2686, %v2704
        %v2735 = vsub.f32 %v2687, %v2706
        %v2736 = vsub.f32 %v2688, %v2708
        %v2737 = vsub.f32 %v2689, %v2710
        %v2738 = vsub.f32 %v2690, %v2712
        %v2739 = vsub.f32 %v2691, %v2714
        %v2740 = vsub.f32 %v2692, %v2716
        %v2741 = vsub.f32 %v2693, %v2718
        %v2742 = vsub.f32 %v2694, %v2720
        %v2743 = vsub.f32 %v2695, %v2722
        %v2744 = vsub.f32 %v2696, %v2724
        %v2745 = vsub.f32 %v2697, %v2726
        %v2746 = vsub.f32 %v2698, %v2728
        %v2747 = vsub.f32 %v2699, %v2730
        %v2748 = vsub.f32 %v2700, %v2732
        %v2749 = vmul.f32 %v2733, 1.442695
        %v2750 = vpow.pop %v2749
        %v2751 = vmul.f32 %v2734, 1.442695
        %v2752 = vpow.pop %v2751
        %v2753 = vmul.f32 %v2735, 1.442695
        %v2754 = vpow.pop %v2753
        %v2755 = vmul.f32 %v2736, 1.442695
        %v2756 = vpow.pop %v2755
        %v2757 = vmul.f32 %v2737, 1.442695
        %v2758 = vpow.pop %v2757
        %v2759 = vmul.f32 %v2738, 1.442695
        %v2760 = vpow.pop %v2759
        %v2761 = vmul.f32 %v2739, 1.442695
        %v2762 = vpow.pop %v2761
        %v2763 = vmul.f32 %v2740, 1.442695
        %v2764 = vpow.pop %v2763
        %v2765 = vmul.f32 %v2741, 1.442695
        %v2766 = vpow.pop %v2765
        %v2767 = vmul.f32 %v2742, 1.442695
        %v2768 = vpow.pop %v2767
        %v2769 = vmul.f32 %v2743, 1.442695
        %v2770 = vpow.pop %v2769
        %v2771 = vmul.f32 %v2744, 1.442695
        %v2772 = vpow.pop %v2771
        %v2773 = vmul.f32 %v2745, 1.442695
        %v2774 = vpow.pop %v2773
        %v2775 = vmul.f32 %v2746, 1.442695
        %v2776 = vpow.pop %v2775
        %v2777 = vmul.f32 %v2747, 1.442695
        %v2778 = vpow.pop %v2777
        %v2779 = vmul.f32 %v2748, 1.442695
        %v2780 = vpow.pop %v2779
        %2781 = vadd.xlane.f32.xlu0 %v2750
        %v2782 = vpop.xlane.xlu0 %2781
        %2783 = vadd.xlane.f32.xlu0 %v2752
        %v2784 = vpop.xlane.xlu0 %2783
        %2785 = vadd.xlane.f32.xlu0 %v2754
        %v2786 = vpop.xlane.xlu0 %2785
        %2787 = vadd.xlane.f32.xlu0 %v2756
        %v2788 = vpop.xlane.xlu0 %2787
        %2789 = vadd.xlane.f32.xlu0 %v2758
        %v2790 = vpop.xlane.xlu0 %2789
        %2791 = vadd.xlane.f32.xlu0 %v2760
        %v2792 = vpop.xlane.xlu0 %2791
        %2793 = vadd.xlane.f32.xlu0 %v2762
        %v2794 = vpop.xlane.xlu0 %2793
        %2795 = vadd.xlane.f32.xlu0 %v2764
        %v2796 = vpop.xlane.xlu0 %2795
        %2797 = vadd.xlane.f32.xlu0 %v2766
        %v2798 = vpop.xlane.xlu0 %2797
        %2799 = vadd.xlane.f32.xlu0 %v2768
        %v2800 = vpop.xlane.xlu0 %2799
        %2801 = vadd.xlane.f32.xlu0 %v2770
        %v2802 = vpop.xlane.xlu0 %2801
        %2803 = vadd.xlane.f32.xlu0 %v2772
        %v2804 = vpop.xlane.xlu0 %2803
        %2805 = vadd.xlane.f32.xlu0 %v2774
        %v2806 = vpop.xlane.xlu0 %2805
        %2807 = vadd.xlane.f32.xlu0 %v2776
        %v2808 = vpop.xlane.xlu0 %2807
        %2809 = vadd.xlane.f32.xlu0 %v2778
        %v2810 = vpop.xlane.xlu0 %2809
        %2811 = vadd.xlane.f32.xlu0 %v2780
        %v2812 = vpop.xlane.xlu0 %2811
        %v2813 = vrcp.pop %v2782
        %v2814 = vrcp.pop %v2784
        %v2815 = vrcp.pop %v2786
        %v2816 = vrcp.pop %v2788
        %v2817 = vrcp.pop %v2790
        %v2818 = vrcp.pop %v2792
        %v2819 = vrcp.pop %v2794
        %v2820 = vrcp.pop %v2796
        %v2821 = vrcp.pop %v2798
        %v2822 = vrcp.pop %v2800
        %v2823 = vrcp.pop %v2802
        %v2824 = vrcp.pop %v2804
        %v2825 = vrcp.pop %v2806
        %v2826 = vrcp.pop %v2808
        %v2827 = vrcp.pop %v2810
        %v2828 = vrcp.pop %v2812
        %v2829 = vpack.c.bf16 %v2752, %v2750
        %v2830 = vpack.c.bf16 %v2756, %v2754
        %v2831 = vpack.c.bf16 %v2760, %v2758
        %v2832 = vpack.c.bf16 %v2764, %v2762
        %v2833 = vpack.c.bf16 %v2768, %v2766
        %v2834 = vpack.c.bf16 %v2772, %v2770
        %v2835 = vpack.c.bf16 %v2776, %v2774
        %v2836 = vpack.c.bf16 %v2780, %v2778
        %2837 = vrot.lane.b32.xlu0 %v633, 32
        %v2838 = vpop.permute.xlu0 %2837
        %2839 = vrot.lane.b32.xlu0 %v636, 32
        %v2840 = vpop.permute.xlu0 %2839
        %2841 = vrot.lane.b32.xlu0 %v639, 32
        %v2842 = vpop.permute.xlu0 %2841
        %2843 = vrot.lane.b32.xlu0 %v642, 32
        %v2844 = vpop.permute.xlu0 %2843
        %2845 = vrot.lane.b32.xlu0 %v645, 32
        %v2846 = vpop.permute.xlu0 %2845
        %2847 = vrot.lane.b32.xlu0 %v648, 32
        %v2848 = vpop.permute.xlu0 %2847
        %2849 = vrot.lane.b32.xlu0 %v651, 32
        %v2850 = vpop.permute.xlu0 %2849
        %2851 = vrot.lane.b32.xlu0 %v654, 32
        %v2852 = vpop.permute.xlu0 %2851
        %2861 = vmatprep.subr.bf16.mxu0 0
        %2862 = vmatpush1.bf16.msra.mxu0 %v2838
        %2863 = vmatprep.subr.bf16.mxu0 0
        %2864 = vmatpush1.bf16.msra.mxu0 %v2840
        %2865 = vmatprep.subr.bf16.mxu0 0
        %2866 = vmatpush1.bf16.msra.mxu0 %v2842
        %2867 = vmatprep.subr.bf16.mxu0 0
        %2868 = vmatpush1.bf16.msra.mxu0 %v2844
        %2869 = vmatprep.subr.bf16.mxu0 0
        %2870 = vmatpush1.bf16.msra.mxu0 %v2846
        %2871 = vmatprep.subr.bf16.mxu0 0
        %2872 = vmatpush1.bf16.msra.mxu0 %v2848
        %2873 = vmatprep.subr.bf16.mxu0 0
        %2874 = vmatpush1.bf16.msra.mxu0 %v2850
        %2875 = vmatprep.subr.bf16.mxu0 0
        %2876 = vmatpush1.bf16.msra.mxu0 %v2852
        %2877 = vmatprep.subr.bf16.mxu0 0
        %2878 = vmatpush1.bf16.msra.mxu0 0
        %2879 = vmatprep.subr.bf16.mxu0 0
        %2880 = vmatpush1.bf16.msra.mxu0 0
        %2881 = vmatprep.subr.bf16.mxu0 0
        %2882 = vmatpush1.bf16.msra.mxu0 0
        %2883 = vmatprep.subr.bf16.mxu0 0
        %2884 = vmatpush1.bf16.msra.mxu0 0
        %2885 = vmatprep.subr.bf16.mxu0 0
        %2886 = vmatpush1.bf16.msra.mxu0 0
        %2887 = vmatprep.subr.bf16.mxu0 0
        %2888 = vmatpush1.bf16.msra.mxu0 0
        %2889 = vmatprep.subr.bf16.mxu0 0
        %2890 = vmatpush1.bf16.msra.mxu0 0
        %2891 = vmatprep.subr.bf16.mxu0 0
        %2892 = vmatpush1.bf16.msra.mxu0 0
        %2893 = vmatprep.mubr.bf16.mxu0 0
        %2894 = vmatmul.mubr.bf16.gmra.mrb[0].mxu0 %v2829
        %v2895 = vpop.f32.mrb[0].mxu0
        %v2896 = vadd.f32 0.0, %v2895
        %v2897 = vpop.f32.mrb[0].mxu0
        %v2898 = vpop.f32.mrb[0].mxu0
        %v2899 = vadd.f32 0.0, %v2898
        %v2900 = vpop.f32.mrb[0].mxu0
        %2901 = vmatprep.mubr.bf16.mxu0 0
        %2902 = vmatmul.mubr.bf16.gmra.mrb[0].mxu0 %v2830
        %v2903 = vpop.f32.mrb[0].mxu0
        %v2904 = vadd.f32 0.0, %v2903
        %v2905 = vpop.f32.mrb[0].mxu0
        %v2906 = vpop.f32.mrb[0].mxu0
        %v2907 = vadd.f32 0.0, %v2906
        %v2908 = vpop.f32.mrb[0].mxu0
        %2909 = vmatprep.mubr.bf16.mxu0 0
        %2910 = vmatmul.mubr.bf16.gmra.mrb[0].mxu0 %v2831
        %v2911 = vpop.f32.mrb[0].mxu0
        %v2912 = vadd.f32 0.0, %v2911
        %v2913 = vpop.f32.mrb[0].mxu0
        %v2914 = vpop.f32.mrb[0].mxu0
        %v2915 = vadd.f32 0.0, %v2914
        %v2916 = vpop.f32.mrb[0].mxu0
        %2917 = vmatprep.mubr.bf16.mxu0 0
        %2918 = vmatmul.mubr.bf16.gmra.mrb[0].mxu0 %v2832
        %v2919 = vpop.f32.mrb[0].mxu0
        %v2920 = vadd.f32 0.0, %v2919
        %v2921 = vpop.f32.mrb[0].mxu0
        %v2922 = vpop.f32.mrb[0].mxu0
        %v2923 = vadd.f32 0.0, %v2922
        %v2924 = vpop.f32.mrb[0].mxu0
        %2925 = vmatprep.mubr.bf16.mxu0 0
        %2926 = vmatmul.mubr.bf16.gmra.mrb[0].mxu0 %v2833
        %v2927 = vpop.f32.mrb[0].mxu0
        %v2928 = vadd.f32 0.0, %v2927
        %v2929 = vpop.f32.mrb[0].mxu0
        %v2930 = vpop.f32.mrb[0].mxu0
        %v2931 = vadd.f32 0.0, %v2930
        %v2932 = vpop.f32.mrb[0].mxu0
        %2933 = vmatprep.mubr.bf16.mxu0 0
        %2934 = vmatmul.mubr.bf16.gmra.mrb[0].mxu0 %v2834
        %v2935 = vpop.f32.mrb[0].mxu0
        %v2936 = vadd.f32 0.0, %v2935
        %v2937 = vpop.f32.mrb[0].mxu0
        %v2938 = vpop.f32.mrb[0].mxu0
        %v2939 = vadd.f32 0.0, %v2938
        %v2940 = vpop.f32.mrb[0].mxu0
        %2941 = vmatprep.mubr.bf16.mxu0 0
        %2942 = vmatmul.mubr.bf16.gmra.mrb[0].mxu0 %v2835
        %v2943 = vpop.f32.mrb[0].mxu0
        %v2944 = vadd.f32 0.0, %v2943
        %v2945 = vpop.f32.mrb[0].mxu0
        %v2946 = vpop.f32.mrb[0].mxu0
        %v2947 = vadd.f32 0.0, %v2946
        %v2948 = vpop.f32.mrb[0].mxu0
        %2949 = vmatprep.mubr.bf16.mxu0 0
        %2950 = vmatmul.mubr.bf16.gmra.mrb[0].mxu0 %v2836
        %v2951 = vpop.f32.mrb[0].mxu0
        %v2952 = vadd.f32 0.0, %v2951
        %v2953 = vpop.f32.mrb[0].mxu0
        %v2954 = vpop.f32.mrb[0].mxu0
        %v2955 = vadd.f32 0.0, %v2954
        %v2956 = vpop.f32.mrb[0].mxu0
        %2957 = vdwg.mxu0
        %v2958 = vmul.f32 %v2896, %v2813
        %v2959 = vmul.f32 %v2899, %v2814
        %v2960 = vmul.f32 %v2904, %v2815
        %v2961 = vmul.f32 %v2907, %v2816
        %v2962 = vmul.f32 %v2912, %v2817
        %v2963 = vmul.f32 %v2915, %v2818
        %v2964 = vmul.f32 %v2920, %v2819
        %v2965 = vmul.f32 %v2923, %v2820
        %v2966 = vmul.f32 %v2928, %v2821
        %v2967 = vmul.f32 %v2931, %v2822
        %v2968 = vmul.f32 %v2936, %v2823
        %v2969 = vmul.f32 %v2939, %v2824
        %v2970 = vmul.f32 %v2944, %v2825
        %v2971 = vmul.f32 %v2947, %v2826
        %v2972 = vmul.f32 %v2952, %v2827
        %v2973 = vmul.f32 %v2955, %v2828
        %v2974 = vpack.c.bf16 %v2959, %v2958
        %v2975 = vpack.c.bf16 %v2961, %v2960
        %v2976 = vpack.c.bf16 %v2963, %v2962
        %v2977 = vpack.c.bf16 %v2965, %v2964
        %v2978 = vpack.c.bf16 %v2967, %v2966
        %v2979 = vpack.c.bf16 %v2969, %v2968
        %v2980 = vpack.c.bf16 %v2971, %v2970
        %v2981 = vpack.c.bf16 %v2973, %v2972
        %v2982 = vld [vmem:[%s2 + $0x30] sm:$0xf]
        %v2983 = vld [vmem:[%s2 + $0x34] sm:$0xf]
        %v2984 = vld [vmem:[%s2 + $0x38] sm:$0xf]
        %v2985 = vld [vmem:[%s2 + $0x3c] sm:$0xf]
        %v2990 = vunpack.c.l.b16 %v2982
        %v2991 = vunpack.c.l.b16 %v2983
        %v2992 = vunpack.c.l.b16 %v2984
        %v2993 = vunpack.c.l.b16 %v2985
        %v2994 = vpack.c.b16 %v2991, %v2990
        %v2995 = vpack.c.b16 %v2993, %v2992
        %v2999 = vsel %vm690, %v2974, 0
        %v3002 = vsel %vm690, %v2975, 0
        %v3005 = vsel %vm690, %v2976, 0
        %v3008 = vsel %vm690, %v2977, 0
        %v3011 = vsel %vm690, %v2978, 0
        %v3014 = vsel %vm690, %v2979, 0
        %v3017 = vsel %vm690, %v2980, 0
        %v3020 = vsel %vm690, %v2981, 0
        %3022 = vmatprep.subr.bf16.mxu0 0
        %3023 = vmatpush1.bf16.msra.mxu0 %v2994
        %3024 = vmatprep.subr.bf16.mxu0 0
        %3025 = vmatpush1.bf16.msra.mxu0 %v2995
        %3026 = vmatprep.subr.bf16.mxu0 0
        %3027 = vmatpush1.bf16.msra.mxu0 0
        %3028 = vmatprep.subr.bf16.mxu0 0
        %3029 = vmatpush1.bf16.msra.mxu0 0
        %3030 = vmatprep.subr.bf16.mxu0 0
        %3031 = vmatpush1.bf16.msra.mxu0 0
        %3032 = vmatprep.subr.bf16.mxu0 0
        %3033 = vmatpush1.bf16.msra.mxu0 0
        %3034 = vmatprep.subr.bf16.mxu0 0
        %3035 = vmatpush1.bf16.msra.mxu0 0
        %3036 = vmatprep.subr.bf16.mxu0 0
        %3037 = vmatpush1.bf16.msra.mxu0 0
        %3038 = vmatprep.subr.bf16.mxu0 0
        %3039 = vmatpush1.bf16.msra.mxu0 0
        %3040 = vmatprep.subr.bf16.mxu0 0
        %3041 = vmatpush1.bf16.msra.mxu0 0
        %3042 = vmatprep.subr.bf16.mxu0 0
        %3043 = vmatpush1.bf16.msra.mxu0 0
        %3044 = vmatprep.subr.bf16.mxu0 0
        %3045 = vmatpush1.bf16.msra.mxu0 0
        %3046 = vmatprep.subr.bf16.mxu0 0
        %3047 = vmatpush1.bf16.msra.mxu0 0
        %3048 = vmatprep.subr.bf16.mxu0 0
        %3049 = vmatpush1.bf16.msra.mxu0 0
        %3050 = vmatprep.subr.bf16.mxu0 0
        %3051 = vmatpush1.bf16.msra.mxu0 0
        %3052 = vmatprep.subr.bf16.mxu0 0
        %3053 = vmatpush1.bf16.msra.mxu0 0
        %3054 = vmatprep.mubr.bf16.mxu0 0
        %3055 = vmatmul.mubr.bf16.gmra.mrb[0].mxu0 %v2999
        %v3056 = vpop.f32.mrb[0].mxu0
        %v3057 = vadd.f32 0.0, %v3056
        %v3058 = vpop.f32.mrb[0].mxu0
        %v3059 = vpop.f32.mrb[0].mxu0
        %v3060 = vadd.f32 0.0, %v3059
        %v3061 = vpop.f32.mrb[0].mxu0
        %3062 = vmatprep.mubr.bf16.mxu0 0
        %3063 = vmatmul.mubr.bf16.gmra.mrb[0].mxu0 %v3002
        %v3064 = vpop.f32.mrb[0].mxu0
        %v3065 = vadd.f32 0.0, %v3064
        %v3066 = vpop.f32.mrb[0].mxu0
        %v3067 = vpop.f32.mrb[0].mxu0
        %v3068 = vadd.f32 0.0, %v3067
        %v3069 = vpop.f32.mrb[0].mxu0
        %3070 = vmatprep.mubr.bf16.mxu0 0
        %3071 = vmatmul.mubr.bf16.gmra.mrb[0].mxu0 %v3005
        %v3072 = vpop.f32.mrb[0].mxu0
        %v3073 = vadd.f32 0.0, %v3072
        %v3074 = vpop.f32.mrb[0].mxu0
        %v3075 = vpop.f32.mrb[0].mxu0
        %v3076 = vadd.f32 0.0, %v3075
        %v3077 = vpop.f32.mrb[0].mxu0
        %3078 = vmatprep.mubr.bf16.mxu0 0
        %3079 = vmatmul.mubr.bf16.gmra.mrb[0].mxu0 %v3008
        %v3080 = vpop.f32.mrb[0].mxu0
        %v3081 = vadd.f32 0.0, %v3080
        %v3082 = vpop.f32.mrb[0].mxu0
        %v3083 = vpop.f32.mrb[0].mxu0
        %v3084 = vadd.f32 0.0, %v3083
        %v3085 = vpop.f32.mrb[0].mxu0
        %3086 = vmatprep.mubr.bf16.mxu0 0
        %3087 = vmatmul.mubr.bf16.gmra.mrb[0].mxu0 %v3011
        %v3088 = vpop.f32.mrb[0].mxu0
        %v3089 = vadd.f32 0.0, %v3088
        %v3090 = vpop.f32.mrb[0].mxu0
        %v3091 = vpop.f32.mrb[0].mxu0
        %v3092 = vadd.f32 0.0, %v3091
        %v3093 = vpop.f32.mrb[0].mxu0
        %3094 = vmatprep.mubr.bf16.mxu0 0
        %3095 = vmatmul.mubr.bf16.gmra.mrb[0].mxu0 %v3014
        %v3096 = vpop.f32.mrb[0].mxu0
        %v3097 = vadd.f32 0.0, %v3096
        %v3098 = vpop.f32.mrb[0].mxu0
        %v3099 = vpop.f32.mrb[0].mxu0
        %v3100 = vadd.f32 0.0, %v3099
        %v3101 = vpop.f32.mrb[0].mxu0
        %3102 = vmatprep.mubr.bf16.mxu0 0
        %3103 = vmatmul.mubr.bf16.gmra.mrb[0].mxu0 %v3017
        %v3104 = vpop.f32.mrb[0].mxu0
        %v3105 = vadd.f32 0.0, %v3104
        %v3106 = vpop.f32.mrb[0].mxu0
        %v3107 = vpop.f32.mrb[0].mxu0
        %v3108 = vadd.f32 0.0, %v3107
        %v3109 = vpop.f32.mrb[0].mxu0
        %3110 = vmatprep.mubr.bf16.mxu0 0
        %3111 = vmatmul.mubr.bf16.gmra.mrb[0].mxu0 %v3020
        %v3112 = vpop.f32.mrb[0].mxu0
        %v3113 = vadd.f32 0.0, %v3112
        %v3114 = vpop.f32.mrb[0].mxu0
        %v3115 = vpop.f32.mrb[0].mxu0
        %v3116 = vadd.f32 0.0, %v3115
        %v3117 = vpop.f32.mrb[0].mxu0
        %3118 = vdwg.mxu0
        %v3119 = vadd.f32 %v2492, %v3057
        %v3120 = vadd.f32 %v2493, %v3060
        %v3121 = vadd.f32 %v2494, %v3065
        %v3122 = vadd.f32 %v2495, %v3068
        %v3123 = vadd.f32 %v2496, %v3073
        %v3124 = vadd.f32 %v2497, %v3076
        %v3125 = vadd.f32 %v2498, %v3081
        %v3126 = vadd.f32 %v2499, %v3084
        %v3127 = vadd.f32 %v2500, %v3089
        %v3128 = vadd.f32 %v2501, %v3092
        %v3129 = vadd.f32 %v2502, %v3097
        %v3130 = vadd.f32 %v2503, %v3100
        %v3131 = vadd.f32 %v2504, %v3105
        %v3132 = vadd.f32 %v2505, %v3108
        %v3133 = vadd.f32 %v2506, %v3113
        %v3134 = vadd.f32 %v2507, %v3116
        %v3135 = vld [vmem:[%s3] sm:$0x1]
        %v3137 = vlaneseq
        %v3138 = vshrl.u32 %v3137, 7
        %v3139 = vsub.s32 0, %v3138
        %v3140 = vrot.slane %v3135, %v3139
        %v3142 = vadd.f32 %v3119, %v3140
        %v3143 = vadd.f32 %v3120, %v3140
        %v3144 = vadd.f32 %v3121, %v3140
        %v3145 = vadd.f32 %v3122, %v3140
        %v3146 = vadd.f32 %v3123, %v3140
        %v3147 = vadd.f32 %v3124, %v3140
        %v3148 = vadd.f32 %v3125, %v3140
        %v3149 = vadd.f32 %v3126, %v3140
        %v3150 = vadd.f32 %v3127, %v3140
        %v3151 = vadd.f32 %v3128, %v3140
        %v3152 = vadd.f32 %v3129, %v3140
        %v3153 = vadd.f32 %v3130, %v3140
        %v3154 = vadd.f32 %v3131, %v3140
        %v3155 = vadd.f32 %v3132, %v3140
        %v3156 = vadd.f32 %v3133, %v3140
        %v3157 = vadd.f32 %v3134, %v3140
        %3158 = vst [vmem:[%s190] sm:$0xff] %v3142
        %3159 = vst [vmem:[%s190 + $0x8] sm:$0xff] %v3143
        %3160 = vst [vmem:[%s190 + $0x10] sm:$0xff] %v3144
        %3161 = vst [vmem:[%s190 + $0x18] sm:$0xff] %v3145
        %3162 = vst [vmem:[%s190 + $0x20] sm:$0xff] %v3146
        %3163 = vst [vmem:[%s190 + $0x28] sm:$0xff] %v3147
        %3164 = vst [vmem:[%s190 + $0x30] sm:$0xff] %v3148
        %3165 = vst [vmem:[%s190 + $0x38] sm:$0xff] %v3149
        %3166 = vst [vmem:[%s190 + $0x40] sm:$0xff] %v3150
        %3167 = vst [vmem:[%s190 + $0x48] sm:$0xff] %v3151
        %3168 = vst [vmem:[%s190 + $0x50] sm:$0xff] %v3152
        %3169 = vst [vmem:[%s190 + $0x58] sm:$0xff] %v3153
        %3170 = vst [vmem:[%s190 + $0x60] sm:$0xff] %v3154
        %3171 = vst [vmem:[%s190 + $0x68] sm:$0xff] %v3155
        %3172 = vst [vmem:[%s190 + $0x70] sm:$0xff] %v3156
        %3173 = vst [vmem:[%s190 + $0x78] sm:$0xff] %v3157
        %s3174 = sand.u32 %s115, 1
        %s3175 = scalar_lea.sflag [#allocation3], %s3174
        %s3176 = sand.u32 %s115, 1
        %s3177 = smul.addr %s3176, 128
        %s3178 = scalar_lea.vmem [#allocation2], %s3177
        // Predicated region
        $region37: #{multi_head_attention.1} parent=35 // pred_check
          %p3179 = pneg %p125
        $region38: #{multi_head_attention.1} parent=35 // pred_check_branch
          %3181 = sbr.rel (%p3179) target = $region40
        $region39: #{multi_head_attention.1} parent=35 // pred_region
          %s3183 = ssub.s32 2048, 2048
          %3184 = vsyncadd %s3175, %s3183
          %s3185 = smul.addr %s18, 16
          %s3186 = smul.addr %s3185, 128
          %s3187 = scalar_lea.hbm %s4, %s3186
          %s3188 = sshll.u32 %s3178, 4
          %s3189 = int_to_ptr.vmem [resolvable:$true] %s3188
          %3194 = dma.vmem_to_hbm [thread:$0]  %s3189, 2048, %s3187, %s3175, 128, 128, 8
        $region40: #{multi_head_attention.1} parent=35 // pred_fallthru
          _
      $region36: #{multi_head_attention.1} parent=5 // pred_fallthru
        _
      %p3195 = scmp.le.s32.totalorder 2, %s13
      // Predicated region
      $region41: #{multi_head_attention.1} parent=5 // pred_check
        %p3196 = pneg %p3195
      $region42: #{multi_head_attention.1} parent=5 // pred_check_branch
        %3198 = sbr.rel (%p3196) target = $region44
      $region43: #{multi_head_attention.1} parent=5 // pred_region
        %s3199 = ssub.s32 %s13, 2
        // Predicated region
        $region45: #{multi_head_attention.1} parent=43 // pred_check
          %p3200 = pneg %p131
        $region46: #{multi_head_attention.1} parent=43 // pred_check_branch
          %3202 = sbr.rel (%p3200) target = $region48
        $region47: #{multi_head_attention.1} parent=43 // pred_region
          %s3203 = sand.u32 %s116, 1
          %s3204 = scalar_lea.sflag [#allocation3], %s3203
          %s3205 = sand.u32 %s116, 1
          %s3206 = smul.addr %s3205, 128
          %s3207 = scalar_lea.vmem [#allocation2], %s3206
          %3208 = dma.done %s3204, 2048
        $region48: #{multi_head_attention.1} parent=43 // pred_fallthru
          _
      $region44: #{multi_head_attention.1} parent=5 // pred_fallthru
        _
    $region6: #{multi_head_attention.1} parent=1 // loop_footer
      %s17 = sadd.s32 1, %s13
    $region7: #{multi_head_attention.1} parent=1 // loop_footer_branch
      %12 = sbr.rel target = $region3
    $region8: #{multi_head_attention.1} parent=1 // loop_exit
      _
    %3209 = vsyncpa [#allocation3], 1
    %s3210 = scalar_lea.sflag [#allocation3], 1
    %3211 = vsyncpa %s3210, 1

</llo_original>
